<compile_context>
chip_gen: v7x
topology: tpu7x:2x2x1
jax: 0.10.0
libtpu: 0.0.40
codegen_flags: <defaults>
</compile_context>

<pallas_src>
import functools
import numpy as np
import jax
import jax.numpy as jnp
from jax.experimental import pallas as pl
from jax.experimental.pallas import tpu as pltpu

_LANE = 128


def _round_up(n, m):
    return ((n + m - 1) // m) * m


def _vmem_budget_bytes():
    """Generation-aware VMEM budget with headroom (never the full capacity)."""
    try:
        cap = int(getattr(pltpu.get_tpu_info(), "vmem_capacity_bytes", 64 << 20))
    except Exception:
        cap = 64 << 20                       # conservative fallback (v7x per-TC)
    return max(32 << 20, (cap * 3) // 4)     # ~48 MiB on v7x, ~96 MiB on v5e/v6e


# ----------------------------------------------------------------------------
# Fused kernel: all num_layers WaveNet layers in one body
# ----------------------------------------------------------------------------
def _make_fused_kernel(bm, T0, Cp, K, num_layers, out_dtype):
    def kernel(*refs):
        x_ref = refs[0]
        w_refs = refs[1:1 + 4 * num_layers]
        x_out_ref = refs[1 + 4 * num_layers]
        skip_refs = refs[2 + 4 * num_layers:]

        x = x_ref[...].astype(jnp.float32)            # (bm, T0, Cp) f32
        t_cur = T0
        d = 1
        for l in range(num_layers):                   # static unroll
            w_fg = w_refs[4 * l][...]                 # (K, Cp, 2Cp) bf16
            b_fg = w_refs[4 * l + 1][...]             # (1, 2Cp)     f32
            w_sr = w_refs[4 * l + 2][...]             # (Cp, 2Cp)    bf16
            b_sr = w_refs[4 * l + 3][...]             # (1, 2Cp)     f32

            t_out = t_cur - (K - 1) * d
            x_bf = x.astype(jnp.bfloat16)             # one bf16 cast per layer
            # K accumulating MXU matmuls (bf16 operands, f32 accumulate):
            # columns [:Cp] = filter pre-activation, [Cp:] = gate.
            fg = None
            for k in range(K):
                tap = x_bf[:, k * d:k * d + t_out, :].reshape(bm * t_out, Cp)
                pk = jnp.dot(tap, w_fg[k], preferred_element_type=jnp.float32)
                fg = pk if fg is None else fg + pk
            fg = fg + b_fg                            # (bm*t_out, 2Cp) f32
            f = jnp.tanh(fg[:, :Cp])
            # sigmoid(g) = 0.5*(tanh(0.5*g)+1): one EUP op instead of exp+recip
            g = 0.5 * (jnp.tanh(0.5 * fg[:, Cp:]) + 1.0)
            h = f * g
            # Fused 1x1 convs (skip | residual) in a single matmul.
            sr = jnp.dot(h.astype(jnp.bfloat16), w_sr,
                         preferred_element_type=jnp.float32) + b_sr
            skip_refs[l][...] = sr[:, :Cp].reshape(bm, t_out, Cp).astype(out_dtype)
            # residual tail: last t_out timesteps of the layer input
            x = sr[:, Cp:].reshape(bm, t_out, Cp) + x[:, t_cur - t_out:, :]
            t_cur = t_out
            d *= 2
        x_out_ref[...] = x.astype(out_dtype)

    return kernel


# ----------------------------------------------------------------------------
# Forward pass: single pallas_call, grid over M = B*H (M padded to bm)
# ----------------------------------------------------------------------------
def conv_block_forward(x_nchw, fused_params, K):
    B, C, H, T = x_nchw.shape
    L = len(fused_params)
    Cp = fused_params[0]['w_sr'].shape[0]              # lane-padded channel count
    M = B * H
    out_dtype = x_nchw.dtype
    itemsize = jnp.dtype(out_dtype).itemsize

    # NCHW -> (M, T, C) channels-last, zero-pad channels to Cp (lane-dense).
    x = jnp.transpose(x_nchw, (0, 2, 3, 1)).reshape(M, T, C)
    if Cp != C:
        x = jnp.pad(x, ((0, 0), (0, 0), (0, Cp - C)))

    # per-layer output time lengths (static)
    t_lens = []
    t_cur, d = T, 1
    for _ in range(L):
        t_cur = t_cur - (K - 1) * d
        t_lens.append(t_cur)
        d *= 2
    assert t_lens[-1] >= 1, "time dimension too short for this dilation stack"

    # Flatten weights (already lane-padded + bf16 via prepare_params).
    flat_weights, w_specs = [], []
    for p in fused_params:
        for name in ("w_fg", "b_fg", "w_sr", "b_sr"):
            w = p[name]
            flat_weights.append(w)
            # TODO(synk): pipeline_mode=pl.Buffered(1) for these grid-invariant
            # blocks once verified on the target Mosaic version.
            w_specs.append(pl.BlockSpec(w.shape, lambda i, nd=w.ndim: (0,) * nd))
    w_bytes = sum(int(np.prod(w.shape)) * jnp.dtype(w.dtype).itemsize
                  for w in flat_weights)

    # VMEM estimate per grid step: double-buffered I/O blocks, resident weights
    # (x2 for default double-buffering), and the in-kernel f32/bf16 live set
    # (f32 x + bf16 copy at width T; fg/sr at 2*Cp width, h f32+bf16, new x).
    t0 = t_lens[0]

    def vmem_bytes(bm):
        io = 2 * bm * Cp * itemsize * (T + t_lens[-1] + sum(t_lens))
        live = bm * Cp * (T * (4 + 2) + t0 * (8 + 4 + 2 + 8 + 4))
        return io + live + 2 * w_bytes + (4 << 20)

    budget = _vmem_budget_bytes()

    # Largest block-M that fits the budget; prefer >=2 grid steps so
    # ("parallel",) can shard across TensorCores and DMAs actually overlap.
    cands = [c for c in (1024, 768, 512, 384, 256, 192, 128, 96, 64, 48, 32,
                         24, 16, 8, 4, 2, 1) if c <= max(M, 1)]
    bm = None
    for c in cands:
        if vmem_bytes(c) <= budget and (M < 2 or pl.cdiv(M, c) >= 2):
            bm = c
            break
    if bm is None:
        bm = next((c for c in cands if vmem_bytes(c) <= budget), 1)

    grid_steps = pl.cdiv(M, bm)
    M_pad = grid_steps * bm
    if M_pad != M:                                     # pad rows instead of bm=1
        x = jnp.pad(x, ((0, M_pad - M), (0, 0), (0, 0)))

    kernel = _make_fused_kernel(bm, T, Cp, K, L, out_dtype)

    x_spec = pl.BlockSpec((bm, T, Cp), lambda i: (i, 0, 0))
    out_shape = (jax.ShapeDtypeStruct((M_pad, t_lens[-1], Cp), out_dtype),) + tuple(
        jax.ShapeDtypeStruct((M_pad, t, Cp), out_dtype) for t in t_lens)
    out_specs = (pl.BlockSpec((bm, t_lens[-1], Cp), lambda i: (i, 0, 0)),) + tuple(
        pl.BlockSpec((bm, t, Cp), lambda i: (i, 0, 0)) for t in t_lens)

    vmem_limit = int(min(budget, max(32 << 20, 2 * vmem_bytes(bm))))

    outs = pl.pallas_call(
        kernel,
        out_shape=out_shape,
        grid=(grid_steps,),
        in_specs=[x_spec] + w_specs,
        out_specs=out_specs,
        compiler_params=pltpu.CompilerParams(
            dimension_semantics=("parallel",),
            vmem_limit_bytes=vmem_limit),
    )(x, *flat_weights)

    x_out = outs[0]
    skips = outs[1:]
    # single layout fix back to NCHW at the end (drop M / channel padding)
    x_out_nchw = jnp.transpose(
        x_out[:M, :, :C].reshape(B, H, t_lens[-1], C), (0, 3, 1, 2))
    skips_nchw = [jnp.transpose(s[:M, :, :C].reshape(B, H, t, C), (0, 3, 1, 2))
                  for s, t in zip(skips, t_lens)]
    return x_out_nchw, skips_nchw


# ----------------------------------------------------------------------------
# Parameter init (PyTorch Conv2d default: U(-1/sqrt(fan_in), 1/sqrt(fan_in)))
# Weights kept in torch layout: conv (C_out, C_in, K), 1x1 (C_out, C_in).
# ----------------------------------------------------------------------------
def init_params(key, C, K, num_layers):
    params = []
    b_conv = 1.0 / np.sqrt(C * 1 * K)
    b_1x1 = 1.0 / np.sqrt(C * 1 * 1)
    for _ in range(num_layers):
        key, *ks = jax.random.split(key, 9)
        u = lambda k, shape, b: jax.random.uniform(
            k, shape, jnp.float32, minval=-b, maxval=b)
        params.append(dict(
            filter_w=u(ks[0], (C, C, K), b_conv), filter_b=u(ks[1], (C,), b_conv),
            gate_w=u(ks[2], (C, C, K), b_conv),   gate_b=u(ks[3], (C,), b_conv),
            skip_w=u(ks[4], (C, C), b_1x1),       skip_b=u(ks[5], (C,), b_1x1),
            res_w=u(ks[6], (C, C), b_1x1),        res_b=u(ks[7], (C,), b_1x1),
        ))
    return params


def prepare_params(params, lane=_LANE):
    """One-time (hoisted) layout conversion + lane padding + bf16 weight cast.

    torch layout -> kernel layout:
      w_fg (K, Cp, 2Cp) bf16, b_fg (1, 2Cp) f32   (filter | gate)
      w_sr (Cp, 2Cp)    bf16, b_sr (1, 2Cp) f32   (skip | residual)
    Zero padding keeps the padded channels exactly zero through the whole stack
    (tanh(0)*sigmoid(0)=0 and zero weight columns/biases), so slicing at the end
    recovers the unpadded result.
    """
    fused = []
    for p in params:
        C, _, K = p['filter_w'].shape
        Cp = _round_up(C, lane)
        pc = Cp - C

        def tap_w(w):      # (C_out, C_in, K) -> (K, Cp, Cp) as (tap, in, out)
            wt = jnp.transpose(w, (2, 1, 0))
            return jnp.pad(wt, ((0, 0), (0, pc), (0, pc)))

        def one_w(w):      # (C_out, C_in) -> (Cp, Cp) as (in, out)
            return jnp.pad(w.T, ((0, pc), (0, pc)))

        def vec(b):
            return jnp.pad(b, (0, pc))

        w_fg = jnp.concatenate([tap_w(p['filter_w']), tap_w(p['gate_w'])],
                               axis=-1).astype(jnp.bfloat16)
        b_fg = jnp.concatenate([vec(p['filter_b']), vec(p['gate_b'])]
                               ).reshape(1, 2 * Cp).astype(jnp.float32)
        w_sr = jnp.concatenate([one_w(p['skip_w']), one_w(p['res_w'])],
                               axis=-1).astype(jnp.bfloat16)
        b_sr = jnp.concatenate([vec(p['skip_b']), vec(p['res_b'])]
                               ).reshape(1, 2 * Cp).astype(jnp.float32)
        fused.append(dict(w_fg=w_fg, b_fg=b_fg, w_sr=w_sr, b_sr=b_sr))
    return fused


# ----------------------------------------------------------------------------
# Pure-JAX reference (mirrors the PyTorch module, NCHW, f32)
# ----------------------------------------------------------------------------
def _dilated_conv_ref(x, w, b, d):           # x (B,C,H,T), w (O,C,K)
    K = w.shape[-1]
    T_out = x.shape[-1] - (K - 1) * d
    out = sum(jnp.einsum('bcht,oc->boht', x[..., k * d:k * d + T_out], w[..., k])
              for k in range(K))
    return out + b[None, :, None, None]


def _conv1x1_ref(x, w, b):
    return jnp.einsum('bcht,oc->boht', x, w) + b[None, :, None, None]


def conv_block_ref(x, params, K):
    dilation = 1
    skip_list = []
    for p in params:
        residual = x
        f = jnp.tanh(_dilated_conv_ref(x, p['filter_w'], p['filter_b'], dilation))
        g = jax.nn.sigmoid(_dilated_conv_ref(x, p['gate_w'], p['gate_b'], dilation))
        x = f * g
        skip_list.append(_conv1x1_ref(x, p['skip_w'], p['skip_b']))
        x = _conv1x1_ref(x, p['res_w'], p['res_b'])
        x = x + residual[:, :, :, -x.shape[3]:]
        dilation *= 2
    return x, skip_list


if __name__ == "__main__":
    B, C, H, T = 2, 32, 4, 16     # batch, hidden_channels, nodes, time
    K, num_layers = 2, 2

    key = jax.random.PRNGKey(0)
    kx, kp = jax.random.split(key)
    x = jax.random.normal(kx, (B, C, H, T), jnp.float32)
    params = init_params(kp, C, K, num_layers)
    fused = prepare_params(params)          # hoisted layout/pad/bf16 conversion

    fwd = jax.jit(functools.partial(conv_block_forward, K=K))
    x_out, skips = fwd(x, fused)
    x_out = jax.block_until_ready(x_out)
    skips = [jax.block_until_ready(s) for s in skips]

    x_ref, skips_ref = conv_block_ref(x, params, K)
    # bf16 MXU operands (f32 accumulate) -> looser tolerance vs the f32 ref.
    np.testing.assert_allclose(np.asarray(x_out), np.asarray(x_ref),
                               rtol=2e-2, atol=2e-2)
    for s, sr in zip(skips, skips_ref):
        np.testing.assert_allclose(np.asarray(s), np.asarray(sr),
                                   rtol=2e-2, atol=2e-2)

    print("KERNEL_OK")
</pallas_src>

<mosaic_0001>
module attributes {stable_mosaic.version = 11 : i64} {
  func.func @kernel(%arg0: i32, %arg1: memref<4x16x128xf32, #tpu.memory_space<vmem>>, %arg2: memref<2x128x256xbf16, #tpu.memory_space<vmem>>, %arg3: memref<1x256xf32, #tpu.memory_space<vmem>>, %arg4: memref<128x256xbf16, #tpu.memory_space<vmem>>, %arg5: memref<1x256xf32, #tpu.memory_space<vmem>>, %arg6: memref<2x128x256xbf16, #tpu.memory_space<vmem>>, %arg7: memref<1x256xf32, #tpu.memory_space<vmem>>, %arg8: memref<128x256xbf16, #tpu.memory_space<vmem>>, %arg9: memref<1x256xf32, #tpu.memory_space<vmem>>, %arg10: memref<4x13x128xf32, #tpu.memory_space<vmem>>, %arg11: memref<4x15x128xf32, #tpu.memory_space<vmem>>, %arg12: memref<4x13x128xf32, #tpu.memory_space<vmem>>) attributes {dimension_semantics = [#tpu.dimension_semantics<parallel>], iteration_bounds = array<i64: 2>, scalar_prefetch = 0 : i64, scratch_operands = 0 : i64, tpu.core_type = #tpu.core_type<tc>, window_params = [{transform_indices = @transform_0, window_bounds = array<i64: 4, 16, 128>}, {pipeline_mode = #tpu.pipeline_mode<synchronous>, transform_indices = @transform_1, window_bounds = array<i64: 2, 128, 256>}, {pipeline_mode = #tpu.pipeline_mode<synchronous>, transform_indices = @transform_2, window_bounds = array<i64: 1, 256>}, {pipeline_mode = #tpu.pipeline_mode<synchronous>, transform_indices = @transform_3, window_bounds = array<i64: 128, 256>}, {pipeline_mode = #tpu.pipeline_mode<synchronous>, transform_indices = @transform_4, window_bounds = array<i64: 1, 256>}, {pipeline_mode = #tpu.pipeline_mode<synchronous>, transform_indices = @transform_5, window_bounds = array<i64: 2, 128, 256>}, {pipeline_mode = #tpu.pipeline_mode<synchronous>, transform_indices = @transform_6, window_bounds = array<i64: 1, 256>}, {pipeline_mode = #tpu.pipeline_mode<synchronous>, transform_indices = @transform_7, window_bounds = array<i64: 128, 256>}, {pipeline_mode = #tpu.pipeline_mode<synchronous>, transform_indices = @transform_8, window_bounds = array<i64: 1, 256>}, {transform_indices = @transform_9, window_bounds = array<i64: 4, 13, 128>}, {transform_indices = @transform_10, window_bounds = array<i64: 4, 15, 128>}, {transform_indices = @transform_11, window_bounds = array<i64: 4, 13, 128>}]} {
    %c0 = arith.constant 0 : index
    %c0_0 = arith.constant 0 : index
    %c0_1 = arith.constant 0 : index
    %0 = vector.load %arg1[%c0, %c0_0, %c0_1] : memref<4x16x128xf32, #tpu.memory_space<vmem>>, vector<4x16x128xf32>
    %c0_2 = arith.constant 0 : index
    %c0_3 = arith.constant 0 : index
    %c0_4 = arith.constant 0 : index
    %1 = vector.load %arg2[%c0_2, %c0_3, %c0_4] : memref<2x128x256xbf16, #tpu.memory_space<vmem>>, vector<2x128x256xbf16>
    %c0_5 = arith.constant 0 : index
    %c0_6 = arith.constant 0 : index
    %2 = vector.load %arg3[%c0_5, %c0_6] : memref<1x256xf32, #tpu.memory_space<vmem>>, vector<1x256xf32>
    %c0_7 = arith.constant 0 : index
    %c0_8 = arith.constant 0 : index
    %3 = vector.load %arg4[%c0_7, %c0_8] : memref<128x256xbf16, #tpu.memory_space<vmem>>, vector<128x256xbf16>
    %c0_9 = arith.constant 0 : index
    %c0_10 = arith.constant 0 : index
    %4 = vector.load %arg5[%c0_9, %c0_10] : memref<1x256xf32, #tpu.memory_space<vmem>>, vector<1x256xf32>
    %5 = arith.truncf %0 : vector<4x16x128xf32> to vector<4x16x128xbf16>
    %6 = vector.extract_strided_slice %5 {offsets = [0, 0, 0], sizes = [4, 15, 128], strides = [1, 1, 1]} : vector<4x16x128xbf16> to vector<4x15x128xbf16>
    %7 = vector.shape_cast %6 : vector<4x15x128xbf16> to vector<60x128xbf16>
    %8 = vector.extract_strided_slice %1 {offsets = [0, 0, 0], sizes = [1, 128, 256], strides = [1, 1, 1]} : vector<2x128x256xbf16> to vector<1x128x256xbf16>
    %9 = vector.shape_cast %8 : vector<1x128x256xbf16> to vector<128x256xbf16>
    %cst = arith.constant dense<0.000000e+00> : vector<60x256xf32>
    %10 = tpu.matmul %7, %9, %cst {dimension_numbers = #tpu.dot_dimension_numbers<[1], [0], [0], [1], [0, 0, 1, 1], [], []>} : vector<60x128xbf16>, vector<128x256xbf16>, vector<60x256xf32> -> vector<60x256xf32>
    %11 = vector.extract_strided_slice %5 {offsets = [0, 1, 0], sizes = [4, 15, 128], strides = [1, 1, 1]} : vector<4x16x128xbf16> to vector<4x15x128xbf16>
    %12 = vector.shape_cast %11 : vector<4x15x128xbf16> to vector<60x128xbf16>
    %13 = vector.extract_strided_slice %1 {offsets = [1, 0, 0], sizes = [1, 128, 256], strides = [1, 1, 1]} : vector<2x128x256xbf16> to vector<1x128x256xbf16>
    %14 = vector.shape_cast %13 : vector<1x128x256xbf16> to vector<128x256xbf16>
    %cst_11 = arith.constant dense<0.000000e+00> : vector<60x256xf32>
    %15 = tpu.matmul %12, %14, %cst_11 {dimension_numbers = #tpu.dot_dimension_numbers<[1], [0], [0], [1], [0, 0, 1, 1], [], []>} : vector<60x128xbf16>, vector<128x256xbf16>, vector<60x256xf32> -> vector<60x256xf32>
    %16 = arith.addf %10, %15 : vector<60x256xf32>
    %17 = vector.broadcast %2 : vector<1x256xf32> to vector<60x256xf32>
    %18 = arith.addf %16, %17 : vector<60x256xf32>
    %19 = vector.extract_strided_slice %18 {offsets = [0, 0], sizes = [60, 128], strides = [1, 1]} : vector<60x256xf32> to vector<60x128xf32>
    %20 = math.tanh %19 : vector<60x128xf32>
    %21 = vector.extract_strided_slice %18 {offsets = [0, 128], sizes = [60, 128], strides = [1, 1]} : vector<60x256xf32> to vector<60x128xf32>
    %cst_12 = arith.constant 5.000000e-01 : f32
    %22 = vector.broadcast %cst_12 : f32 to vector<60x128xf32>
    %23 = arith.mulf %22, %21 : vector<60x128xf32>
    %24 = math.tanh %23 : vector<60x128xf32>
    %cst_13 = arith.constant 1.000000e+00 : f32
    %25 = vector.broadcast %cst_13 : f32 to vector<60x128xf32>
    %26 = arith.addf %24, %25 : vector<60x128xf32>
    %cst_14 = arith.constant 5.000000e-01 : f32
    %27 = vector.broadcast %cst_14 : f32 to vector<60x128xf32>
    %28 = arith.mulf %27, %26 : vector<60x128xf32>
    %29 = arith.mulf %20, %28 : vector<60x128xf32>
    %30 = arith.truncf %29 : vector<60x128xf32> to vector<60x128xbf16>
    %cst_15 = arith.constant dense<0.000000e+00> : vector<60x256xf32>
    %31 = tpu.matmul %30, %3, %cst_15 {dimension_numbers = #tpu.dot_dimension_numbers<[1], [0], [0], [1], [0, 0, 1, 1], [], []>} : vector<60x128xbf16>, vector<128x256xbf16>, vector<60x256xf32> -> vector<60x256xf32>
    %32 = vector.broadcast %4 : vector<1x256xf32> to vector<60x256xf32>
    %33 = arith.addf %31, %32 : vector<60x256xf32>
    %34 = vector.extract_strided_slice %33 {offsets = [0, 0], sizes = [60, 128], strides = [1, 1]} : vector<60x256xf32> to vector<60x128xf32>
    %35 = vector.shape_cast %34 : vector<60x128xf32> to vector<4x15x128xf32>
    %c0_16 = arith.constant 0 : index
    %c0_17 = arith.constant 0 : index
    %c0_18 = arith.constant 0 : index
    %36 = vector.load %arg11[%c0_16, %c0_17, %c0_18] : memref<4x15x128xf32, #tpu.memory_space<vmem>>, vector<4x15x128xf32>
    tpu.vector_store %arg11[%c0_16, %c0_17, %c0_18], %35 {strides = array<i32>} : memref<4x15x128xf32, #tpu.memory_space<vmem>>, vector<4x15x128xf32>,
    %37 = vector.extract_strided_slice %33 {offsets = [0, 128], sizes = [60, 128], strides = [1, 1]} : vector<60x256xf32> to vector<60x128xf32>
    %38 = vector.shape_cast %37 : vector<60x128xf32> to vector<4x15x128xf32>
    %39 = vector.extract_strided_slice %0 {offsets = [0, 1, 0], sizes = [4, 15, 128], strides = [1, 1, 1]} : vector<4x16x128xf32> to vector<4x15x128xf32>
    %40 = arith.addf %38, %39 : vector<4x15x128xf32>
    %c0_19 = arith.constant 0 : index
    %c0_20 = arith.constant 0 : index
    %c0_21 = arith.constant 0 : index
    %41 = vector.load %arg6[%c0_19, %c0_20, %c0_21] : memref<2x128x256xbf16, #tpu.memory_space<vmem>>, vector<2x128x256xbf16>
    %c0_22 = arith.constant 0 : index
    %c0_23 = arith.constant 0 : index
    %42 = vector.load %arg7[%c0_22, %c0_23] : memref<1x256xf32, #tpu.memory_space<vmem>>, vector<1x256xf32>
    %c0_24 = arith.constant 0 : index
    %c0_25 = arith.constant 0 : index
    %43 = vector.load %arg8[%c0_24, %c0_25] : memref<128x256xbf16, #tpu.memory_space<vmem>>, vector<128x256xbf16>
    %c0_26 = arith.constant 0 : index
    %c0_27 = arith.constant 0 : index
    %44 = vector.load %arg9[%c0_26, %c0_27] : memref<1x256xf32, #tpu.memory_space<vmem>>, vector<1x256xf32>
    %45 = arith.truncf %40 : vector<4x15x128xf32> to vector<4x15x128xbf16>
    %46 = vector.extract_strided_slice %45 {offsets = [0, 0, 0], sizes = [4, 13, 128], strides = [1, 1, 1]} : vector<4x15x128xbf16> to vector<4x13x128xbf16>
    %47 = vector.shape_cast %46 : vector<4x13x128xbf16> to vector<52x128xbf16>
    %48 = vector.extract_strided_slice %41 {offsets = [0, 0, 0], sizes = [1, 128, 256], strides = [1, 1, 1]} : vector<2x128x256xbf16> to vector<1x128x256xbf16>
    %49 = vector.shape_cast %48 : vector<1x128x256xbf16> to vector<128x256xbf16>
    %cst_28 = arith.constant dense<0.000000e+00> : vector<52x256xf32>
    %50 = tpu.matmul %47, %49, %cst_28 {dimension_numbers = #tpu.dot_dimension_numbers<[1], [0], [0], [1], [0, 0, 1, 1], [], []>} : vector<52x128xbf16>, vector<128x256xbf16>, vector<52x256xf32> -> vector<52x256xf32>
    %51 = vector.extract_strided_slice %45 {offsets = [0, 2, 0], sizes = [4, 13, 128], strides = [1, 1, 1]} : vector<4x15x128xbf16> to vector<4x13x128xbf16>
    %52 = vector.shape_cast %51 : vector<4x13x128xbf16> to vector<52x128xbf16>
    %53 = vector.extract_strided_slice %41 {offsets = [1, 0, 0], sizes = [1, 128, 256], strides = [1, 1, 1]} : vector<2x128x256xbf16> to vector<1x128x256xbf16>
    %54 = vector.shape_cast %53 : vector<1x128x256xbf16> to vector<128x256xbf16>
    %cst_29 = arith.constant dense<0.000000e+00> : vector<52x256xf32>
    %55 = tpu.matmul %52, %54, %cst_29 {dimension_numbers = #tpu.dot_dimension_numbers<[1], [0], [0], [1], [0, 0, 1, 1], [], []>} : vector<52x128xbf16>, vector<128x256xbf16>, vector<52x256xf32> -> vector<52x256xf32>
    %56 = arith.addf %50, %55 : vector<52x256xf32>
    %57 = vector.broadcast %42 : vector<1x256xf32> to vector<52x256xf32>
    %58 = arith.addf %56, %57 : vector<52x256xf32>
    %59 = vector.extract_strided_slice %58 {offsets = [0, 0], sizes = [52, 128], strides = [1, 1]} : vector<52x256xf32> to vector<52x128xf32>
    %60 = math.tanh %59 : vector<52x128xf32>
    %61 = vector.extract_strided_slice %58 {offsets = [0, 128], sizes = [52, 128], strides = [1, 1]} : vector<52x256xf32> to vector<52x128xf32>
    %cst_30 = arith.constant 5.000000e-01 : f32
    %62 = vector.broadcast %cst_30 : f32 to vector<52x128xf32>
    %63 = arith.mulf %62, %61 : vector<52x128xf32>
    %64 = math.tanh %63 : vector<52x128xf32>
    %cst_31 = arith.constant 1.000000e+00 : f32
    %65 = vector.broadcast %cst_31 : f32 to vector<52x128xf32>
    %66 = arith.addf %64, %65 : vector<52x128xf32>
    %cst_32 = arith.constant 5.000000e-01 : f32
    %67 = vector.broadcast %cst_32 : f32 to vector<52x128xf32>
    %68 = arith.mulf %67, %66 : vector<52x128xf32>
    %69 = arith.mulf %60, %68 : vector<52x128xf32>
    %70 = arith.truncf %69 : vector<52x128xf32> to vector<52x128xbf16>
    %cst_33 = arith.constant dense<0.000000e+00> : vector<52x256xf32>
    %71 = tpu.matmul %70, %43, %cst_33 {dimension_numbers = #tpu.dot_dimension_numbers<[1], [0], [0], [1], [0, 0, 1, 1], [], []>} : vector<52x128xbf16>, vector<128x256xbf16>, vector<52x256xf32> -> vector<52x256xf32>
    %72 = vector.broadcast %44 : vector<1x256xf32> to vector<52x256xf32>
    %73 = arith.addf %71, %72 : vector<52x256xf32>
    %74 = vector.extract_strided_slice %73 {offsets = [0, 0], sizes = [52, 128], strides = [1, 1]} : vector<52x256xf32> to vector<52x128xf32>
    %75 = vector.shape_cast %74 : vector<52x128xf32> to vector<4x13x128xf32>
    %c0_34 = arith.constant 0 : index
    %c0_35 = arith.constant 0 : index
    %c0_36 = arith.constant 0 : index
    %76 = vector.load %arg12[%c0_34, %c0_35, %c0_36] : memref<4x13x128xf32, #tpu.memory_space<vmem>>, vector<4x13x128xf32>
    tpu.vector_store %arg12[%c0_34, %c0_35, %c0_36], %75 {strides = array<i32>} : memref<4x13x128xf32, #tpu.memory_space<vmem>>, vector<4x13x128xf32>,
    %77 = vector.extract_strided_slice %73 {offsets = [0, 128], sizes = [52, 128], strides = [1, 1]} : vector<52x256xf32> to vector<52x128xf32>
    %78 = vector.shape_cast %77 : vector<52x128xf32> to vector<4x13x128xf32>
    %79 = vector.extract_strided_slice %40 {offsets = [0, 2, 0], sizes = [4, 13, 128], strides = [1, 1, 1]} : vector<4x15x128xf32> to vector<4x13x128xf32>
    %80 = arith.addf %78, %79 : vector<4x13x128xf32>
    %c0_37 = arith.constant 0 : index
    %c0_38 = arith.constant 0 : index
    %c0_39 = arith.constant 0 : index
    %81 = vector.load %arg10[%c0_37, %c0_38, %c0_39] : memref<4x13x128xf32, #tpu.memory_space<vmem>>, vector<4x13x128xf32>
    tpu.vector_store %arg10[%c0_37, %c0_38, %c0_39], %80 {strides = array<i32>} : memref<4x13x128xf32, #tpu.memory_space<vmem>>, vector<4x13x128xf32>,
    return
  }
  func.func @transform_0(%arg0: i32) -> (i32, i32, i32) {
    %c0_i32 = arith.constant 0 : i32
    %c0_i32_0 = arith.constant 0 : i32
    %c0_i32_1 = arith.constant 0 : i32
    return %arg0, %c0_i32, %c0_i32_0 : i32, i32, i32
  }
  func.func @transform_1(%arg0: i32) -> (i32, i32, i32) {
    %c0_i32 = arith.constant 0 : i32
    %c0_i32_0 = arith.constant 0 : i32
    %c0_i32_1 = arith.constant 0 : i32
    %c0_i32_2 = arith.constant 0 : i32
    return %c0_i32, %c0_i32_0, %c0_i32_1 : i32, i32, i32
  }
  func.func @transform_2(%arg0: i32) -> (i32, i32) {
    %c0_i32 = arith.constant 0 : i32
    %c0_i32_0 = arith.constant 0 : i32
    %c0_i32_1 = arith.constant 0 : i32
    return %c0_i32, %c0_i32_0 : i32, i32
  }
  func.func @transform_3(%arg0: i32) -> (i32, i32) {
    %c0_i32 = arith.constant 0 : i32
    %c0_i32_0 = arith.constant 0 : i32
    %c0_i32_1 = arith.constant 0 : i32
    return %c0_i32, %c0_i32_0 : i32, i32
  }
  func.func @transform_4(%arg0: i32) -> (i32, i32) {
    %c0_i32 = arith.constant 0 : i32
    %c0_i32_0 = arith.constant 0 : i32
    %c0_i32_1 = arith.constant 0 : i32
    return %c0_i32, %c0_i32_0 : i32, i32
  }
  func.func @transform_5(%arg0: i32) -> (i32, i32, i32) {
    %c0_i32 = arith.constant 0 : i32
    %c0_i32_0 = arith.constant 0 : i32
    %c0_i32_1 = arith.constant 0 : i32
    %c0_i32_2 = arith.constant 0 : i32
    return %c0_i32, %c0_i32_0, %c0_i32_1 : i32, i32, i32
  }
  func.func @transform_6(%arg0: i32) -> (i32, i32) {
    %c0_i32 = arith.constant 0 : i32
    %c0_i32_0 = arith.constant 0 : i32
    %c0_i32_1 = arith.constant 0 : i32
    return %c0_i32, %c0_i32_0 : i32, i32
  }
  func.func @transform_7(%arg0: i32) -> (i32, i32) {
    %c0_i32 = arith.constant 0 : i32
    %c0_i32_0 = arith.constant 0 : i32
    %c0_i32_1 = arith.constant 0 : i32
    return %c0_i32, %c0_i32_0 : i32, i32
  }
  func.func @transform_8(%arg0: i32) -> (i32, i32) {
    %c0_i32 = arith.constant 0 : i32
    %c0_i32_0 = arith.constant 0 : i32
    %c0_i32_1 = arith.constant 0 : i32
    return %c0_i32, %c0_i32_0 : i32, i32
  }
  func.func @transform_9(%arg0: i32) -> (i32, i32, i32) {
    %c0_i32 = arith.constant 0 : i32
    %c0_i32_0 = arith.constant 0 : i32
    %c0_i32_1 = arith.constant 0 : i32
    return %arg0, %c0_i32, %c0_i32_0 : i32, i32, i32
  }
  func.func @transform_10(%arg0: i32) -> (i32, i32, i32) {
    %c0_i32 = arith.constant 0 : i32
    %c0_i32_0 = arith.constant 0 : i32
    %c0_i32_1 = arith.constant 0 : i32
    return %arg0, %c0_i32, %c0_i32_0 : i32, i32, i32
  }
  func.func @transform_11(%arg0: i32) -> (i32, i32, i32) {
    %c0_i32 = arith.constant 0 : i32
    %c0_i32_0 = arith.constant 0 : i32
    %c0_i32_1 = arith.constant 0 : i32
    return %arg0, %c0_i32, %c0_i32_0 : i32, i32, i32
  }
}

</mosaic_0001>

<llo_original>
// kernel: conv_block_forward.1
$region0: #{conv_block_forward.1}
  #allocation0 [shape = 'u32[]', space=smem, size = 0x4, offset = 0x4, fixed_abs, tag = 'smem constant byte address 0x4 - core index']
  #allocation1 [shape = 'u32[144,128]{1,0:T(1,128)}', space=vmem, size = 0x12000, scoped, tag = 'internal scratch']
  %s0 = inlined_call_operand.vmem [shape: f32[8,16,128], index: 0, kind: input, shape index: {}]
  %s1 = inlined_call_operand.vmem [shape: bf16[2,128,256], index: 1, kind: input, shape index: {}]
  %s2 = inlined_call_operand.vmem [shape: f32[1,256], index: 2, kind: input, shape index: {}]
  %s3 = inlined_call_operand.hbm [shape: bf16[128,256], index: 3, kind: input, shape index: {}]
  %s4 = inlined_call_operand.vmem [shape: f32[1,256], index: 4, kind: input, shape index: {}]
  %s5 = inlined_call_operand.hbm [shape: bf16[2,128,256], index: 5, kind: input, shape index: {}]
  %s6 = inlined_call_operand.vmem [shape: f32[1,256], index: 6, kind: input, shape index: {}]
  %s7 = inlined_call_operand.hbm [shape: bf16[128,256], index: 7, kind: input, shape index: {}]
  %s8 = inlined_call_operand.vmem [shape: f32[1,256], index: 8, kind: input, shape index: {}]
  %s9 = inlined_call_operand.vmem [shape: f32[8,13,128], index: 9, kind: output, shape index: {0}]
  %s10 = inlined_call_operand.vmem [shape: f32[8,15,128], index: 10, kind: output, shape index: {1}]
  %s11 = inlined_call_operand.vmem [shape: f32[8,13,128], index: 11, kind: output, shape index: {2}]
  %12 = xla_tuple %s9, %s10, %s11
  %s13 = sld [smem:[#allocation0]]
  $region97: #{conv_block_forward.1} parent=0
    _
  %s15 = ssub.s32 1, %s13
  %s16 = scalar_select 0, %s15, %s13
  $region1: #{conv_block_forward.1} parent=0
    #allocation2 [shape = 'u8[65536]{0}', space=vmem, size = 0x10000, scoped, tag = 'input window, operand 3, single buffered']
    #allocation3 [shape = 's32[2]{0}', space=sflag, size = 0x8, scoped, tag = 'scoped memory for conv_block_forward.1']
    #allocation4 [shape = 'u8[131072]{0}', space=vmem, size = 0x20000, scoped, tag = 'input window, operand 5, single buffered']
    #allocation5 [shape = 's32[1]{0}', space=sflag, size = 0x4, scoped, tag = 'scoped memory for conv_block_forward.1']
    #allocation6 [shape = 'u8[65536]{0}', space=vmem, size = 0x10000, scoped, tag = 'input window, operand 7, single buffered']
    %17 = vsyncpa [#allocation3], 0
    %18 = vsyncpa [#allocation5], 0
    loop: start=0, step=1, limit=4
    $region2: #{conv_block_forward.1} parent=1 // loop_pre_header
      _
    $region3: #{conv_block_forward.1} parent=1 // loop_header
      %s20 = sphi 0, %s24
      %p21 = scmp.ge.s32.totalorder %s20, 4
      %s30 = sphi 0, %s32
      %s33 = sphi 0, %s30
      %s34 = sphi 0, %s33
      %s50 = sphi 0, %s34
      %s54 = sphi 0, %s54
      %s56 = sphi 0, %s54
      %s57 = sphi 0, %s56
      %s71 = sphi 0, %s57
      %s75 = sphi 0, %s75
      %s77 = sphi 0, %s75
      %s78 = sphi 0, %s77
      %s92 = sphi 0, %s78
      %s96 = sphi 0, %s96
      %s98 = sphi 0, %s96
      %s99 = sphi 0, %s98
      %s113 = sphi 0, %s99
      %s117 = sphi 0, %s117
      %s119 = sphi 0, %s117
      %s120 = sphi 0, %s119
      %s134 = sphi 0, %s120
      %s138 = sphi 0, %s138
      %s140 = sphi 0, %s138
      %s141 = sphi 0, %s140
      %s155 = sphi 0, %s141
      %s159 = sphi 0, %s159
      %s161 = sphi 0, %s159
      %s162 = sphi 0, %s161
      %s176 = sphi 0, %s162
      %s180 = sphi 0, %s180
      %s182 = sphi 0, %s180
      %s183 = sphi 0, %s182
      %s197 = sphi 0, %s183
      %s201 = sphi 0, %s201
      %s203 = sphi 0, %s201
      %s204 = sphi 0, %s203
      %s218 = sphi 0, %s204
      %s224 = sphi 0, %s226
      %s227 = sphi 0, %s224
      %s228 = sphi 0, %s227
      %s244 = sphi 0, %s228
      %s250 = sphi 0, %s252
      %s253 = sphi 0, %s250
      %s254 = sphi 0, %s253
      %s270 = sphi 0, %s254
      %s276 = sphi 0, %s278
      %s279 = sphi 0, %s276
      %s280 = sphi 0, %s279
      %s296 = sphi 0, %s280
    $region4: #{conv_block_forward.1} parent=1 // loop_header_branch
      %23 = sbr.rel (%p21) target = $region8
    $region5: #{conv_block_forward.1} parent=1 // loop_body
      %s25 = ssub.s32 %s20, 1
      %s26 = ssub.s32 %s20, 2
      %s27 = sadd.s32 %s20, 1
      %s28 = ssub.s32 %s20, %s27
      %p29 = scmp.eq.s32.totalorder %s28, 0
      %s31 = sadd.s32 %s30, 1
      %s32 = scalar_select %p29, %s30, %s31
      %p35 = pneg %p29
      %p36 = scmp.eq.s32.totalorder %s20, 1
      %p37 = por %p35, %p36
      %p38 = scmp.ne.s32.totalorder %s30, %s33
      %p39 = scmp.eq.s32.totalorder %s20, 0
      %p40 = por %p38, %p39
      %p41 = scmp.ne.s32.totalorder %s30, %s33
      %p42 = scmp.eq.s32.totalorder %s25, 1
      %p43 = por %p41, %p42
      %p44 = scmp.ne.s32.totalorder %s33, %s34
      %p45 = scmp.eq.s32.totalorder %s25, 0
      %p46 = por %p44, %p45
      %p47 = scmp.ne.s32.totalorder %s33, %s34
      %p48 = scmp.eq.s32.totalorder %s26, 1
      %p49 = por %p47, %p48
      %p51 = scmp.ne.s32.totalorder %s34, %s50
      %p52 = scmp.eq.s32.totalorder %s26, 0
      %p53 = por %p51, %p52
      %s55 = sadd.s32 %s54, 1
      %p58 = scmp.eq.s32.totalorder %s20, 1
      %p59 = scmp.ne.s32.totalorder %s54, %s56
      %p60 = scmp.eq.s32.totalorder %s20, 0
      %p61 = por %p59, %p60
      %p62 = scmp.ne.s32.totalorder %s54, %s56
      %p63 = scmp.eq.s32.totalorder %s25, 1
      %p64 = por %p62, %p63
      %p65 = scmp.ne.s32.totalorder %s56, %s57
      %p66 = scmp.eq.s32.totalorder %s25, 0
      %p67 = por %p65, %p66
      %p68 = scmp.ne.s32.totalorder %s56, %s57
      %p69 = scmp.eq.s32.totalorder %s26, 1
      %p70 = por %p68, %p69
      %p72 = scmp.ne.s32.totalorder %s57, %s71
      %p73 = scmp.eq.s32.totalorder %s26, 0
      %p74 = por %p72, %p73
      %s76 = sadd.s32 %s75, 1
      %p79 = scmp.eq.s32.totalorder %s20, 1
      %p80 = scmp.ne.s32.totalorder %s75, %s77
      %p81 = scmp.eq.s32.totalorder %s20, 0
      %p82 = por %p80, %p81
      %p83 = scmp.ne.s32.totalorder %s75, %s77
      %p84 = scmp.eq.s32.totalorder %s25, 1
      %p85 = por %p83, %p84
      %p86 = scmp.ne.s32.totalorder %s77, %s78
      %p87 = scmp.eq.s32.totalorder %s25, 0
      %p88 = por %p86, %p87
      %p89 = scmp.ne.s32.totalorder %s77, %s78
      %p90 = scmp.eq.s32.totalorder %s26, 1
      %p91 = por %p89, %p90
      %p93 = scmp.ne.s32.totalorder %s78, %s92
      %p94 = scmp.eq.s32.totalorder %s26, 0
      %p95 = por %p93, %p94
      %s97 = sadd.s32 %s96, 1
      %p100 = scmp.eq.s32.totalorder %s20, 1
      %p101 = scmp.ne.s32.totalorder %s96, %s98
      %p102 = scmp.eq.s32.totalorder %s20, 0
      %p103 = por %p101, %p102
      %p104 = scmp.ne.s32.totalorder %s96, %s98
      %p105 = scmp.eq.s32.totalorder %s25, 1
      %p106 = por %p104, %p105
      %p107 = scmp.ne.s32.totalorder %s98, %s99
      %p108 = scmp.eq.s32.totalorder %s25, 0
      %p109 = por %p107, %p108
      %p110 = scmp.ne.s32.totalorder %s98, %s99
      %p111 = scmp.eq.s32.totalorder %s26, 1
      %p112 = por %p110, %p111
      %p114 = scmp.ne.s32.totalorder %s99, %s113
      %p115 = scmp.eq.s32.totalorder %s26, 0
      %p116 = por %p114, %p115
      %s118 = sadd.s32 %s117, 1
      %p121 = scmp.eq.s32.totalorder %s20, 1
      %p122 = scmp.ne.s32.totalorder %s117, %s119
      %p123 = scmp.eq.s32.totalorder %s20, 0
      %p124 = por %p122, %p123
      %p125 = scmp.ne.s32.totalorder %s117, %s119
      %p126 = scmp.eq.s32.totalorder %s25, 1
      %p127 = por %p125, %p126
      %p128 = scmp.ne.s32.totalorder %s119, %s120
      %p129 = scmp.eq.s32.totalorder %s25, 0
      %p130 = por %p128, %p129
      %p131 = scmp.ne.s32.totalorder %s119, %s120
      %p132 = scmp.eq.s32.totalorder %s26, 1
      %p133 = por %p131, %p132
      %p135 = scmp.ne.s32.totalorder %s120, %s134
      %p136 = scmp.eq.s32.totalorder %s26, 0
      %p137 = por %p135, %p136
      %s139 = sadd.s32 %s138, 1
      %p142 = scmp.eq.s32.totalorder %s20, 1
      %p143 = scmp.ne.s32.totalorder %s138, %s140
      %p144 = scmp.eq.s32.totalorder %s20, 0
      %p145 = por %p143, %p144
      %p146 = scmp.ne.s32.totalorder %s138, %s140
      %p147 = scmp.eq.s32.totalorder %s25, 1
      %p148 = por %p146, %p147
      %p149 = scmp.ne.s32.totalorder %s140, %s141
      %p150 = scmp.eq.s32.totalorder %s25, 0
      %p151 = por %p149, %p150
      %p152 = scmp.ne.s32.totalorder %s140, %s141
      %p153 = scmp.eq.s32.totalorder %s26, 1
      %p154 = por %p152, %p153
      %p156 = scmp.ne.s32.totalorder %s141, %s155
      %p157 = scmp.eq.s32.totalorder %s26, 0
      %p158 = por %p156, %p157
      %s160 = sadd.s32 %s159, 1
      %p163 = scmp.eq.s32.totalorder %s20, 1
      %p164 = scmp.ne.s32.totalorder %s159, %s161
      %p165 = scmp.eq.s32.totalorder %s20, 0
      %p166 = por %p164, %p165
      %p167 = scmp.ne.s32.totalorder %s159, %s161
      %p168 = scmp.eq.s32.totalorder %s25, 1
      %p169 = por %p167, %p168
      %p170 = scmp.ne.s32.totalorder %s161, %s162
      %p171 = scmp.eq.s32.totalorder %s25, 0
      %p172 = por %p170, %p171
      %p173 = scmp.ne.s32.totalorder %s161, %s162
      %p174 = scmp.eq.s32.totalorder %s26, 1
      %p175 = por %p173, %p174
      %p177 = scmp.ne.s32.totalorder %s162, %s176
      %p178 = scmp.eq.s32.totalorder %s26, 0
      %p179 = por %p177, %p178
      %s181 = sadd.s32 %s180, 1
      %p184 = scmp.eq.s32.totalorder %s20, 1
      %p185 = scmp.ne.s32.totalorder %s180, %s182
      %p186 = scmp.eq.s32.totalorder %s20, 0
      %p187 = por %p185, %p186
      %p188 = scmp.ne.s32.totalorder %s180, %s182
      %p189 = scmp.eq.s32.totalorder %s25, 1
      %p190 = por %p188, %p189
      %p191 = scmp.ne.s32.totalorder %s182, %s183
      %p192 = scmp.eq.s32.totalorder %s25, 0
      %p193 = por %p191, %p192
      %p194 = scmp.ne.s32.totalorder %s182, %s183
      %p195 = scmp.eq.s32.totalorder %s26, 1
      %p196 = por %p194, %p195
      %p198 = scmp.ne.s32.totalorder %s183, %s197
      %p199 = scmp.eq.s32.totalorder %s26, 0
      %p200 = por %p198, %p199
      %s202 = sadd.s32 %s201, 1
      %p205 = scmp.eq.s32.totalorder %s20, 1
      %p206 = scmp.ne.s32.totalorder %s201, %s203
      %p207 = scmp.eq.s32.totalorder %s20, 0
      %p208 = por %p206, %p207
      %p209 = scmp.ne.s32.totalorder %s201, %s203
      %p210 = scmp.eq.s32.totalorder %s25, 1
      %p211 = por %p209, %p210
      %p212 = scmp.ne.s32.totalorder %s203, %s204
      %p213 = scmp.eq.s32.totalorder %s25, 0
      %p214 = por %p212, %p213
      %p215 = scmp.ne.s32.totalorder %s203, %s204
      %p216 = scmp.eq.s32.totalorder %s26, 1
      %p217 = por %p215, %p216
      %p219 = scmp.ne.s32.totalorder %s204, %s218
      %p220 = scmp.eq.s32.totalorder %s26, 0
      %p221 = por %p219, %p220
      %s222 = ssub.s32 %s20, %s27
      %p223 = scmp.eq.s32.totalorder %s222, 0
      %s225 = sadd.s32 %s224, 1
      %s226 = scalar_select %p223, %s224, %s225
      %p229 = pneg %p223
      %p230 = scmp.eq.s32.totalorder %s20, 1
      %p231 = por %p229, %p230
      %p232 = scmp.ne.s32.totalorder %s224, %s227
      %p233 = scmp.eq.s32.totalorder %s20, 0
      %p234 = por %p232, %p233
      %p235 = scmp.ne.s32.totalorder %s224, %s227
      %p236 = scmp.eq.s32.totalorder %s25, 1
      %p237 = por %p235, %p236
      %p238 = scmp.ne.s32.totalorder %s227, %s228
      %p239 = scmp.eq.s32.totalorder %s25, 0
      %p240 = por %p238, %p239
      %p241 = scmp.ne.s32.totalorder %s227, %s228
      %p242 = scmp.eq.s32.totalorder %s26, 1
      %p243 = por %p241, %p242
      %p245 = scmp.ne.s32.totalorder %s228, %s244
      %p246 = scmp.eq.s32.totalorder %s26, 0
      %p247 = por %p245, %p246
      %s248 = ssub.s32 %s20, %s27
      %p249 = scmp.eq.s32.totalorder %s248, 0
      %s251 = sadd.s32 %s250, 1
      %s252 = scalar_select %p249, %s250, %s251
      %p255 = pneg %p249
      %p256 = scmp.eq.s32.totalorder %s20, 1
      %p257 = por %p255, %p256
      %p258 = scmp.ne.s32.totalorder %s250, %s253
      %p259 = scmp.eq.s32.totalorder %s20, 0
      %p260 = por %p258, %p259
      %p261 = scmp.ne.s32.totalorder %s250, %s253
      %p262 = scmp.eq.s32.totalorder %s25, 1
      %p263 = por %p261, %p262
      %p264 = scmp.ne.s32.totalorder %s253, %s254
      %p265 = scmp.eq.s32.totalorder %s25, 0
      %p266 = por %p264, %p265
      %p267 = scmp.ne.s32.totalorder %s253, %s254
      %p268 = scmp.eq.s32.totalorder %s26, 1
      %p269 = por %p267, %p268
      %p271 = scmp.ne.s32.totalorder %s254, %s270
      %p272 = scmp.eq.s32.totalorder %s26, 0
      %p273 = por %p271, %p272
      %s274 = ssub.s32 %s20, %s27
      %p275 = scmp.eq.s32.totalorder %s274, 0
      %s277 = sadd.s32 %s276, 1
      %s278 = scalar_select %p275, %s276, %s277
      %p281 = pneg %p275
      %p282 = scmp.eq.s32.totalorder %s20, 1
      %p283 = por %p281, %p282
      %p284 = scmp.ne.s32.totalorder %s276, %s279
      %p285 = scmp.eq.s32.totalorder %s20, 0
      %p286 = por %p284, %p285
      %p287 = scmp.ne.s32.totalorder %s276, %s279
      %p288 = scmp.eq.s32.totalorder %s25, 1
      %p289 = por %p287, %p288
      %p290 = scmp.ne.s32.totalorder %s279, %s280
      %p291 = scmp.eq.s32.totalorder %s25, 0
      %p292 = por %p290, %p291
      %p293 = scmp.ne.s32.totalorder %s279, %s280
      %p294 = scmp.eq.s32.totalorder %s26, 1
      %p295 = por %p293, %p294
      %p297 = scmp.ne.s32.totalorder %s280, %s296
      %p298 = scmp.eq.s32.totalorder %s26, 0
      %p299 = por %p297, %p298
      %p300 = scmp.le.s32.totalorder 1, %s20
      %p301 = scmp.lt.s32.totalorder %s20, 3
      %p302 = pnand %p300, %p301
      %p303 = pneg %p302
      // Predicated region
      $region9: #{conv_block_forward.1} parent=5 // pred_check
        _
      $region10: #{conv_block_forward.1} parent=5 // pred_check_branch
        %305 = sbr.rel (%p302) target = $region12
      $region11: #{conv_block_forward.1} parent=5 // pred_region
        %s306 = ssub.s32 %s20, 1
        // Predicated region
        $region13: #{conv_block_forward.1} parent=11 // pred_check
          %p307 = pneg %p67
        $region14: #{conv_block_forward.1} parent=11 // pred_check_branch
          %309 = sbr.rel (%p307) target = $region16
        $region15: #{conv_block_forward.1} parent=11 // pred_region
          _
        $region16: #{conv_block_forward.1} parent=11 // pred_fallthru
          _
        // Predicated region
        $region17: #{conv_block_forward.1} parent=11 // pred_check
          %p310 = pneg %p88
        $region18: #{conv_block_forward.1} parent=11 // pred_check_branch
          %312 = sbr.rel (%p310) target = $region20
        $region19: #{conv_block_forward.1} parent=11 // pred_region
          _
        $region20: #{conv_block_forward.1} parent=11 // pred_fallthru
          _
        // Predicated region
        $region21: #{conv_block_forward.1} parent=11 // pred_check
          %p313 = pneg %p109
        $region22: #{conv_block_forward.1} parent=11 // pred_check_branch
          %315 = sbr.rel (%p313) target = $region24
        $region23: #{conv_block_forward.1} parent=11 // pred_region
          %s317 = ssub.s32 2048, 2048
          %318 = vsyncadd [#allocation3], %s317
          %s319 = sshll.u32 [#allocation2], 4
          %s320 = int_to_ptr.vmem [resolvable:$true] %s319
          %325 = dma.hbm_to_vmem [thread:$0]  %s3, 2048, %s320, [#allocation3], 128, 128, 8
        $region24: #{conv_block_forward.1} parent=11 // pred_fallthru
          _
        // Predicated region
        $region25: #{conv_block_forward.1} parent=11 // pred_check
          %p326 = pneg %p130
        $region26: #{conv_block_forward.1} parent=11 // pred_check_branch
          %328 = sbr.rel (%p326) target = $region28
        $region27: #{conv_block_forward.1} parent=11 // pred_region
          _
        $region28: #{conv_block_forward.1} parent=11 // pred_fallthru
          _
        // Predicated region
        $region29: #{conv_block_forward.1} parent=11 // pred_check
          %p329 = pneg %p151
        $region30: #{conv_block_forward.1} parent=11 // pred_check_branch
          %331 = sbr.rel (%p329) target = $region32
        $region31: #{conv_block_forward.1} parent=11 // pred_region
          %s333 = ssub.s32 4096, 4096
          %334 = vsyncadd [#allocation5], %s333
          %s335 = sshll.u32 [#allocation4], 4
          %s336 = int_to_ptr.vmem [resolvable:$true] %s335
          %341 = dma.hbm_to_vmem [thread:$0]  %s5, 4096, %s336, [#allocation5], 128, 128, 8
        $region32: #{conv_block_forward.1} parent=11 // pred_fallthru
          _
        // Predicated region
        $region33: #{conv_block_forward.1} parent=11 // pred_check
          %p342 = pneg %p172
        $region34: #{conv_block_forward.1} parent=11 // pred_check_branch
          %344 = sbr.rel (%p342) target = $region36
        $region35: #{conv_block_forward.1} parent=11 // pred_region
          _
        $region36: #{conv_block_forward.1} parent=11 // pred_fallthru
          _
        // Predicated region
        $region37: #{conv_block_forward.1} parent=11 // pred_check
          %p345 = pneg %p193
        $region38: #{conv_block_forward.1} parent=11 // pred_check_branch
          %347 = sbr.rel (%p345) target = $region40
        $region39: #{conv_block_forward.1} parent=11 // pred_region
          %s349 = ssub.s32 2048, 2048
          %350 = vsyncadd [#allocation5], %s349
          %s351 = sshll.u32 [#allocation6], 4
          %s352 = int_to_ptr.vmem [resolvable:$true] %s351
          %357 = dma.hbm_to_vmem [thread:$0]  %s7, 2048, %s352, [#allocation5], 128, 128, 8
        $region40: #{conv_block_forward.1} parent=11 // pred_fallthru
          _
        // Predicated region
        $region41: #{conv_block_forward.1} parent=11 // pred_check
          %p358 = pneg %p214
        $region42: #{conv_block_forward.1} parent=11 // pred_check_branch
          %360 = sbr.rel (%p358) target = $region44
        $region43: #{conv_block_forward.1} parent=11 // pred_region
          _
        $region44: #{conv_block_forward.1} parent=11 // pred_fallthru
          _
      $region12: #{conv_block_forward.1} parent=5 // pred_fallthru
        _
      %p361 = scmp.lt.s32.totalorder %s20, 2
      // Predicated region
      $region45: #{conv_block_forward.1} parent=5 // pred_check
        %p362 = pneg %p361
      $region46: #{conv_block_forward.1} parent=5 // pred_check_branch
        %364 = sbr.rel (%p362) target = $region48
      $region47: #{conv_block_forward.1} parent=5 // pred_region
        // Predicated region
        $region49: #{conv_block_forward.1} parent=47 // pred_check
          %p365 = pneg %p40
        $region50: #{conv_block_forward.1} parent=47 // pred_check_branch
          %367 = sbr.rel (%p365) target = $region52
        $region51: #{conv_block_forward.1} parent=47 // pred_region
          %s368 = smul.u32 4, %s20
          %p369 = scmp.lt.s32.totalorder %s368, 7
          %s370 = scalar_select %p369, %s368, 7
          %s371 = smul.addr %s370, 2
          %s372 = smul.addr %s371, 8
          %s373 = scalar_lea.vmem %s0, %s372
          %s374 = smul.u32 4, %s20
        $region52: #{conv_block_forward.1} parent=47 // pred_fallthru
          _
      $region48: #{conv_block_forward.1} parent=5 // pred_fallthru
        _
      %p375 = scmp.le.s32.totalorder 1, %s20
      %p376 = scmp.lt.s32.totalorder %s20, 3
      %p377 = pnand %p375, %p376
      %p378 = pneg %p377
      // Predicated region
      $region53: #{conv_block_forward.1} parent=5 // pred_check
        _
      $region54: #{conv_block_forward.1} parent=5 // pred_check_branch
        %380 = sbr.rel (%p377) target = $region56
      $region55: #{conv_block_forward.1} parent=5 // pred_region
        %s381 = ssub.s32 %s20, 1
        // Predicated region
        $region57: #{conv_block_forward.1} parent=55 // pred_check
          %p382 = pneg %p109
        $region58: #{conv_block_forward.1} parent=55 // pred_check_branch
          %384 = sbr.rel (%p382) target = $region60
        $region59: #{conv_block_forward.1} parent=55 // pred_region
          %385 = dma.done [#allocation3], 2048
        $region60: #{conv_block_forward.1} parent=55 // pred_fallthru
          _
        // Predicated region
        $region61: #{conv_block_forward.1} parent=55 // pred_check
          %p386 = pneg %p151
        $region62: #{conv_block_forward.1} parent=55 // pred_check_branch
          %388 = sbr.rel (%p386) target = $region64
        $region63: #{conv_block_forward.1} parent=55 // pred_region
          %389 = dma.done [#allocation5], 4096
        $region64: #{conv_block_forward.1} parent=55 // pred_fallthru
          _
        // Predicated region
        $region65: #{conv_block_forward.1} parent=55 // pred_check
          %p390 = pneg %p193
        $region66: #{conv_block_forward.1} parent=55 // pred_check_branch
          %392 = sbr.rel (%p390) target = $region68
        $region67: #{conv_block_forward.1} parent=55 // pred_region
          %393 = dma.done [#allocation5], 2048
        $region68: #{conv_block_forward.1} parent=55 // pred_fallthru
          _
        %s394 = smul.u32 4, %s25
        %p395 = scmp.lt.s32.totalorder %s394, 7
        %s396 = scalar_select %p395, %s394, 7
        %s397 = smul.addr %s396, 2
        %s398 = smul.addr %s397, 8
        %s399 = scalar_lea.vmem %s0, %s398
        %p400 = pneg %p46
        %p401 = pneg %p43
        %p402 = pneg %p67
        %p403 = pneg %p64
        %p404 = pneg %p88
        %p405 = pneg %p85
        %p406 = pneg %p109
        %p407 = pneg %p106
        %p408 = pneg %p130
        %p409 = pneg %p127
        %p410 = pneg %p151
        %p411 = pneg %p148
        %p412 = pneg %p172
        %p413 = pneg %p169
        %p414 = pneg %p193
        %p415 = pneg %p190
        %p416 = pneg %p214
        %p417 = pneg %p211
        %p418 = pneg %p240
        %p419 = pneg %p237
        %s420 = smul.u32 4, %s25
        %p421 = scmp.lt.s32.totalorder %s420, 7
        %s422 = scalar_select %p421, %s420, 7
        %s423 = smul.addr %s422, 2
        %s424 = smul.addr %s423, 8
        %s425 = scalar_lea.vmem %s9, %s424
        %p426 = pneg %p266
        %p427 = pneg %p263
        %s428 = smul.u32 4, %s25
        %p429 = scmp.lt.s32.totalorder %s428, 7
        %s430 = scalar_select %p429, %s428, 7
        %s431 = smul.addr %s430, 2
        %s432 = smul.addr %s431, 8
        %s433 = scalar_lea.vmem %s10, %s432
        %p434 = pneg %p292
        %p435 = pneg %p289
        %s436 = smul.u32 4, %s25
        %p437 = scmp.lt.s32.totalorder %s436, 7
        %s438 = scalar_select %p437, %s436, 7
        %s439 = smul.addr %s438, 2
        %s440 = smul.addr %s439, 8
        %s441 = scalar_lea.vmem %s11, %s440
        %s442 = smul.u32 4, %s25
        %p443 = scmp.lt.s32.totalorder %s442, 7
        %s444 = scalar_select %p443, %s442, 7
        %s445 = smul.addr %s444, 2
        %s446 = smul.addr %s445, 8
        %s447 = scalar_lea.vmem %s0, %s446
        %s448 = smul.u32 4, %s25
        %s449 = smul.u32 4, %s25
        %p450 = scmp.lt.s32.totalorder %s449, 7
        %s451 = scalar_select %p450, %s449, 7
        %s452 = smul.addr %s451, 2
        %s453 = smul.addr %s452, 8
        %s454 = scalar_lea.vmem %s9, %s453
        %s455 = smul.u32 4, %s25
        %s456 = smul.u32 4, %s25
        %p457 = scmp.lt.s32.totalorder %s456, 7
        %s458 = scalar_select %p457, %s456, 7
        %s459 = smul.addr %s458, 2
        %s460 = smul.addr %s459, 8
        %s461 = scalar_lea.vmem %s10, %s460
        %s462 = smul.u32 4, %s25
        %s463 = smul.u32 4, %s25
        %p464 = scmp.lt.s32.totalorder %s463, 7
        %s465 = scalar_select %p464, %s463, 7
        %s466 = smul.addr %s465, 2
        %s467 = smul.addr %s466, 8
        %s468 = scalar_lea.vmem %s11, %s467
        %s469 = smul.u32 4, %s25
        %v471 = vld [vmem:[%s447] sm:$0xff]
        %v472 = vld [vmem:[%s447 + $0x8] sm:$0xff]
        %v473 = vld [vmem:[%s447 + $0x10] sm:$0xff]
        %v474 = vld [vmem:[%s447 + $0x18] sm:$0xff]
        %v475 = vld [vmem:[%s447 + $0x20] sm:$0xff]
        %v476 = vld [vmem:[%s447 + $0x28] sm:$0xff]
        %v477 = vld [vmem:[%s447 + $0x30] sm:$0xff]
        %v478 = vld [vmem:[%s447 + $0x38] sm:$0xff]
        %v479 = vld [vmem:[%s1] sm:$0xff]
        %v480 = vld [vmem:[%s1 + $0x8] sm:$0xff]
        %v481 = vld [vmem:[%s1 + $0x10] sm:$0xff]
        %v482 = vld [vmem:[%s1 + $0x18] sm:$0xff]
        %v483 = vld [vmem:[%s1 + $0x20] sm:$0xff]
        %v484 = vld [vmem:[%s1 + $0x28] sm:$0xff]
        %v485 = vld [vmem:[%s1 + $0x30] sm:$0xff]
        %v486 = vld [vmem:[%s1 + $0x38] sm:$0xff]
        %v487 = vld [vmem:[%s1 + $0x40] sm:$0xff]
        %v488 = vld [vmem:[%s1 + $0x48] sm:$0xff]
        %v489 = vld [vmem:[%s1 + $0x50] sm:$0xff]
        %v490 = vld [vmem:[%s1 + $0x58] sm:$0xff]
        %v491 = vld [vmem:[%s1 + $0x60] sm:$0xff]
        %v492 = vld [vmem:[%s1 + $0x68] sm:$0xff]
        %v493 = vld [vmem:[%s1 + $0x70] sm:$0xff]
        %v494 = vld [vmem:[%s1 + $0x78] sm:$0xff]
        %v495 = vld [vmem:[%s1 + $0x80] sm:$0xff]
        %v496 = vld [vmem:[%s1 + $0x88] sm:$0xff]
        %v497 = vld [vmem:[%s1 + $0x90] sm:$0xff]
        %v498 = vld [vmem:[%s1 + $0x98] sm:$0xff]
        %v499 = vld [vmem:[%s1 + $0xa0] sm:$0xff]
        %v500 = vld [vmem:[%s1 + $0xa8] sm:$0xff]
        %v501 = vld [vmem:[%s1 + $0xb0] sm:$0xff]
        %v502 = vld [vmem:[%s1 + $0xb8] sm:$0xff]
        %v503 = vld [vmem:[%s1 + $0xc0] sm:$0xff]
        %v504 = vld [vmem:[%s1 + $0xc8] sm:$0xff]
        %v505 = vld [vmem:[%s1 + $0xd0] sm:$0xff]
        %v506 = vld [vmem:[%s1 + $0xd8] sm:$0xff]
        %v507 = vld [vmem:[%s1 + $0xe0] sm:$0xff]
        %v508 = vld [vmem:[%s1 + $0xe8] sm:$0xff]
        %v509 = vld [vmem:[%s1 + $0xf0] sm:$0xff]
        %v510 = vld [vmem:[%s1 + $0xf8] sm:$0xff]
        %v511 = vld [vmem:[%s2] sm:$0x3]
        %v512 = vld [vmem:[#allocation2] sm:$0xff]
        %v513 = vld [vmem:[#allocation2 + $0x8] sm:$0xff]
        %v514 = vld [vmem:[#allocation2 + $0x10] sm:$0xff]
        %v515 = vld [vmem:[#allocation2 + $0x18] sm:$0xff]
        %v516 = vld [vmem:[#allocation2 + $0x20] sm:$0xff]
        %v517 = vld [vmem:[#allocation2 + $0x28] sm:$0xff]
        %v518 = vld [vmem:[#allocation2 + $0x30] sm:$0xff]
        %v519 = vld [vmem:[#allocation2 + $0x38] sm:$0xff]
        %v520 = vld [vmem:[#allocation2 + $0x40] sm:$0xff]
        %v521 = vld [vmem:[#allocation2 + $0x48] sm:$0xff]
        %v522 = vld [vmem:[#allocation2 + $0x50] sm:$0xff]
        %v523 = vld [vmem:[#allocation2 + $0x58] sm:$0xff]
        %v524 = vld [vmem:[#allocation2 + $0x60] sm:$0xff]
        %v525 = vld [vmem:[#allocation2 + $0x68] sm:$0xff]
        %v526 = vld [vmem:[#allocation2 + $0x70] sm:$0xff]
        %v527 = vld [vmem:[#allocation2 + $0x78] sm:$0xff]
        %v528 = vld [vmem:[%s4] sm:$0x3]
        %v529 = vpack.c.bf16 %v472, %v471
        %v530 = vpack.c.bf16 %v474, %v473
        %v531 = vpack.c.bf16 %v476, %v475
        %v532 = vpack.c.bf16 %v478, %v477
        %v537 = vcombine.high %v529, %v529
        %v539 = vunpack.c.l.s4 1966171168
        %v540 = vunpack.c.0.s8 %v539
        %v541 = vlaneseq
        %v542 = vshrl.u32 %v541, 7
        %v543 = vsub.s32 %v540, %v542
        %v544 = vrot.slane %v529, %v543
        %v546 = vunpack.c.l.s4 1966171168
        %v547 = vunpack.c.0.s8 %v546
        %v548 = vlaneseq
        %v549 = vshrl.u32 %v548, 7
        %v550 = vsub.s32 %v547, %v549
        %v551 = vrot.slane %v537, %v550
        %v552 = vcombine.high %v544, %v544
        %v553 = vcombine.high %v551, %v551
        %v555 = vunpack.c.l.s4 1966171168
        %v556 = vunpack.c.0.s8 %v555
        %v557 = vlaneseq
        %v558 = vshrl.u32 %v557, 7
        %v559 = vsub.s32 %v556, %v558
        %v560 = vrot.slane %v544, %v559
        %v562 = vunpack.c.l.s4 1966171168
        %v563 = vunpack.c.0.s8 %v562
        %v564 = vlaneseq
        %v565 = vshrl.u32 %v564, 7
        %v566 = vsub.s32 %v563, %v565
        %v567 = vrot.slane %v551, %v566
        %v569 = vunpack.c.l.s4 1966171168
        %v570 = vunpack.c.0.s8 %v569
        %v571 = vlaneseq
        %v572 = vshrl.u32 %v571, 7
        %v573 = vsub.s32 %v570, %v572
        %v574 = vrot.slane %v552, %v573
        %v576 = vunpack.c.l.s4 1966171168
        %v577 = vunpack.c.0.s8 %v576
        %v578 = vlaneseq
        %v579 = vshrl.u32 %v578, 7
        %v580 = vsub.s32 %v577, %v579
        %v581 = vrot.slane %v553, %v580
        %v582 = vcombine.high %v560, %v560
        %v583 = vcombine.high %v567, %v567
        %v584 = vcombine.high %v574, %v574
        %v585 = vcombine.high %v581, %v581
        %v586 = vcombine.high %v530, %v530
        %v588 = vunpack.c.l.s4 1966171168
        %v589 = vunpack.c.0.s8 %v588
        %v590 = vlaneseq
        %v591 = vshrl.u32 %v590, 7
        %v592 = vsub.s32 %v589, %v591
        %v593 = vrot.slane %v530, %v592
        %v595 = vunpack.c.l.s4 1966171168
        %v596 = vunpack.c.0.s8 %v595
        %v597 = vlaneseq
        %v598 = vshrl.u32 %v597, 7
        %v599 = vsub.s32 %v596, %v598
        %v600 = vrot.slane %v586, %v599
        %v601 = vcombine.high %v593, %v593
        %v602 = vcombine.high %v600, %v600
        %v604 = vunpack.c.l.s4 1966171168
        %v605 = vunpack.c.0.s8 %v604
        %v606 = vlaneseq
        %v607 = vshrl.u32 %v606, 7
        %v608 = vsub.s32 %v605, %v607
        %v609 = vrot.slane %v593, %v608
        %v611 = vunpack.c.l.s4 1966171168
        %v612 = vunpack.c.0.s8 %v611
        %v613 = vlaneseq
        %v614 = vshrl.u32 %v613, 7
        %v615 = vsub.s32 %v612, %v614
        %v616 = vrot.slane %v600, %v615
        %v618 = vunpack.c.l.s4 1966171168
        %v619 = vunpack.c.0.s8 %v618
        %v620 = vlaneseq
        %v621 = vshrl.u32 %v620, 7
        %v622 = vsub.s32 %v619, %v621
        %v623 = vrot.slane %v601, %v622
        %v625 = vunpack.c.l.s4 1966171168
        %v626 = vunpack.c.0.s8 %v625
        %v627 = vlaneseq
        %v628 = vshrl.u32 %v627, 7
        %v629 = vsub.s32 %v626, %v628
        %v630 = vrot.slane %v602, %v629
        %v631 = vcombine.high %v609, %v609
        %v632 = vcombine.high %v616, %v616
        %v633 = vcombine.high %v623, %v623
        %v634 = vcombine.high %v630, %v630
        %v635 = vcombine.high %v531, %v531
        %v637 = vunpack.c.l.s4 1966171168
        %v638 = vunpack.c.0.s8 %v637
        %v639 = vlaneseq
        %v640 = vshrl.u32 %v639, 7
        %v641 = vsub.s32 %v638, %v640
        %v642 = vrot.slane %v531, %v641
        %v644 = vunpack.c.l.s4 1966171168
        %v645 = vunpack.c.0.s8 %v644
        %v646 = vlaneseq
        %v647 = vshrl.u32 %v646, 7
        %v648 = vsub.s32 %v645, %v647
        %v649 = vrot.slane %v635, %v648
        %v650 = vcombine.high %v642, %v642
        %v651 = vcombine.high %v649, %v649
        %v653 = vunpack.c.l.s4 1966171168
        %v654 = vunpack.c.0.s8 %v653
        %v655 = vlaneseq
        %v656 = vshrl.u32 %v655, 7
        %v657 = vsub.s32 %v654, %v656
        %v658 = vrot.slane %v642, %v657
        %v660 = vunpack.c.l.s4 1966171168
        %v661 = vunpack.c.0.s8 %v660
        %v662 = vlaneseq
        %v663 = vshrl.u32 %v662, 7
        %v664 = vsub.s32 %v661, %v663
        %v665 = vrot.slane %v649, %v664
        %v667 = vunpack.c.l.s4 1966171168
        %v668 = vunpack.c.0.s8 %v667
        %v669 = vlaneseq
        %v670 = vshrl.u32 %v669, 7
        %v671 = vsub.s32 %v668, %v670
        %v672 = vrot.slane %v650, %v671
        %v674 = vunpack.c.l.s4 1966171168
        %v675 = vunpack.c.0.s8 %v674
        %v676 = vlaneseq
        %v677 = vshrl.u32 %v676, 7
        %v678 = vsub.s32 %v675, %v677
        %v679 = vrot.slane %v651, %v678
        %v680 = vcombine.high %v658, %v658
        %v681 = vcombine.high %v665, %v665
        %v682 = vcombine.high %v672, %v672
        %v683 = vcombine.high %v679, %v679
        %v684 = vcombine.high %v532, %v532
        %v686 = vunpack.c.l.s4 1966171168
        %v687 = vunpack.c.0.s8 %v686
        %v688 = vlaneseq
        %v689 = vshrl.u32 %v688, 7
        %v690 = vsub.s32 %v687, %v689
        %v691 = vrot.slane %v532, %v690
        %v693 = vunpack.c.l.s4 1966171168
        %v694 = vunpack.c.0.s8 %v693
        %v695 = vlaneseq
        %v696 = vshrl.u32 %v695, 7
        %v697 = vsub.s32 %v694, %v696
        %v698 = vrot.slane %v684, %v697
        %v699 = vcombine.high %v691, %v691
        %v700 = vcombine.high %v698, %v698
        %v702 = vunpack.c.l.s4 1966171168
        %v703 = vunpack.c.0.s8 %v702
        %v704 = vlaneseq
        %v705 = vshrl.u32 %v704, 7
        %v706 = vsub.s32 %v703, %v705
        %v707 = vrot.slane %v691, %v706
        %v709 = vunpack.c.l.s4 1966171168
        %v710 = vunpack.c.0.s8 %v709
        %v711 = vlaneseq
        %v712 = vshrl.u32 %v711, 7
        %v713 = vsub.s32 %v710, %v712
        %v714 = vrot.slane %v698, %v713
        %v716 = vunpack.c.l.s4 1966171168
        %v717 = vunpack.c.0.s8 %v716
        %v718 = vlaneseq
        %v719 = vshrl.u32 %v718, 7
        %v720 = vsub.s32 %v717, %v719
        %v721 = vrot.slane %v699, %v720
        %v723 = vunpack.c.l.s4 1966171168
        %v724 = vunpack.c.0.s8 %v723
        %v725 = vlaneseq
        %v726 = vshrl.u32 %v725, 7
        %v727 = vsub.s32 %v724, %v726
        %v728 = vrot.slane %v700, %v727
        %v729 = vcombine.high %v707, %v707
        %v730 = vcombine.high %v714, %v714
        %v731 = vcombine.high %v721, %v721
        %v732 = vcombine.high %v728, %v728
        %v733 = vunpack.i.l.s16 %v560
        %v734 = vunpack.i.h.s16 %v560
        %v735 = vunpack.i.l.s16 %v574
        %v736 = vunpack.i.h.s16 %v574
        %v737 = vunpack.i.l.s16 %v582
        %v738 = vunpack.i.h.s16 %v582
        %v739 = vunpack.i.l.s16 %v584
        %v740 = vunpack.i.h.s16 %v584
        %v741 = vunpack.i.l.s16 %v567
        %v742 = vunpack.i.h.s16 %v567
        %v743 = vunpack.i.l.s16 %v581
        %v744 = vunpack.i.h.s16 %v581
        %v745 = vunpack.i.l.s16 %v583
        %v746 = vunpack.i.h.s16 %v583
        %v747 = vunpack.i.l.s16 %v585
        %v748 = vunpack.i.l.s16 %v609
        %v749 = vunpack.i.h.s16 %v609
        %v750 = vunpack.i.l.s16 %v623
        %v751 = vunpack.i.h.s16 %v623
        %v752 = vunpack.i.l.s16 %v631
        %v753 = vunpack.i.h.s16 %v631
        %v754 = vunpack.i.l.s16 %v633
        %v755 = vunpack.i.h.s16 %v633
        %v756 = vunpack.i.l.s16 %v616
        %v757 = vunpack.i.h.s16 %v616
        %v758 = vunpack.i.l.s16 %v630
        %v759 = vunpack.i.h.s16 %v630
        %v760 = vunpack.i.l.s16 %v632
        %v761 = vunpack.i.h.s16 %v632
        %v762 = vunpack.i.l.s16 %v634
        %v763 = vunpack.i.l.s16 %v658
        %v764 = vunpack.i.h.s16 %v658
        %v765 = vunpack.i.l.s16 %v672
        %v766 = vunpack.i.h.s16 %v672
        %v767 = vunpack.i.l.s16 %v680
        %v768 = vunpack.i.h.s16 %v680
        %v769 = vunpack.i.l.s16 %v682
        %v770 = vunpack.i.h.s16 %v682
        %v771 = vunpack.i.l.s16 %v665
        %v772 = vunpack.i.h.s16 %v665
        %v773 = vunpack.i.l.s16 %v679
        %v774 = vunpack.i.h.s16 %v679
        %v775 = vunpack.i.l.s16 %v681
        %v776 = vunpack.i.h.s16 %v681
        %v777 = vunpack.i.l.s16 %v683
        %v778 = vunpack.i.l.s16 %v707
        %v779 = vunpack.i.h.s16 %v707
        %v780 = vunpack.i.l.s16 %v721
        %v781 = vunpack.i.h.s16 %v721
        %v782 = vunpack.i.l.s16 %v729
        %v783 = vunpack.i.h.s16 %v729
        %v784 = vunpack.i.l.s16 %v731
        %v785 = vunpack.i.h.s16 %v731
        %v786 = vunpack.i.l.s16 %v714
        %v787 = vunpack.i.h.s16 %v714
        %v788 = vunpack.i.l.s16 %v728
        %v789 = vunpack.i.h.s16 %v728
        %v790 = vunpack.i.l.s16 %v730
        %v791 = vunpack.i.h.s16 %v730
        %v792 = vunpack.i.l.s16 %v732
        %v793 = vunpack.i.h.s16 %v585
        %v794 = vunpack.i.h.s16 %v634
        %v795 = vunpack.i.h.s16 %v683
        %v796 = vunpack.i.h.s16 %v732
        %v797 = vpack.i.b16 %v735, %v734
        %v798 = vpack.i.b16 %v737, %v736
        %v799 = vpack.i.b16 %v739, %v738
        %v800 = vpack.i.b16 %v741, %v740
        %v801 = vpack.i.b16 %v743, %v742
        %v802 = vpack.i.b16 %v745, %v744
        %v803 = vpack.i.b16 %v747, %v746
        %v804 = vpack.i.b16 %v749, %v793
        %v805 = vpack.i.b16 %v751, %v750
        %v806 = vpack.i.b16 %v753, %v752
        %v807 = vpack.i.b16 %v755, %v754
        %v808 = vpack.i.b16 %v757, %v756
        %v809 = vpack.i.b16 %v759, %v758
        %v810 = vpack.i.b16 %v761, %v760
        %v811 = vpack.i.b16 %v794, %v762
        %v812 = vpack.i.b16 %v765, %v764
        %v813 = vpack.i.b16 %v767, %v766
        %v814 = vpack.i.b16 %v769, %v768
        %v815 = vpack.i.b16 %v771, %v770
        %v816 = vpack.i.b16 %v773, %v772
        %v817 = vpack.i.b16 %v775, %v774
        %v818 = vpack.i.b16 %v777, %v776
        %v819 = vpack.i.b16 %v779, %v795
        %v820 = vpack.i.b16 %v781, %v780
        %v821 = vpack.i.b16 %v783, %v782
        %v822 = vpack.i.b16 %v785, %v784
        %v823 = vpack.i.b16 %v787, %v786
        %v824 = vpack.i.b16 %v789, %v788
        %v825 = vpack.i.b16 %v791, %v790
        %v826 = vpack.i.b16 %v796, %v792
        %v827 = vcombine.low %v797, %v798
        %v828 = vcombine.low %v799, %v800
        %v829 = vcombine.low %v801, %v802
        %v830 = vcombine.low %v803, %v804
        %v832 = vunpack.c.l.s4 1966171168
        %v833 = vunpack.c.0.s8 %v832
        %v834 = vlaneseq
        %v835 = vshrl.u32 %v834, 7
        %v836 = vsub.s32 %v833, %v835
        %v837 = vrot.slane %v827, %v836
        %v839 = vunpack.c.l.s4 1966171168
        %v840 = vunpack.c.0.s8 %v839
        %v841 = vlaneseq
        %v842 = vshrl.u32 %v841, 7
        %v843 = vsub.s32 %v840, %v842
        %v844 = vrot.slane %v828, %v843
        %v846 = vunpack.c.l.s4 1966171168
        %v847 = vunpack.c.0.s8 %v846
        %v848 = vlaneseq
        %v849 = vshrl.u32 %v848, 7
        %v850 = vsub.s32 %v847, %v849
        %v851 = vrot.slane %v829, %v850
        %v853 = vunpack.c.l.s4 1966171168
        %v854 = vunpack.c.0.s8 %v853
        %v855 = vlaneseq
        %v856 = vshrl.u32 %v855, 7
        %v857 = vsub.s32 %v854, %v856
        %v858 = vrot.slane %v830, %v857
        %v859 = vcombine.low %v837, %v844
        %v860 = vcombine.low %v851, %v858
        %v862 = vunpack.c.l.s4 1966171168
        %v863 = vunpack.c.0.s8 %v862
        %v864 = vlaneseq
        %v865 = vshrl.u32 %v864, 7
        %v866 = vsub.s32 %v863, %v865
        %v867 = vrot.slane %v859, %v866
        %v869 = vunpack.c.l.s4 1966171168
        %v870 = vunpack.c.0.s8 %v869
        %v871 = vlaneseq
        %v872 = vshrl.u32 %v871, 7
        %v873 = vsub.s32 %v870, %v872
        %v874 = vrot.slane %v860, %v873
        %v875 = vcombine.low %v867, %v874
        %v876 = vcombine.low %v805, %v806
        %v877 = vcombine.low %v807, %v808
        %v878 = vcombine.low %v809, %v810
        %v879 = vcombine.low %v811, %v812
        %v881 = vunpack.c.l.s4 1966171168
        %v882 = vunpack.c.0.s8 %v881
        %v883 = vlaneseq
        %v884 = vshrl.u32 %v883, 7
        %v885 = vsub.s32 %v882, %v884
        %v886 = vrot.slane %v876, %v885
        %v888 = vunpack.c.l.s4 1966171168
        %v889 = vunpack.c.0.s8 %v888
        %v890 = vlaneseq
        %v891 = vshrl.u32 %v890, 7
        %v892 = vsub.s32 %v889, %v891
        %v893 = vrot.slane %v877, %v892
        %v895 = vunpack.c.l.s4 1966171168
        %v896 = vunpack.c.0.s8 %v895
        %v897 = vlaneseq
        %v898 = vshrl.u32 %v897, 7
        %v899 = vsub.s32 %v896, %v898
        %v900 = vrot.slane %v878, %v899
        %v902 = vunpack.c.l.s4 1966171168
        %v903 = vunpack.c.0.s8 %v902
        %v904 = vlaneseq
        %v905 = vshrl.u32 %v904, 7
        %v906 = vsub.s32 %v903, %v905
        %v907 = vrot.slane %v879, %v906
        %v908 = vcombine.low %v886, %v893
        %v909 = vcombine.low %v900, %v907
        %v911 = vunpack.c.l.s4 1966171168
        %v912 = vunpack.c.0.s8 %v911
        %v913 = vlaneseq
        %v914 = vshrl.u32 %v913, 7
        %v915 = vsub.s32 %v912, %v914
        %v916 = vrot.slane %v908, %v915
        %v918 = vunpack.c.l.s4 1966171168
        %v919 = vunpack.c.0.s8 %v918
        %v920 = vlaneseq
        %v921 = vshrl.u32 %v920, 7
        %v922 = vsub.s32 %v919, %v921
        %v923 = vrot.slane %v909, %v922
        %v924 = vcombine.low %v916, %v923
        %v925 = vcombine.low %v813, %v814
        %v926 = vcombine.low %v815, %v816
        %v927 = vcombine.low %v817, %v818
        %v928 = vcombine.low %v819, %v820
        %v930 = vunpack.c.l.s4 1966171168
        %v931 = vunpack.c.0.s8 %v930
        %v932 = vlaneseq
        %v933 = vshrl.u32 %v932, 7
        %v934 = vsub.s32 %v931, %v933
        %v935 = vrot.slane %v925, %v934
        %v937 = vunpack.c.l.s4 1966171168
        %v938 = vunpack.c.0.s8 %v937
        %v939 = vlaneseq
        %v940 = vshrl.u32 %v939, 7
        %v941 = vsub.s32 %v938, %v940
        %v942 = vrot.slane %v926, %v941
        %v944 = vunpack.c.l.s4 1966171168
        %v945 = vunpack.c.0.s8 %v944
        %v946 = vlaneseq
        %v947 = vshrl.u32 %v946, 7
        %v948 = vsub.s32 %v945, %v947
        %v949 = vrot.slane %v927, %v948
        %v951 = vunpack.c.l.s4 1966171168
        %v952 = vunpack.c.0.s8 %v951
        %v953 = vlaneseq
        %v954 = vshrl.u32 %v953, 7
        %v955 = vsub.s32 %v952, %v954
        %v956 = vrot.slane %v928, %v955
        %v957 = vcombine.low %v935, %v942
        %v958 = vcombine.low %v949, %v956
        %v960 = vunpack.c.l.s4 1966171168
        %v961 = vunpack.c.0.s8 %v960
        %v962 = vlaneseq
        %v963 = vshrl.u32 %v962, 7
        %v964 = vsub.s32 %v961, %v963
        %v965 = vrot.slane %v957, %v964
        %v967 = vunpack.c.l.s4 1966171168
        %v968 = vunpack.c.0.s8 %v967
        %v969 = vlaneseq
        %v970 = vshrl.u32 %v969, 7
        %v971 = vsub.s32 %v968, %v970
        %v972 = vrot.slane %v958, %v971
        %v973 = vcombine.low %v965, %v972
        %v974 = vcombine.low %v821, %v822
        %v975 = vcombine.low %v823, %v824
        %v976 = vcombine.low %v825, %v826
        %v978 = vunpack.c.l.s4 1966171168
        %v979 = vunpack.c.0.s8 %v978
        %v980 = vlaneseq
        %v981 = vshrl.u32 %v980, 7
        %v982 = vsub.s32 %v979, %v981
        %v983 = vrot.slane %v974, %v982
        %v985 = vunpack.c.l.s4 1966171168
        %v986 = vunpack.c.0.s8 %v985
        %v987 = vlaneseq
        %v988 = vshrl.u32 %v987, 7
        %v989 = vsub.s32 %v986, %v988
        %v990 = vrot.slane %v975, %v989
        %v992 = vunpack.c.l.s4 1966171168
        %v993 = vunpack.c.0.s8 %v992
        %v994 = vlaneseq
        %v995 = vshrl.u32 %v994, 7
        %v996 = vsub.s32 %v993, %v995
        %v997 = vrot.slane %v976, %v996
        %v998 = vcombine.low %v983, %v990
        %v1000 = vunpack.c.l.s4 1966171168
        %v1001 = vunpack.c.0.s8 %v1000
        %v1002 = vlaneseq
        %v1003 = vshrl.u32 %v1002, 7
        %v1004 = vsub.s32 %v1001, %v1003
        %v1005 = vrot.slane %v998, %v1004
        %v1007 = vunpack.c.l.s4 1966171168
        %v1008 = vunpack.c.0.s8 %v1007
        %v1009 = vlaneseq
        %v1010 = vshrl.u32 %v1009, 7
        %v1011 = vsub.s32 %v1008, %v1010
        %v1012 = vrot.slane %v997, %v1011
        %v1013 = vcombine.low %v1005, %v1012
        %v1034 = vunpack.c.l.b16 %v495
        %v1035 = vunpack.c.h.b16 %v495
        %v1036 = vunpack.c.l.b16 %v496
        %v1037 = vunpack.c.h.b16 %v496
        %v1038 = vunpack.c.l.b16 %v497
        %v1039 = vunpack.c.h.b16 %v497
        %v1040 = vunpack.c.l.b16 %v498
        %v1041 = vunpack.c.h.b16 %v498
        %v1042 = vunpack.c.l.b16 %v499
        %v1043 = vunpack.c.h.b16 %v499
        %v1044 = vunpack.c.l.b16 %v500
        %v1045 = vunpack.c.h.b16 %v500
        %v1046 = vunpack.c.l.b16 %v501
        %v1047 = vunpack.c.h.b16 %v501
        %v1048 = vunpack.c.l.b16 %v502
        %v1049 = vunpack.c.h.b16 %v502
        %v1050 = vunpack.c.l.b16 %v503
        %v1051 = vunpack.c.h.b16 %v503
        %v1052 = vunpack.c.l.b16 %v504
        %v1053 = vunpack.c.h.b16 %v504
        %v1054 = vunpack.c.l.b16 %v505
        %v1055 = vunpack.c.h.b16 %v505
        %v1056 = vunpack.c.l.b16 %v506
        %v1057 = vunpack.c.h.b16 %v506
        %v1058 = vunpack.c.l.b16 %v507
        %v1059 = vunpack.c.h.b16 %v507
        %v1060 = vunpack.c.l.b16 %v508
        %v1061 = vunpack.c.h.b16 %v508
        %v1062 = vunpack.c.l.b16 %v509
        %v1063 = vunpack.c.h.b16 %v509
        %v1064 = vunpack.c.l.b16 %v510
        %v1065 = vunpack.c.h.b16 %v510
        %v1066 = vpack.c.b16 %v1036, %v1034
        %v1067 = vpack.c.b16 %v1037, %v1035
        %v1068 = vpack.c.b16 %v1040, %v1038
        %v1069 = vpack.c.b16 %v1041, %v1039
        %v1070 = vpack.c.b16 %v1044, %v1042
        %v1071 = vpack.c.b16 %v1045, %v1043
        %v1072 = vpack.c.b16 %v1048, %v1046
        %v1073 = vpack.c.b16 %v1049, %v1047
        %v1074 = vpack.c.b16 %v1052, %v1050
        %v1075 = vpack.c.b16 %v1053, %v1051
        %v1076 = vpack.c.b16 %v1056, %v1054
        %v1077 = vpack.c.b16 %v1057, %v1055
        %v1078 = vpack.c.b16 %v1060, %v1058
        %v1079 = vpack.c.b16 %v1061, %v1059
        %v1080 = vpack.c.b16 %v1064, %v1062
        %v1081 = vpack.c.b16 %v1065, %v1063
        %1098 = vmatprep.subr.bf16.mxu0 %v1067
        %1099 = vmatpush1.bf16.msra.mxu0 %v1066
        %1100 = vmatprep.subr.bf16.mxu0 %v1069
        %1101 = vmatpush1.bf16.msra.mxu0 %v1068
        %1102 = vmatprep.subr.bf16.mxu0 %v1071
        %1103 = vmatpush1.bf16.msra.mxu0 %v1070
        %1104 = vmatprep.subr.bf16.mxu0 %v1073
        %1105 = vmatpush1.bf16.msra.mxu0 %v1072
        %1106 = vmatprep.subr.bf16.mxu0 %v1075
        %1107 = vmatpush1.bf16.msra.mxu0 %v1074
        %1108 = vmatprep.subr.bf16.mxu0 %v1077
        %1109 = vmatpush1.bf16.msra.mxu0 %v1076
        %1110 = vmatprep.subr.bf16.mxu0 %v1079
        %1111 = vmatpush1.bf16.msra.mxu0 %v1078
        %1112 = vmatprep.subr.bf16.mxu0 %v1081
        %1113 = vmatpush1.bf16.msra.mxu0 %v1080
        %1114 = vmatprep.subr.bf16.mxu0 0
        %1115 = vmatpush1.bf16.msra.mxu0 0
        %1116 = vmatprep.subr.bf16.mxu0 0
        %1117 = vmatpush1.bf16.msra.mxu0 0
        %1118 = vmatprep.subr.bf16.mxu0 0
        %1119 = vmatpush1.bf16.msra.mxu0 0
        %1120 = vmatprep.subr.bf16.mxu0 0
        %1121 = vmatpush1.bf16.msra.mxu0 0
        %1122 = vmatprep.subr.bf16.mxu0 0
        %1123 = vmatpush1.bf16.msra.mxu0 0
        %1124 = vmatprep.subr.bf16.mxu0 0
        %1125 = vmatpush1.bf16.msra.mxu0 0
        %1126 = vmatprep.subr.bf16.mxu0 0
        %1127 = vmatpush1.bf16.msra.mxu0 0
        %1128 = vmatprep.subr.bf16.mxu0 0
        %1129 = vmatpush1.bf16.msra.mxu0 0
        %1130 = vmatprep.mubr.bf16.mxu0 0
        %1131 = vmatmul.mubr.bf16.gmra.mrb[0].mxu0 %v875
        %v1132 = vpop.f32.mrb[0].mxu0
        %v1133 = vadd.f32 0.0, %v1132
        %v1134 = vpop.f32.mrb[0].mxu0
        %v1135 = vadd.f32 0.0, %v1134
        %v1136 = vpop.f32.mrb[0].mxu0
        %v1137 = vadd.f32 0.0, %v1136
        %v1138 = vpop.f32.mrb[0].mxu0
        %v1139 = vadd.f32 0.0, %v1138
        %1140 = vmatprep.mubr.bf16.mxu0 0
        %1141 = vmatmul.mubr.bf16.gmra.mrb[0].mxu0 %v924
        %v1142 = vpop.f32.mrb[0].mxu0
        %v1143 = vadd.f32 0.0, %v1142
        %v1144 = vpop.f32.mrb[0].mxu0
        %v1145 = vadd.f32 0.0, %v1144
        %v1146 = vpop.f32.mrb[0].mxu0
        %v1147 = vadd.f32 0.0, %v1146
        %v1148 = vpop.f32.mrb[0].mxu0
        %v1149 = vadd.f32 0.0, %v1148
        %1150 = vmatprep.mubr.bf16.mxu0 0
        %1151 = vmatmul.mubr.bf16.gmra.mrb[0].mxu0 %v973
        %v1152 = vpop.f32.mrb[0].mxu0
        %v1153 = vadd.f32 0.0, %v1152
        %v1154 = vpop.f32.mrb[0].mxu0
        %v1155 = vadd.f32 0.0, %v1154
        %v1156 = vpop.f32.mrb[0].mxu0
        %v1157 = vadd.f32 0.0, %v1156
        %v1158 = vpop.f32.mrb[0].mxu0
        %v1159 = vadd.f32 0.0, %v1158
        %1160 = vmatprep.mubr.bf16.mxu0 0
        %1161 = vmatmul.mubr.bf16.gmra.mrb[0].mxu0 %v1013
        %v1162 = vpop.f32.mrb[0].mxu0
        %v1163 = vadd.f32 0.0, %v1162
        %v1164 = vpop.f32.mrb[0].mxu0
        %v1165 = vadd.f32 0.0, %v1164
        %v1166 = vpop.f32.mrb[0].mxu0
        %v1167 = vadd.f32 0.0, %v1166
        %v1168 = vpop.f32.mrb[0].mxu0
        %v1169 = vadd.f32 0.0, %v1168
        %1170 = vdwg.mxu0
        %v1171 = vpack.i.b16 %v734, %v733
        %v1172 = vpack.i.b16 %v736, %v735
        %v1173 = vpack.i.b16 %v738, %v737
        %v1174 = vpack.i.b16 %v740, %v739
        %v1175 = vpack.i.b16 %v742, %v741
        %v1176 = vpack.i.b16 %v744, %v743
        %v1177 = vpack.i.b16 %v746, %v745
        %v1178 = vpack.i.b16 %v748, %v747
        %v1179 = vpack.i.b16 %v750, %v749
        %v1180 = vpack.i.b16 %v752, %v751
        %v1181 = vpack.i.b16 %v754, %v753
        %v1182 = vpack.i.b16 %v756, %v755
        %v1183 = vpack.i.b16 %v758, %v757
        %v1184 = vpack.i.b16 %v760, %v759
        %v1185 = vpack.i.b16 %v762, %v761
        %v1186 = vpack.i.b16 %v764, %v763
        %v1187 = vpack.i.b16 %v766, %v765
        %v1188 = vpack.i.b16 %v768, %v767
        %v1189 = vpack.i.b16 %v770, %v769
        %v1190 = vpack.i.b16 %v772, %v771
        %v1191 = vpack.i.b16 %v774, %v773
        %v1192 = vpack.i.b16 %v776, %v775
        %v1193 = vpack.i.b16 %v778, %v777
        %v1194 = vpack.i.b16 %v780, %v779
        %v1195 = vpack.i.b16 %v782, %v781
        %v1196 = vpack.i.b16 %v784, %v783
        %v1197 = vpack.i.b16 %v786, %v785
        %v1198 = vpack.i.b16 %v788, %v787
        %v1199 = vpack.i.b16 %v790, %v789
        %v1200 = vpack.i.b16 %v792, %v791
        %v1201 = vcombine.low %v1171, %v1172
        %v1202 = vcombine.low %v1173, %v1174
        %v1203 = vcombine.low %v1175, %v1176
        %v1204 = vcombine.low %v1177, %v1178
        %v1206 = vunpack.c.l.s4 1966171168
        %v1207 = vunpack.c.0.s8 %v1206
        %v1208 = vlaneseq
        %v1209 = vshrl.u32 %v1208, 7
        %v1210 = vsub.s32 %v1207, %v1209
        %v1211 = vrot.slane %v1201, %v1210
        %v1213 = vunpack.c.l.s4 1966171168
        %v1214 = vunpack.c.0.s8 %v1213
        %v1215 = vlaneseq
        %v1216 = vshrl.u32 %v1215, 7
        %v1217 = vsub.s32 %v1214, %v1216
        %v1218 = vrot.slane %v1202, %v1217
        %v1220 = vunpack.c.l.s4 1966171168
        %v1221 = vunpack.c.0.s8 %v1220
        %v1222 = vlaneseq
        %v1223 = vshrl.u32 %v1222, 7
        %v1224 = vsub.s32 %v1221, %v1223
        %v1225 = vrot.slane %v1203, %v1224
        %v1227 = vunpack.c.l.s4 1966171168
        %v1228 = vunpack.c.0.s8 %v1227
        %v1229 = vlaneseq
        %v1230 = vshrl.u32 %v1229, 7
        %v1231 = vsub.s32 %v1228, %v1230
        %v1232 = vrot.slane %v1204, %v1231
        %v1233 = vcombine.low %v1211, %v1218
        %v1234 = vcombine.low %v1225, %v1232
        %v1236 = vunpack.c.l.s4 1966171168
        %v1237 = vunpack.c.0.s8 %v1236
        %v1238 = vlaneseq
        %v1239 = vshrl.u32 %v1238, 7
        %v1240 = vsub.s32 %v1237, %v1239
        %v1241 = vrot.slane %v1233, %v1240
        %v1243 = vunpack.c.l.s4 1966171168
        %v1244 = vunpack.c.0.s8 %v1243
        %v1245 = vlaneseq
        %v1246 = vshrl.u32 %v1245, 7
        %v1247 = vsub.s32 %v1244, %v1246
        %v1248 = vrot.slane %v1234, %v1247
        %v1249 = vcombine.low %v1241, %v1248
        %v1250 = vcombine.low %v1179, %v1180
        %v1251 = vcombine.low %v1181, %v1182
        %v1252 = vcombine.low %v1183, %v1184
        %v1253 = vcombine.low %v1185, %v1186
        %v1255 = vunpack.c.l.s4 1966171168
        %v1256 = vunpack.c.0.s8 %v1255
        %v1257 = vlaneseq
        %v1258 = vshrl.u32 %v1257, 7
        %v1259 = vsub.s32 %v1256, %v1258
        %v1260 = vrot.slane %v1250, %v1259
        %v1262 = vunpack.c.l.s4 1966171168
        %v1263 = vunpack.c.0.s8 %v1262
        %v1264 = vlaneseq
        %v1265 = vshrl.u32 %v1264, 7
        %v1266 = vsub.s32 %v1263, %v1265
        %v1267 = vrot.slane %v1251, %v1266
        %v1269 = vunpack.c.l.s4 1966171168
        %v1270 = vunpack.c.0.s8 %v1269
        %v1271 = vlaneseq
        %v1272 = vshrl.u32 %v1271, 7
        %v1273 = vsub.s32 %v1270, %v1272
        %v1274 = vrot.slane %v1252, %v1273
        %v1276 = vunpack.c.l.s4 1966171168
        %v1277 = vunpack.c.0.s8 %v1276
        %v1278 = vlaneseq
        %v1279 = vshrl.u32 %v1278, 7
        %v1280 = vsub.s32 %v1277, %v1279
        %v1281 = vrot.slane %v1253, %v1280
        %v1282 = vcombine.low %v1260, %v1267
        %v1283 = vcombine.low %v1274, %v1281
        %v1285 = vunpack.c.l.s4 1966171168
        %v1286 = vunpack.c.0.s8 %v1285
        %v1287 = vlaneseq
        %v1288 = vshrl.u32 %v1287, 7
        %v1289 = vsub.s32 %v1286, %v1288
        %v1290 = vrot.slane %v1282, %v1289
        %v1292 = vunpack.c.l.s4 1966171168
        %v1293 = vunpack.c.0.s8 %v1292
        %v1294 = vlaneseq
        %v1295 = vshrl.u32 %v1294, 7
        %v1296 = vsub.s32 %v1293, %v1295
        %v1297 = vrot.slane %v1283, %v1296
        %v1298 = vcombine.low %v1290, %v1297
        %v1299 = vcombine.low %v1187, %v1188
        %v1300 = vcombine.low %v1189, %v1190
        %v1301 = vcombine.low %v1191, %v1192
        %v1302 = vcombine.low %v1193, %v1194
        %v1304 = vunpack.c.l.s4 1966171168
        %v1305 = vunpack.c.0.s8 %v1304
        %v1306 = vlaneseq
        %v1307 = vshrl.u32 %v1306, 7
        %v1308 = vsub.s32 %v1305, %v1307
        %v1309 = vrot.slane %v1299, %v1308
        %v1311 = vunpack.c.l.s4 1966171168
        %v1312 = vunpack.c.0.s8 %v1311
        %v1313 = vlaneseq
        %v1314 = vshrl.u32 %v1313, 7
        %v1315 = vsub.s32 %v1312, %v1314
        %v1316 = vrot.slane %v1300, %v1315
        %v1318 = vunpack.c.l.s4 1966171168
        %v1319 = vunpack.c.0.s8 %v1318
        %v1320 = vlaneseq
        %v1321 = vshrl.u32 %v1320, 7
        %v1322 = vsub.s32 %v1319, %v1321
        %v1323 = vrot.slane %v1301, %v1322
        %v1325 = vunpack.c.l.s4 1966171168
        %v1326 = vunpack.c.0.s8 %v1325
        %v1327 = vlaneseq
        %v1328 = vshrl.u32 %v1327, 7
        %v1329 = vsub.s32 %v1326, %v1328
        %v1330 = vrot.slane %v1302, %v1329
        %v1331 = vcombine.low %v1309, %v1316
        %v1332 = vcombine.low %v1323, %v1330
        %v1334 = vunpack.c.l.s4 1966171168
        %v1335 = vunpack.c.0.s8 %v1334
        %v1336 = vlaneseq
        %v1337 = vshrl.u32 %v1336, 7
        %v1338 = vsub.s32 %v1335, %v1337
        %v1339 = vrot.slane %v1331, %v1338
        %v1341 = vunpack.c.l.s4 1966171168
        %v1342 = vunpack.c.0.s8 %v1341
        %v1343 = vlaneseq
        %v1344 = vshrl.u32 %v1343, 7
        %v1345 = vsub.s32 %v1342, %v1344
        %v1346 = vrot.slane %v1332, %v1345
        %v1347 = vcombine.low %v1339, %v1346
        %v1348 = vcombine.low %v1195, %v1196
        %v1349 = vcombine.low %v1197, %v1198
        %v1350 = vcombine.low %v1199, %v1200
        %v1352 = vunpack.c.l.s4 1966171168
        %v1353 = vunpack.c.0.s8 %v1352
        %v1354 = vlaneseq
        %v1355 = vshrl.u32 %v1354, 7
        %v1356 = vsub.s32 %v1353, %v1355
        %v1357 = vrot.slane %v1348, %v1356
        %v1359 = vunpack.c.l.s4 1966171168
        %v1360 = vunpack.c.0.s8 %v1359
        %v1361 = vlaneseq
        %v1362 = vshrl.u32 %v1361, 7
        %v1363 = vsub.s32 %v1360, %v1362
        %v1364 = vrot.slane %v1349, %v1363
        %v1366 = vunpack.c.l.s4 1966171168
        %v1367 = vunpack.c.0.s8 %v1366
        %v1368 = vlaneseq
        %v1369 = vshrl.u32 %v1368, 7
        %v1370 = vsub.s32 %v1367, %v1369
        %v1371 = vrot.slane %v1350, %v1370
        %v1372 = vcombine.low %v1357, %v1364
        %v1374 = vunpack.c.l.s4 1966171168
        %v1375 = vunpack.c.0.s8 %v1374
        %v1376 = vlaneseq
        %v1377 = vshrl.u32 %v1376, 7
        %v1378 = vsub.s32 %v1375, %v1377
        %v1379 = vrot.slane %v1372, %v1378
        %v1381 = vunpack.c.l.s4 1966171168
        %v1382 = vunpack.c.0.s8 %v1381
        %v1383 = vlaneseq
        %v1384 = vshrl.u32 %v1383, 7
        %v1385 = vsub.s32 %v1382, %v1384
        %v1386 = vrot.slane %v1371, %v1385
        %v1387 = vcombine.low %v1379, %v1386
        %v1408 = vunpack.c.l.b16 %v479
        %v1409 = vunpack.c.h.b16 %v479
        %v1410 = vunpack.c.l.b16 %v480
        %v1411 = vunpack.c.h.b16 %v480
        %v1412 = vunpack.c.l.b16 %v481
        %v1413 = vunpack.c.h.b16 %v481
        %v1414 = vunpack.c.l.b16 %v482
        %v1415 = vunpack.c.h.b16 %v482
        %v1416 = vunpack.c.l.b16 %v483
        %v1417 = vunpack.c.h.b16 %v483
        %v1418 = vunpack.c.l.b16 %v484
        %v1419 = vunpack.c.h.b16 %v484
        %v1420 = vunpack.c.l.b16 %v485
        %v1421 = vunpack.c.h.b16 %v485
        %v1422 = vunpack.c.l.b16 %v486
        %v1423 = vunpack.c.h.b16 %v486
        %v1424 = vunpack.c.l.b16 %v487
        %v1425 = vunpack.c.h.b16 %v487
        %v1426 = vunpack.c.l.b16 %v488
        %v1427 = vunpack.c.h.b16 %v488
        %v1428 = vunpack.c.l.b16 %v489
        %v1429 = vunpack.c.h.b16 %v489
        %v1430 = vunpack.c.l.b16 %v490
        %v1431 = vunpack.c.h.b16 %v490
        %v1432 = vunpack.c.l.b16 %v491
        %v1433 = vunpack.c.h.b16 %v491
        %v1434 = vunpack.c.l.b16 %v492
        %v1435 = vunpack.c.h.b16 %v492
        %v1436 = vunpack.c.l.b16 %v493
        %v1437 = vunpack.c.h.b16 %v493
        %v1438 = vunpack.c.l.b16 %v494
        %v1439 = vunpack.c.h.b16 %v494
        %v1440 = vpack.c.b16 %v1410, %v1408
        %v1441 = vpack.c.b16 %v1411, %v1409
        %v1442 = vpack.c.b16 %v1414, %v1412
        %v1443 = vpack.c.b16 %v1415, %v1413
        %v1444 = vpack.c.b16 %v1418, %v1416
        %v1445 = vpack.c.b16 %v1419, %v1417
        %v1446 = vpack.c.b16 %v1422, %v1420
        %v1447 = vpack.c.b16 %v1423, %v1421
        %v1448 = vpack.c.b16 %v1426, %v1424
        %v1449 = vpack.c.b16 %v1427, %v1425
        %v1450 = vpack.c.b16 %v1430, %v1428
        %v1451 = vpack.c.b16 %v1431, %v1429
        %v1452 = vpack.c.b16 %v1434, %v1432
        %v1453 = vpack.c.b16 %v1435, %v1433
        %v1454 = vpack.c.b16 %v1438, %v1436
        %v1455 = vpack.c.b16 %v1439, %v1437
        %1472 = vmatprep.subr.bf16.mxu0 %v1441
        %1473 = vmatpush1.bf16.msra.mxu0 %v1440
        %1474 = vmatprep.subr.bf16.mxu0 %v1443
        %1475 = vmatpush1.bf16.msra.mxu0 %v1442
        %1476 = vmatprep.subr.bf16.mxu0 %v1445
        %1477 = vmatpush1.bf16.msra.mxu0 %v1444
        %1478 = vmatprep.subr.bf16.mxu0 %v1447
        %1479 = vmatpush1.bf16.msra.mxu0 %v1446
        %1480 = vmatprep.subr.bf16.mxu0 %v1449
        %1481 = vmatpush1.bf16.msra.mxu0 %v1448
        %1482 = vmatprep.subr.bf16.mxu0 %v1451
        %1483 = vmatpush1.bf16.msra.mxu0 %v1450
        %1484 = vmatprep.subr.bf16.mxu0 %v1453
        %1485 = vmatpush1.bf16.msra.mxu0 %v1452
        %1486 = vmatprep.subr.bf16.mxu0 %v1455
        %1487 = vmatpush1.bf16.msra.mxu0 %v1454
        %1488 = vmatprep.subr.bf16.mxu0 0
        %1489 = vmatpush1.bf16.msra.mxu0 0
        %1490 = vmatprep.subr.bf16.mxu0 0
        %1491 = vmatpush1.bf16.msra.mxu0 0
        %1492 = vmatprep.subr.bf16.mxu0 0
        %1493 = vmatpush1.bf16.msra.mxu0 0
        %1494 = vmatprep.subr.bf16.mxu0 0
        %1495 = vmatpush1.bf16.msra.mxu0 0
        %1496 = vmatprep.subr.bf16.mxu0 0
        %1497 = vmatpush1.bf16.msra.mxu0 0
        %1498 = vmatprep.subr.bf16.mxu0 0
        %1499 = vmatpush1.bf16.msra.mxu0 0
        %1500 = vmatprep.subr.bf16.mxu0 0
        %1501 = vmatpush1.bf16.msra.mxu0 0
        %1502 = vmatprep.subr.bf16.mxu0 0
        %1503 = vmatpush1.bf16.msra.mxu0 0
        %1504 = vmatprep.mubr.bf16.mxu0 0
        %1505 = vmatmul.mubr.bf16.gmra.mrb[0].mxu0 %v1249
        %v1506 = vpop.f32.mrb[0].mxu0
        %v1507 = vadd.f32 %v1133, %v1506
        %v1508 = vpop.f32.mrb[0].mxu0
        %v1509 = vadd.f32 %v1135, %v1508
        %v1510 = vpop.f32.mrb[0].mxu0
        %v1511 = vadd.f32 %v1137, %v1510
        %v1512 = vpop.f32.mrb[0].mxu0
        %v1513 = vadd.f32 %v1139, %v1512
        %1514 = vmatprep.mubr.bf16.mxu0 0
        %1515 = vmatmul.mubr.bf16.gmra.mrb[0].mxu0 %v1298
        %v1516 = vpop.f32.mrb[0].mxu0
        %v1517 = vadd.f32 %v1143, %v1516
        %v1518 = vpop.f32.mrb[0].mxu0
        %v1519 = vadd.f32 %v1145, %v1518
        %v1520 = vpop.f32.mrb[0].mxu0
        %v1521 = vadd.f32 %v1147, %v1520
        %v1522 = vpop.f32.mrb[0].mxu0
        %v1523 = vadd.f32 %v1149, %v1522
        %1524 = vmatprep.mubr.bf16.mxu0 0
        %1525 = vmatmul.mubr.bf16.gmra.mrb[0].mxu0 %v1347
        %v1526 = vpop.f32.mrb[0].mxu0
        %v1527 = vadd.f32 %v1153, %v1526
        %v1528 = vpop.f32.mrb[0].mxu0
        %v1529 = vadd.f32 %v1155, %v1528
        %v1530 = vpop.f32.mrb[0].mxu0
        %v1531 = vadd.f32 %v1157, %v1530
        %v1532 = vpop.f32.mrb[0].mxu0
        %v1533 = vadd.f32 %v1159, %v1532
        %1534 = vmatprep.mubr.bf16.mxu0 0
        %1535 = vmatmul.mubr.bf16.gmra.mrb[0].mxu0 %v1387
        %v1536 = vpop.f32.mrb[0].mxu0
        %v1537 = vadd.f32 %v1163, %v1536
        %v1538 = vpop.f32.mrb[0].mxu0
        %v1539 = vadd.f32 %v1165, %v1538
        %v1540 = vpop.f32.mrb[0].mxu0
        %v1541 = vadd.f32 %v1167, %v1540
        %v1542 = vpop.f32.mrb[0].mxu0
        %v1543 = vadd.f32 %v1169, %v1542
        %1544 = vdwg.mxu0
        %v1546 = vlaneseq
        %v1547 = vshrl.u32 %v1546, 7
        %v1548 = vsub.s32 0, %v1547
        %v1549 = vrot.slane %v511, %v1548
        %v1550 = vlaneseq
        %v1551 = vshrl.u32 %v1550, 7
        %v1552 = vsub.s32 1, %v1551
        %v1553 = vrot.slane %v511, %v1552
        %v1556 = vadd.f32 %v1507, %v1549
        %v1557 = vadd.f32 %v1509, %v1553
        %v1558 = vadd.f32 %v1511, %v1549
        %v1559 = vadd.f32 %v1513, %v1553
        %v1560 = vadd.f32 %v1517, %v1549
        %v1561 = vadd.f32 %v1519, %v1553
        %v1562 = vadd.f32 %v1521, %v1549
        %v1563 = vadd.f32 %v1523, %v1553
        %v1564 = vadd.f32 %v1527, %v1549
        %v1565 = vadd.f32 %v1529, %v1553
        %v1566 = vadd.f32 %v1531, %v1549
        %v1567 = vadd.f32 %v1533, %v1553
        %v1568 = vadd.f32 %v1537, %v1549
        %v1569 = vadd.f32 %v1539, %v1553
        %v1570 = vadd.f32 %v1541, %v1549
        %v1571 = vadd.f32 %v1543, %v1553
        %v1572 = vtanh.pop %v1556
        %v1573 = vtanh.pop %v1558
        %v1574 = vtanh.pop %v1560
        %v1575 = vtanh.pop %v1562
        %v1576 = vtanh.pop %v1564
        %v1577 = vtanh.pop %v1566
        %v1578 = vtanh.pop %v1568
        %v1579 = vtanh.pop %v1570
        %v1580 = vmul.f32 %v1557, 0.5
        %v1581 = vmul.f32 %v1559, 0.5
        %v1582 = vmul.f32 %v1561, 0.5
        %v1583 = vmul.f32 %v1563, 0.5
        %v1584 = vmul.f32 %v1565, 0.5
        %v1585 = vmul.f32 %v1567, 0.5
        %v1586 = vmul.f32 %v1569, 0.5
        %v1587 = vmul.f32 %v1571, 0.5
        %v1588 = vtanh.pop %v1580
        %v1589 = vtanh.pop %v1581
        %v1590 = vtanh.pop %v1582
        %v1591 = vtanh.pop %v1583
        %v1592 = vtanh.pop %v1584
        %v1593 = vtanh.pop %v1585
        %v1594 = vtanh.pop %v1586
        %v1595 = vtanh.pop %v1587
        %v1596 = vadd.f32 %v1588, 1.0
        %v1597 = vadd.f32 %v1589, 1.0
        %v1598 = vadd.f32 %v1590, 1.0
        %v1599 = vadd.f32 %v1591, 1.0
        %v1600 = vadd.f32 %v1592, 1.0
        %v1601 = vadd.f32 %v1593, 1.0
        %v1602 = vadd.f32 %v1594, 1.0
        %v1603 = vadd.f32 %v1595, 1.0
        %v1604 = vmul.f32 %v1596, 0.5
        %v1605 = vmul.f32 %v1597, 0.5
        %v1606 = vmul.f32 %v1598, 0.5
        %v1607 = vmul.f32 %v1599, 0.5
        %v1608 = vmul.f32 %v1600, 0.5
        %v1609 = vmul.f32 %v1601, 0.5
        %v1610 = vmul.f32 %v1602, 0.5
        %v1611 = vmul.f32 %v1603, 0.5
        %v1612 = vmul.f32 %v1572, %v1604
        %v1613 = vmul.f32 %v1573, %v1605
        %v1614 = vmul.f32 %v1574, %v1606
        %v1615 = vmul.f32 %v1575, %v1607
        %v1616 = vmul.f32 %v1576, %v1608
        %v1617 = vmul.f32 %v1577, %v1609
        %v1618 = vmul.f32 %v1578, %v1610
        %v1619 = vmul.f32 %v1579, %v1611
        %v1620 = vpack.c.bf16 %v1613, %v1612
        %v1621 = vpack.c.bf16 %v1615, %v1614
        %v1622 = vpack.c.bf16 %v1617, %v1616
        %v1623 = vpack.c.bf16 %v1619, %v1618
        %v1625 = vlaneseq
        %v1626 = vshrl.u32 %v1625, 7
        %v1627 = vsub.s32 0, %v1626
        %v1628 = vrot.slane %v528, %v1627
        %v1629 = vlaneseq
        %v1630 = vshrl.u32 %v1629, 7
        %v1631 = vsub.s32 1, %v1630
        %v1632 = vrot.slane %v528, %v1631
        %v1651 = vunpack.c.l.b16 %v512
        %v1652 = vunpack.c.h.b16 %v512
        %v1653 = vunpack.c.l.b16 %v513
        %v1654 = vunpack.c.h.b16 %v513
        %v1655 = vunpack.c.l.b16 %v514
        %v1656 = vunpack.c.h.b16 %v514
        %v1657 = vunpack.c.l.b16 %v515
        %v1658 = vunpack.c.h.b16 %v515
        %v1659 = vunpack.c.l.b16 %v516
        %v1660 = vunpack.c.h.b16 %v516
        %v1661 = vunpack.c.l.b16 %v517
        %v1662 = vunpack.c.h.b16 %v517
        %v1663 = vunpack.c.l.b16 %v518
        %v1664 = vunpack.c.h.b16 %v518
        %v1665 = vunpack.c.l.b16 %v519
        %v1666 = vunpack.c.h.b16 %v519
        %v1667 = vunpack.c.l.b16 %v520
        %v1668 = vunpack.c.h.b16 %v520
        %v1669 = vunpack.c.l.b16 %v521
        %v1670 = vunpack.c.h.b16 %v521
        %v1671 = vunpack.c.l.b16 %v522
        %v1672 = vunpack.c.h.b16 %v522
        %v1673 = vunpack.c.l.b16 %v523
        %v1674 = vunpack.c.h.b16 %v523
        %v1675 = vunpack.c.l.b16 %v524
        %v1676 = vunpack.c.h.b16 %v524
        %v1677 = vunpack.c.l.b16 %v525
        %v1678 = vunpack.c.h.b16 %v525
        %v1679 = vunpack.c.l.b16 %v526
        %v1680 = vunpack.c.h.b16 %v526
        %v1681 = vunpack.c.l.b16 %v527
        %v1682 = vunpack.c.h.b16 %v527
        %v1683 = vpack.c.b16 %v1653, %v1651
        %v1684 = vpack.c.b16 %v1654, %v1652
        %v1685 = vpack.c.b16 %v1657, %v1655
        %v1686 = vpack.c.b16 %v1658, %v1656
        %v1687 = vpack.c.b16 %v1661, %v1659
        %v1688 = vpack.c.b16 %v1662, %v1660
        %v1689 = vpack.c.b16 %v1665, %v1663
        %v1690 = vpack.c.b16 %v1666, %v1664
        %v1691 = vpack.c.b16 %v1669, %v1667
        %v1692 = vpack.c.b16 %v1670, %v1668
        %v1693 = vpack.c.b16 %v1673, %v1671
        %v1694 = vpack.c.b16 %v1674, %v1672
        %v1695 = vpack.c.b16 %v1677, %v1675
        %v1696 = vpack.c.b16 %v1678, %v1676
        %v1697 = vpack.c.b16 %v1681, %v1679
        %v1698 = vpack.c.b16 %v1682, %v1680
        %1715 = vmatprep.subr.bf16.mxu0 %v1684
        %1716 = vmatpush1.bf16.msra.mxu0 %v1683
        %1717 = vmatprep.subr.bf16.mxu0 %v1686
        %1718 = vmatpush1.bf16.msra.mxu0 %v1685
        %1719 = vmatprep.subr.bf16.mxu0 %v1688
        %1720 = vmatpush1.bf16.msra.mxu0 %v1687
        %1721 = vmatprep.subr.bf16.mxu0 %v1690
        %1722 = vmatpush1.bf16.msra.mxu0 %v1689
        %1723 = vmatprep.subr.bf16.mxu0 %v1692
        %1724 = vmatpush1.bf16.msra.mxu0 %v1691
        %1725 = vmatprep.subr.bf16.mxu0 %v1694
        %1726 = vmatpush1.bf16.msra.mxu0 %v1693
        %1727 = vmatprep.subr.bf16.mxu0 %v1696
        %1728 = vmatpush1.bf16.msra.mxu0 %v1695
        %1729 = vmatprep.subr.bf16.mxu0 %v1698
        %1730 = vmatpush1.bf16.msra.mxu0 %v1697
        %1731 = vmatprep.subr.bf16.mxu0 0
        %1732 = vmatpush1.bf16.msra.mxu0 0
        %1733 = vmatprep.subr.bf16.mxu0 0
        %1734 = vmatpush1.bf16.msra.mxu0 0
        %1735 = vmatprep.subr.bf16.mxu0 0
        %1736 = vmatpush1.bf16.msra.mxu0 0
        %1737 = vmatprep.subr.bf16.mxu0 0
        %1738 = vmatpush1.bf16.msra.mxu0 0
        %1739 = vmatprep.subr.bf16.mxu0 0
        %1740 = vmatpush1.bf16.msra.mxu0 0
        %1741 = vmatprep.subr.bf16.mxu0 0
        %1742 = vmatpush1.bf16.msra.mxu0 0
        %1743 = vmatprep.subr.bf16.mxu0 0
        %1744 = vmatpush1.bf16.msra.mxu0 0
        %1745 = vmatprep.subr.bf16.mxu0 0
        %1746 = vmatpush1.bf16.msra.mxu0 0
        %1747 = vmatprep.mubr.bf16.mxu0 0
        %1748 = vmatmul.mubr.bf16.gmra.mrb[0].mxu0 %v1620
        %v1749 = vpop.f32.mrb[0].mxu0
        %v1750 = vadd.f32 %v1628, %v1749
        %v1751 = vpop.f32.mrb[0].mxu0
        %v1752 = vadd.f32 %v1632, %v1751
        %v1753 = vpop.f32.mrb[0].mxu0
        %v1754 = vadd.f32 %v1628, %v1753
        %v1755 = vpop.f32.mrb[0].mxu0
        %v1756 = vadd.f32 %v1632, %v1755
        %1757 = vmatprep.mubr.bf16.mxu0 0
        %1758 = vmatmul.mubr.bf16.gmra.mrb[0].mxu0 %v1621
        %v1759 = vpop.f32.mrb[0].mxu0
        %v1760 = vadd.f32 %v1628, %v1759
        %v1761 = vpop.f32.mrb[0].mxu0
        %v1762 = vadd.f32 %v1632, %v1761
        %v1763 = vpop.f32.mrb[0].mxu0
        %v1764 = vadd.f32 %v1628, %v1763
        %v1765 = vpop.f32.mrb[0].mxu0
        %v1766 = vadd.f32 %v1632, %v1765
        %1767 = vmatprep.mubr.bf16.mxu0 0
        %1768 = vmatmul.mubr.bf16.gmra.mrb[0].mxu0 %v1622
        %v1769 = vpop.f32.mrb[0].mxu0
        %v1770 = vadd.f32 %v1628, %v1769
        %v1771 = vpop.f32.mrb[0].mxu0
        %v1772 = vadd.f32 %v1632, %v1771
        %v1773 = vpop.f32.mrb[0].mxu0
        %v1774 = vadd.f32 %v1628, %v1773
        %v1775 = vpop.f32.mrb[0].mxu0
        %v1776 = vadd.f32 %v1632, %v1775
        %1777 = vmatprep.mubr.bf16.mxu0 0
        %1778 = vmatmul.mubr.bf16.gmra.mrb[0].mxu0 %v1623
        %v1779 = vpop.f32.mrb[0].mxu0
        %v1780 = vadd.f32 %v1628, %v1779
        %v1781 = vpop.f32.mrb[0].mxu0
        %v1782 = vadd.f32 %v1632, %v1781
        %v1783 = vpop.f32.mrb[0].mxu0
        %v1784 = vadd.f32 %v1628, %v1783
        %v1785 = vpop.f32.mrb[0].mxu0
        %v1786 = vadd.f32 %v1632, %v1785
        %1787 = vdwg.mxu0
        %v1796 = vcombine.high %v1750, %v1750
        %v1798 = vunpack.c.l.s4 1966171168
        %v1799 = vunpack.c.0.s8 %v1798
        %v1800 = vlaneseq
        %v1801 = vshrl.u32 %v1800, 7
        %v1802 = vsub.s32 %v1799, %v1801
        %v1803 = vrot.slane %v1750, %v1802
        %v1805 = vunpack.c.l.s4 1966171168
        %v1806 = vunpack.c.0.s8 %v1805
        %v1807 = vlaneseq
        %v1808 = vshrl.u32 %v1807, 7
        %v1809 = vsub.s32 %v1806, %v1808
        %v1810 = vrot.slane %v1796, %v1809
        %v1811 = vcombine.high %v1803, %v1803
        %v1812 = vcombine.high %v1810, %v1810
        %v1814 = vunpack.c.l.s4 1966171168
        %v1815 = vunpack.c.0.s8 %v1814
        %v1816 = vlaneseq
        %v1817 = vshrl.u32 %v1816, 7
        %v1818 = vsub.s32 %v1815, %v1817
        %v1819 = vrot.slane %v1803, %v1818
        %v1821 = vunpack.c.l.s4 1966171168
        %v1822 = vunpack.c.0.s8 %v1821
        %v1823 = vlaneseq
        %v1824 = vshrl.u32 %v1823, 7
        %v1825 = vsub.s32 %v1822, %v1824
        %v1826 = vrot.slane %v1810, %v1825
        %v1828 = vunpack.c.l.s4 1966171168
        %v1829 = vunpack.c.0.s8 %v1828
        %v1830 = vlaneseq
        %v1831 = vshrl.u32 %v1830, 7
        %v1832 = vsub.s32 %v1829, %v1831
        %v1833 = vrot.slane %v1811, %v1832
        %v1835 = vunpack.c.l.s4 1966171168
        %v1836 = vunpack.c.0.s8 %v1835
        %v1837 = vlaneseq
        %v1838 = vshrl.u32 %v1837, 7
        %v1839 = vsub.s32 %v1836, %v1838
        %v1840 = vrot.slane %v1812, %v1839
        %v1841 = vcombine.high %v1819, %v1819
        %v1842 = vcombine.high %v1826, %v1826
        %v1843 = vcombine.high %v1833, %v1833
        %v1844 = vcombine.high %v1840, %v1840
        %v1845 = vcombine.high %v1754, %v1754
        %v1847 = vunpack.c.l.s4 1966171168
        %v1848 = vunpack.c.0.s8 %v1847
        %v1849 = vlaneseq
        %v1850 = vshrl.u32 %v1849, 7
        %v1851 = vsub.s32 %v1848, %v1850
        %v1852 = vrot.slane %v1754, %v1851
        %v1854 = vunpack.c.l.s4 1966171168
        %v1855 = vunpack.c.0.s8 %v1854
        %v1856 = vlaneseq
        %v1857 = vshrl.u32 %v1856, 7
        %v1858 = vsub.s32 %v1855, %v1857
        %v1859 = vrot.slane %v1845, %v1858
        %v1860 = vcombine.high %v1852, %v1852
        %v1861 = vcombine.high %v1859, %v1859
        %v1863 = vunpack.c.l.s4 1966171168
        %v1864 = vunpack.c.0.s8 %v1863
        %v1865 = vlaneseq
        %v1866 = vshrl.u32 %v1865, 7
        %v1867 = vsub.s32 %v1864, %v1866
        %v1868 = vrot.slane %v1852, %v1867
        %v1870 = vunpack.c.l.s4 1966171168
        %v1871 = vunpack.c.0.s8 %v1870
        %v1872 = vlaneseq
        %v1873 = vshrl.u32 %v1872, 7
        %v1874 = vsub.s32 %v1871, %v1873
        %v1875 = vrot.slane %v1859, %v1874
        %v1877 = vunpack.c.l.s4 1966171168
        %v1878 = vunpack.c.0.s8 %v1877
        %v1879 = vlaneseq
        %v1880 = vshrl.u32 %v1879, 7
        %v1881 = vsub.s32 %v1878, %v1880
        %v1882 = vrot.slane %v1860, %v1881
        %v1884 = vunpack.c.l.s4 1966171168
        %v1885 = vunpack.c.0.s8 %v1884
        %v1886 = vlaneseq
        %v1887 = vshrl.u32 %v1886, 7
        %v1888 = vsub.s32 %v1885, %v1887
        %v1889 = vrot.slane %v1861, %v1888
        %v1890 = vcombine.high %v1868, %v1868
        %v1891 = vcombine.high %v1875, %v1875
        %v1892 = vcombine.high %v1882, %v1882
        %v1893 = vcombine.high %v1889, %v1889
        %v1894 = vcombine.high %v1760, %v1760
        %v1896 = vunpack.c.l.s4 1966171168
        %v1897 = vunpack.c.0.s8 %v1896
        %v1898 = vlaneseq
        %v1899 = vshrl.u32 %v1898, 7
        %v1900 = vsub.s32 %v1897, %v1899
        %v1901 = vrot.slane %v1760, %v1900
        %v1903 = vunpack.c.l.s4 1966171168
        %v1904 = vunpack.c.0.s8 %v1903
        %v1905 = vlaneseq
        %v1906 = vshrl.u32 %v1905, 7
        %v1907 = vsub.s32 %v1904, %v1906
        %v1908 = vrot.slane %v1894, %v1907
        %v1909 = vcombine.high %v1901, %v1901
        %v1910 = vcombine.high %v1908, %v1908
        %v1912 = vunpack.c.l.s4 1966171168
        %v1913 = vunpack.c.0.s8 %v1912
        %v1914 = vlaneseq
        %v1915 = vshrl.u32 %v1914, 7
        %v1916 = vsub.s32 %v1913, %v1915
        %v1917 = vrot.slane %v1901, %v1916
        %v1919 = vunpack.c.l.s4 1966171168
        %v1920 = vunpack.c.0.s8 %v1919
        %v1921 = vlaneseq
        %v1922 = vshrl.u32 %v1921, 7
        %v1923 = vsub.s32 %v1920, %v1922
        %v1924 = vrot.slane %v1908, %v1923
        %v1926 = vunpack.c.l.s4 1966171168
        %v1927 = vunpack.c.0.s8 %v1926
        %v1928 = vlaneseq
        %v1929 = vshrl.u32 %v1928, 7
        %v1930 = vsub.s32 %v1927, %v1929
        %v1931 = vrot.slane %v1909, %v1930
        %v1933 = vunpack.c.l.s4 1966171168
        %v1934 = vunpack.c.0.s8 %v1933
        %v1935 = vlaneseq
        %v1936 = vshrl.u32 %v1935, 7
        %v1937 = vsub.s32 %v1934, %v1936
        %v1938 = vrot.slane %v1910, %v1937
        %v1939 = vcombine.high %v1917, %v1917
        %v1940 = vcombine.high %v1924, %v1924
        %v1941 = vcombine.high %v1931, %v1931
        %v1942 = vcombine.high %v1938, %v1938
        %v1943 = vcombine.high %v1764, %v1764
        %v1945 = vunpack.c.l.s4 1966171168
        %v1946 = vunpack.c.0.s8 %v1945
        %v1947 = vlaneseq
        %v1948 = vshrl.u32 %v1947, 7
        %v1949 = vsub.s32 %v1946, %v1948
        %v1950 = vrot.slane %v1764, %v1949
        %v1952 = vunpack.c.l.s4 1966171168
        %v1953 = vunpack.c.0.s8 %v1952
        %v1954 = vlaneseq
        %v1955 = vshrl.u32 %v1954, 7
        %v1956 = vsub.s32 %v1953, %v1955
        %v1957 = vrot.slane %v1943, %v1956
        %v1958 = vcombine.high %v1950, %v1950
        %v1959 = vcombine.high %v1957, %v1957
        %v1961 = vunpack.c.l.s4 1966171168
        %v1962 = vunpack.c.0.s8 %v1961
        %v1963 = vlaneseq
        %v1964 = vshrl.u32 %v1963, 7
        %v1965 = vsub.s32 %v1962, %v1964
        %v1966 = vrot.slane %v1950, %v1965
        %v1968 = vunpack.c.l.s4 1966171168
        %v1969 = vunpack.c.0.s8 %v1968
        %v1970 = vlaneseq
        %v1971 = vshrl.u32 %v1970, 7
        %v1972 = vsub.s32 %v1969, %v1971
        %v1973 = vrot.slane %v1957, %v1972
        %v1975 = vunpack.c.l.s4 1966171168
        %v1976 = vunpack.c.0.s8 %v1975
        %v1977 = vlaneseq
        %v1978 = vshrl.u32 %v1977, 7
        %v1979 = vsub.s32 %v1976, %v1978
        %v1980 = vrot.slane %v1958, %v1979
        %v1982 = vunpack.c.l.s4 1966171168
        %v1983 = vunpack.c.0.s8 %v1982
        %v1984 = vlaneseq
        %v1985 = vshrl.u32 %v1984, 7
        %v1986 = vsub.s32 %v1983, %v1985
        %v1987 = vrot.slane %v1959, %v1986
        %v1988 = vcombine.high %v1966, %v1966
        %v1989 = vcombine.high %v1973, %v1973
        %v1990 = vcombine.high %v1980, %v1980
        %v1991 = vcombine.high %v1987, %v1987
        %v1992 = vcombine.high %v1770, %v1770
        %v1994 = vunpack.c.l.s4 1966171168
        %v1995 = vunpack.c.0.s8 %v1994
        %v1996 = vlaneseq
        %v1997 = vshrl.u32 %v1996, 7
        %v1998 = vsub.s32 %v1995, %v1997
        %v1999 = vrot.slane %v1770, %v1998
        %v2001 = vunpack.c.l.s4 1966171168
        %v2002 = vunpack.c.0.s8 %v2001
        %v2003 = vlaneseq
        %v2004 = vshrl.u32 %v2003, 7
        %v2005 = vsub.s32 %v2002, %v2004
        %v2006 = vrot.slane %v1992, %v2005
        %v2007 = vcombine.high %v1999, %v1999
        %v2008 = vcombine.high %v2006, %v2006
        %v2010 = vunpack.c.l.s4 1966171168
        %v2011 = vunpack.c.0.s8 %v2010
        %v2012 = vlaneseq
        %v2013 = vshrl.u32 %v2012, 7
        %v2014 = vsub.s32 %v2011, %v2013
        %v2015 = vrot.slane %v1999, %v2014
        %v2017 = vunpack.c.l.s4 1966171168
        %v2018 = vunpack.c.0.s8 %v2017
        %v2019 = vlaneseq
        %v2020 = vshrl.u32 %v2019, 7
        %v2021 = vsub.s32 %v2018, %v2020
        %v2022 = vrot.slane %v2006, %v2021
        %v2024 = vunpack.c.l.s4 1966171168
        %v2025 = vunpack.c.0.s8 %v2024
        %v2026 = vlaneseq
        %v2027 = vshrl.u32 %v2026, 7
        %v2028 = vsub.s32 %v2025, %v2027
        %v2029 = vrot.slane %v2007, %v2028
        %v2031 = vunpack.c.l.s4 1966171168
        %v2032 = vunpack.c.0.s8 %v2031
        %v2033 = vlaneseq
        %v2034 = vshrl.u32 %v2033, 7
        %v2035 = vsub.s32 %v2032, %v2034
        %v2036 = vrot.slane %v2008, %v2035
        %v2037 = vcombine.high %v2015, %v2015
        %v2038 = vcombine.high %v2022, %v2022
        %v2039 = vcombine.high %v2029, %v2029
        %v2040 = vcombine.high %v2036, %v2036
        %v2041 = vcombine.high %v1774, %v1774
        %v2043 = vunpack.c.l.s4 1966171168
        %v2044 = vunpack.c.0.s8 %v2043
        %v2045 = vlaneseq
        %v2046 = vshrl.u32 %v2045, 7
        %v2047 = vsub.s32 %v2044, %v2046
        %v2048 = vrot.slane %v1774, %v2047
        %v2050 = vunpack.c.l.s4 1966171168
        %v2051 = vunpack.c.0.s8 %v2050
        %v2052 = vlaneseq
        %v2053 = vshrl.u32 %v2052, 7
        %v2054 = vsub.s32 %v2051, %v2053
        %v2055 = vrot.slane %v2041, %v2054
        %v2056 = vcombine.high %v2048, %v2048
        %v2057 = vcombine.high %v2055, %v2055
        %v2059 = vunpack.c.l.s4 1966171168
        %v2060 = vunpack.c.0.s8 %v2059
        %v2061 = vlaneseq
        %v2062 = vshrl.u32 %v2061, 7
        %v2063 = vsub.s32 %v2060, %v2062
        %v2064 = vrot.slane %v2048, %v2063
        %v2066 = vunpack.c.l.s4 1966171168
        %v2067 = vunpack.c.0.s8 %v2066
        %v2068 = vlaneseq
        %v2069 = vshrl.u32 %v2068, 7
        %v2070 = vsub.s32 %v2067, %v2069
        %v2071 = vrot.slane %v2055, %v2070
        %v2073 = vunpack.c.l.s4 1966171168
        %v2074 = vunpack.c.0.s8 %v2073
        %v2075 = vlaneseq
        %v2076 = vshrl.u32 %v2075, 7
        %v2077 = vsub.s32 %v2074, %v2076
        %v2078 = vrot.slane %v2056, %v2077
        %v2080 = vunpack.c.l.s4 1966171168
        %v2081 = vunpack.c.0.s8 %v2080
        %v2082 = vlaneseq
        %v2083 = vshrl.u32 %v2082, 7
        %v2084 = vsub.s32 %v2081, %v2083
        %v2085 = vrot.slane %v2057, %v2084
        %v2086 = vcombine.high %v2064, %v2064
        %v2087 = vcombine.high %v2071, %v2071
        %v2088 = vcombine.high %v2078, %v2078
        %v2089 = vcombine.high %v2085, %v2085
        %v2090 = vcombine.high %v1780, %v1780
        %v2092 = vunpack.c.l.s4 1966171168
        %v2093 = vunpack.c.0.s8 %v2092
        %v2094 = vlaneseq
        %v2095 = vshrl.u32 %v2094, 7
        %v2096 = vsub.s32 %v2093, %v2095
        %v2097 = vrot.slane %v1780, %v2096
        %v2099 = vunpack.c.l.s4 1966171168
        %v2100 = vunpack.c.0.s8 %v2099
        %v2101 = vlaneseq
        %v2102 = vshrl.u32 %v2101, 7
        %v2103 = vsub.s32 %v2100, %v2102
        %v2104 = vrot.slane %v2090, %v2103
        %v2105 = vcombine.high %v2097, %v2097
        %v2106 = vcombine.high %v2104, %v2104
        %v2108 = vunpack.c.l.s4 1966171168
        %v2109 = vunpack.c.0.s8 %v2108
        %v2110 = vlaneseq
        %v2111 = vshrl.u32 %v2110, 7
        %v2112 = vsub.s32 %v2109, %v2111
        %v2113 = vrot.slane %v2097, %v2112
        %v2115 = vunpack.c.l.s4 1966171168
        %v2116 = vunpack.c.0.s8 %v2115
        %v2117 = vlaneseq
        %v2118 = vshrl.u32 %v2117, 7
        %v2119 = vsub.s32 %v2116, %v2118
        %v2120 = vrot.slane %v2104, %v2119
        %v2122 = vunpack.c.l.s4 1966171168
        %v2123 = vunpack.c.0.s8 %v2122
        %v2124 = vlaneseq
        %v2125 = vshrl.u32 %v2124, 7
        %v2126 = vsub.s32 %v2123, %v2125
        %v2127 = vrot.slane %v2105, %v2126
        %v2129 = vunpack.c.l.s4 1966171168
        %v2130 = vunpack.c.0.s8 %v2129
        %v2131 = vlaneseq
        %v2132 = vshrl.u32 %v2131, 7
        %v2133 = vsub.s32 %v2130, %v2132
        %v2134 = vrot.slane %v2106, %v2133
        %v2135 = vcombine.high %v2113, %v2113
        %v2136 = vcombine.high %v2120, %v2120
        %v2137 = vcombine.high %v2127, %v2127
        %v2138 = vcombine.high %v2134, %v2134
        %v2140 = vunpack.c.l.s4 1966171168
        %v2141 = vunpack.c.0.s8 %v2140
        %v2142 = vlaneseq
        %v2143 = vshrl.u32 %v2142, 7
        %v2144 = vsub.s32 %v2141, %v2143
        %v2145 = vrot.slane %v1784, %v2144
        %v2146 = vcombine.high %v2145, %v2145
        %v2148 = vunpack.c.l.s4 1966171168
        %v2149 = vunpack.c.0.s8 %v2148
        %v2150 = vlaneseq
        %v2151 = vshrl.u32 %v2150, 7
        %v2152 = vsub.s32 %v2149, %v2151
        %v2153 = vrot.slane %v2145, %v2152
        %v2155 = vunpack.c.l.s4 1966171168
        %v2156 = vunpack.c.0.s8 %v2155
        %v2157 = vlaneseq
        %v2158 = vshrl.u32 %v2157, 7
        %v2159 = vsub.s32 %v2156, %v2158
        %v2160 = vrot.slane %v2146, %v2159
        %v2161 = vcombine.high %v2153, %v2153
        %v2162 = vcombine.high %v2160, %v2160
        %v2163 = vcombine.low %v1819, %v1833
        %v2164 = vcombine.low %v1841, %v1843
        %v2165 = vcombine.low %v1826, %v1840
        %v2166 = vcombine.low %v1842, %v1844
        %v2168 = vunpack.c.l.s4 1966171168
        %v2169 = vunpack.c.0.s8 %v2168
        %v2170 = vlaneseq
        %v2171 = vshrl.u32 %v2170, 7
        %v2172 = vsub.s32 %v2169, %v2171
        %v2173 = vrot.slane %v2163, %v2172
        %v2175 = vunpack.c.l.s4 1966171168
        %v2176 = vunpack.c.0.s8 %v2175
        %v2177 = vlaneseq
        %v2178 = vshrl.u32 %v2177, 7
        %v2179 = vsub.s32 %v2176, %v2178
        %v2180 = vrot.slane %v2164, %v2179
        %v2182 = vunpack.c.l.s4 1966171168
        %v2183 = vunpack.c.0.s8 %v2182
        %v2184 = vlaneseq
        %v2185 = vshrl.u32 %v2184, 7
        %v2186 = vsub.s32 %v2183, %v2185
        %v2187 = vrot.slane %v2165, %v2186
        %v2189 = vunpack.c.l.s4 1966171168
        %v2190 = vunpack.c.0.s8 %v2189
        %v2191 = vlaneseq
        %v2192 = vshrl.u32 %v2191, 7
        %v2193 = vsub.s32 %v2190, %v2192
        %v2194 = vrot.slane %v2166, %v2193
        %v2195 = vcombine.low %v2173, %v2180
        %v2196 = vcombine.low %v2187, %v2194
        %v2198 = vunpack.c.l.s4 1966171168
        %v2199 = vunpack.c.0.s8 %v2198
        %v2200 = vlaneseq
        %v2201 = vshrl.u32 %v2200, 7
        %v2202 = vsub.s32 %v2199, %v2201
        %v2203 = vrot.slane %v2195, %v2202
        %v2205 = vunpack.c.l.s4 1966171168
        %v2206 = vunpack.c.0.s8 %v2205
        %v2207 = vlaneseq
        %v2208 = vshrl.u32 %v2207, 7
        %v2209 = vsub.s32 %v2206, %v2208
        %v2210 = vrot.slane %v2196, %v2209
        %v2211 = vcombine.low %v2203, %v2210
        %v2212 = vcombine.low %v1868, %v1882
        %v2213 = vcombine.low %v1890, %v1892
        %v2214 = vcombine.low %v1875, %v1889
        %v2216 = vunpack.c.l.s4 1966171168
        %v2217 = vunpack.c.0.s8 %v2216
        %v2218 = vlaneseq
        %v2219 = vshrl.u32 %v2218, 7
        %v2220 = vsub.s32 %v2217, %v2219
        %v2221 = vrot.slane %v2212, %v2220
        %v2223 = vunpack.c.l.s4 1966171168
        %v2224 = vunpack.c.0.s8 %v2223
        %v2225 = vlaneseq
        %v2226 = vshrl.u32 %v2225, 7
        %v2227 = vsub.s32 %v2224, %v2226
        %v2228 = vrot.slane %v2213, %v2227
        %v2230 = vunpack.c.l.s4 1966171168
        %v2231 = vunpack.c.0.s8 %v2230
        %v2232 = vlaneseq
        %v2233 = vshrl.u32 %v2232, 7
        %v2234 = vsub.s32 %v2231, %v2233
        %v2235 = vrot.slane %v2214, %v2234
        %v2237 = vunpack.c.l.s4 1966171168
        %v2238 = vunpack.c.0.s8 %v2237
        %v2239 = vlaneseq
        %v2240 = vshrl.u32 %v2239, 7
        %v2241 = vsub.s32 %v2238, %v2240
        %v2242 = vrot.slane %v1891, %v2241
        %v2243 = vcombine.low %v2221, %v2228
        %v2244 = vcombine.low %v2235, %v2242
        %v2246 = vunpack.c.l.s4 1966171168
        %v2247 = vunpack.c.0.s8 %v2246
        %v2248 = vlaneseq
        %v2249 = vshrl.u32 %v2248, 7
        %v2250 = vsub.s32 %v2247, %v2249
        %v2251 = vrot.slane %v2243, %v2250
        %v2253 = vunpack.c.l.s4 1966171168
        %v2254 = vunpack.c.0.s8 %v2253
        %v2255 = vlaneseq
        %v2256 = vshrl.u32 %v2255, 7
        %v2257 = vsub.s32 %v2254, %v2256
        %v2258 = vrot.slane %v2244, %v2257
        %v2259 = vcombine.low %v2251, %v2258
        %v2260 = vcombine.low %v1893, %v1917
        %v2261 = vcombine.low %v1931, %v1939
        %v2262 = vcombine.low %v1941, %v1924
        %v2263 = vcombine.low %v1938, %v1940
        %v2265 = vunpack.c.l.s4 1966171168
        %v2266 = vunpack.c.0.s8 %v2265
        %v2267 = vlaneseq
        %v2268 = vshrl.u32 %v2267, 7
        %v2269 = vsub.s32 %v2266, %v2268
        %v2270 = vrot.slane %v2260, %v2269
        %v2272 = vunpack.c.l.s4 1966171168
        %v2273 = vunpack.c.0.s8 %v2272
        %v2274 = vlaneseq
        %v2275 = vshrl.u32 %v2274, 7
        %v2276 = vsub.s32 %v2273, %v2275
        %v2277 = vrot.slane %v2261, %v2276
        %v2279 = vunpack.c.l.s4 1966171168
        %v2280 = vunpack.c.0.s8 %v2279
        %v2281 = vlaneseq
        %v2282 = vshrl.u32 %v2281, 7
        %v2283 = vsub.s32 %v2280, %v2282
        %v2284 = vrot.slane %v2262, %v2283
        %v2286 = vunpack.c.l.s4 1966171168
        %v2287 = vunpack.c.0.s8 %v2286
        %v2288 = vlaneseq
        %v2289 = vshrl.u32 %v2288, 7
        %v2290 = vsub.s32 %v2287, %v2289
        %v2291 = vrot.slane %v2263, %v2290
        %v2292 = vcombine.low %v2270, %v2277
        %v2293 = vcombine.low %v2284, %v2291
        %v2295 = vunpack.c.l.s4 1966171168
        %v2296 = vunpack.c.0.s8 %v2295
        %v2297 = vlaneseq
        %v2298 = vshrl.u32 %v2297, 7
        %v2299 = vsub.s32 %v2296, %v2298
        %v2300 = vrot.slane %v2292, %v2299
        %v2302 = vunpack.c.l.s4 1966171168
        %v2303 = vunpack.c.0.s8 %v2302
        %v2304 = vlaneseq
        %v2305 = vshrl.u32 %v2304, 7
        %v2306 = vsub.s32 %v2303, %v2305
        %v2307 = vrot.slane %v2293, %v2306
        %v2308 = vcombine.low %v2300, %v2307
        %v2309 = vcombine.low %v1942, %v1966
        %v2310 = vcombine.low %v1980, %v1988
        %v2311 = vcombine.low %v1990, %v1973
        %v2313 = vunpack.c.l.s4 1966171168
        %v2314 = vunpack.c.0.s8 %v2313
        %v2315 = vlaneseq
        %v2316 = vshrl.u32 %v2315, 7
        %v2317 = vsub.s32 %v2314, %v2316
        %v2318 = vrot.slane %v2309, %v2317
        %v2320 = vunpack.c.l.s4 1966171168
        %v2321 = vunpack.c.0.s8 %v2320
        %v2322 = vlaneseq
        %v2323 = vshrl.u32 %v2322, 7
        %v2324 = vsub.s32 %v2321, %v2323
        %v2325 = vrot.slane %v2310, %v2324
        %v2327 = vunpack.c.l.s4 1966171168
        %v2328 = vunpack.c.0.s8 %v2327
        %v2329 = vlaneseq
        %v2330 = vshrl.u32 %v2329, 7
        %v2331 = vsub.s32 %v2328, %v2330
        %v2332 = vrot.slane %v2311, %v2331
        %v2334 = vunpack.c.l.s4 1966171168
        %v2335 = vunpack.c.0.s8 %v2334
        %v2336 = vlaneseq
        %v2337 = vshrl.u32 %v2336, 7
        %v2338 = vsub.s32 %v2335, %v2337
        %v2339 = vrot.slane %v1987, %v2338
        %v2340 = vcombine.low %v2318, %v2325
        %v2341 = vcombine.low %v2332, %v2339
        %v2343 = vunpack.c.l.s4 1966171168
        %v2344 = vunpack.c.0.s8 %v2343
        %v2345 = vlaneseq
        %v2346 = vshrl.u32 %v2345, 7
        %v2347 = vsub.s32 %v2344, %v2346
        %v2348 = vrot.slane %v2340, %v2347
        %v2350 = vunpack.c.l.s4 1966171168
        %v2351 = vunpack.c.0.s8 %v2350
        %v2352 = vlaneseq
        %v2353 = vshrl.u32 %v2352, 7
        %v2354 = vsub.s32 %v2351, %v2353
        %v2355 = vrot.slane %v2341, %v2354
        %v2356 = vcombine.low %v2348, %v2355
        %v2357 = vcombine.low %v1989, %v1991
        %v2358 = vcombine.low %v2015, %v2029
        %v2359 = vcombine.low %v2037, %v2039
        %v2360 = vcombine.low %v2022, %v2036
        %v2362 = vunpack.c.l.s4 1966171168
        %v2363 = vunpack.c.0.s8 %v2362
        %v2364 = vlaneseq
        %v2365 = vshrl.u32 %v2364, 7
        %v2366 = vsub.s32 %v2363, %v2365
        %v2367 = vrot.slane %v2357, %v2366
        %v2369 = vunpack.c.l.s4 1966171168
        %v2370 = vunpack.c.0.s8 %v2369
        %v2371 = vlaneseq
        %v2372 = vshrl.u32 %v2371, 7
        %v2373 = vsub.s32 %v2370, %v2372
        %v2374 = vrot.slane %v2358, %v2373
        %v2376 = vunpack.c.l.s4 1966171168
        %v2377 = vunpack.c.0.s8 %v2376
        %v2378 = vlaneseq
        %v2379 = vshrl.u32 %v2378, 7
        %v2380 = vsub.s32 %v2377, %v2379
        %v2381 = vrot.slane %v2359, %v2380
        %v2383 = vunpack.c.l.s4 1966171168
        %v2384 = vunpack.c.0.s8 %v2383
        %v2385 = vlaneseq
        %v2386 = vshrl.u32 %v2385, 7
        %v2387 = vsub.s32 %v2384, %v2386
        %v2388 = vrot.slane %v2360, %v2387
        %v2389 = vcombine.low %v2367, %v2374
        %v2390 = vcombine.low %v2381, %v2388
        %v2392 = vunpack.c.l.s4 1966171168
        %v2393 = vunpack.c.0.s8 %v2392
        %v2394 = vlaneseq
        %v2395 = vshrl.u32 %v2394, 7
        %v2396 = vsub.s32 %v2393, %v2395
        %v2397 = vrot.slane %v2389, %v2396
        %v2399 = vunpack.c.l.s4 1966171168
        %v2400 = vunpack.c.0.s8 %v2399
        %v2401 = vlaneseq
        %v2402 = vshrl.u32 %v2401, 7
        %v2403 = vsub.s32 %v2400, %v2402
        %v2404 = vrot.slane %v2390, %v2403
        %v2405 = vcombine.low %v2397, %v2404
        %v2406 = vcombine.low %v2038, %v2040
        %v2407 = vcombine.low %v2064, %v2078
        %v2408 = vcombine.low %v2086, %v2088
        %v2410 = vunpack.c.l.s4 1966171168
        %v2411 = vunpack.c.0.s8 %v2410
        %v2412 = vlaneseq
        %v2413 = vshrl.u32 %v2412, 7
        %v2414 = vsub.s32 %v2411, %v2413
        %v2415 = vrot.slane %v2406, %v2414
        %v2417 = vunpack.c.l.s4 1966171168
        %v2418 = vunpack.c.0.s8 %v2417
        %v2419 = vlaneseq
        %v2420 = vshrl.u32 %v2419, 7
        %v2421 = vsub.s32 %v2418, %v2420
        %v2422 = vrot.slane %v2407, %v2421
        %v2424 = vunpack.c.l.s4 1966171168
        %v2425 = vunpack.c.0.s8 %v2424
        %v2426 = vlaneseq
        %v2427 = vshrl.u32 %v2426, 7
        %v2428 = vsub.s32 %v2425, %v2427
        %v2429 = vrot.slane %v2408, %v2428
        %v2431 = vunpack.c.l.s4 1966171168
        %v2432 = vunpack.c.0.s8 %v2431
        %v2433 = vlaneseq
        %v2434 = vshrl.u32 %v2433, 7
        %v2435 = vsub.s32 %v2432, %v2434
        %v2436 = vrot.slane %v2071, %v2435
        %v2437 = vcombine.low %v2415, %v2422
        %v2438 = vcombine.low %v2429, %v2436
        %v2440 = vunpack.c.l.s4 1966171168
        %v2441 = vunpack.c.0.s8 %v2440
        %v2442 = vlaneseq
        %v2443 = vshrl.u32 %v2442, 7
        %v2444 = vsub.s32 %v2441, %v2443
        %v2445 = vrot.slane %v2437, %v2444
        %v2447 = vunpack.c.l.s4 1966171168
        %v2448 = vunpack.c.0.s8 %v2447
        %v2449 = vlaneseq
        %v2450 = vshrl.u32 %v2449, 7
        %v2451 = vsub.s32 %v2448, %v2450
        %v2452 = vrot.slane %v2438, %v2451
        %v2453 = vcombine.low %v2445, %v2452
        %v2454 = vcombine.low %v2085, %v2087
        %v2455 = vcombine.low %v2089, %v2113
        %v2456 = vcombine.low %v2127, %v2135
        %v2457 = vcombine.low %v2137, %v2120
        %v2459 = vunpack.c.l.s4 1966171168
        %v2460 = vunpack.c.0.s8 %v2459
        %v2461 = vlaneseq
        %v2462 = vshrl.u32 %v2461, 7
        %v2463 = vsub.s32 %v2460, %v2462
        %v2464 = vrot.slane %v2454, %v2463
        %v2466 = vunpack.c.l.s4 1966171168
        %v2467 = vunpack.c.0.s8 %v2466
        %v2468 = vlaneseq
        %v2469 = vshrl.u32 %v2468, 7
        %v2470 = vsub.s32 %v2467, %v2469
        %v2471 = vrot.slane %v2455, %v2470
        %v2473 = vunpack.c.l.s4 1966171168
        %v2474 = vunpack.c.0.s8 %v2473
        %v2475 = vlaneseq
        %v2476 = vshrl.u32 %v2475, 7
        %v2477 = vsub.s32 %v2474, %v2476
        %v2478 = vrot.slane %v2456, %v2477
        %v2480 = vunpack.c.l.s4 1966171168
        %v2481 = vunpack.c.0.s8 %v2480
        %v2482 = vlaneseq
        %v2483 = vshrl.u32 %v2482, 7
        %v2484 = vsub.s32 %v2481, %v2483
        %v2485 = vrot.slane %v2457, %v2484
        %v2486 = vcombine.low %v2464, %v2471
        %v2487 = vcombine.low %v2478, %v2485
        %v2489 = vunpack.c.l.s4 1966171168
        %v2490 = vunpack.c.0.s8 %v2489
        %v2491 = vlaneseq
        %v2492 = vshrl.u32 %v2491, 7
        %v2493 = vsub.s32 %v2490, %v2492
        %v2494 = vrot.slane %v2486, %v2493
        %v2496 = vunpack.c.l.s4 1966171168
        %v2497 = vunpack.c.0.s8 %v2496
        %v2498 = vlaneseq
        %v2499 = vshrl.u32 %v2498, 7
        %v2500 = vsub.s32 %v2497, %v2499
        %v2501 = vrot.slane %v2487, %v2500
        %v2502 = vcombine.low %v2494, %v2501
        %v2503 = vcombine.low %v2134, %v2136
        %v2504 = vcombine.low %v2138, %v2153
        %v2505 = vcombine.low %v2160, %v2161
        %v2507 = vunpack.c.l.s4 1966171168
        %v2508 = vunpack.c.0.s8 %v2507
        %v2509 = vlaneseq
        %v2510 = vshrl.u32 %v2509, 7
        %v2511 = vsub.s32 %v2508, %v2510
        %v2512 = vrot.slane %v2503, %v2511
        %v2514 = vunpack.c.l.s4 1966171168
        %v2515 = vunpack.c.0.s8 %v2514
        %v2516 = vlaneseq
        %v2517 = vshrl.u32 %v2516, 7
        %v2518 = vsub.s32 %v2515, %v2517
        %v2519 = vrot.slane %v2504, %v2518
        %v2521 = vunpack.c.l.s4 1966171168
        %v2522 = vunpack.c.0.s8 %v2521
        %v2523 = vlaneseq
        %v2524 = vshrl.u32 %v2523, 7
        %v2525 = vsub.s32 %v2522, %v2524
        %v2526 = vrot.slane %v2505, %v2525
        %v2528 = vunpack.c.l.s4 1966171168
        %v2529 = vunpack.c.0.s8 %v2528
        %v2530 = vlaneseq
        %v2531 = vshrl.u32 %v2530, 7
        %v2532 = vsub.s32 %v2529, %v2531
        %v2533 = vrot.slane %v2162, %v2532
        %v2534 = vcombine.low %v2512, %v2519
        %v2535 = vcombine.low %v2526, %v2533
        %v2537 = vunpack.c.l.s4 1966171168
        %v2538 = vunpack.c.0.s8 %v2537
        %v2539 = vlaneseq
        %v2540 = vshrl.u32 %v2539, 7
        %v2541 = vsub.s32 %v2538, %v2540
        %v2542 = vrot.slane %v2534, %v2541
        %v2544 = vunpack.c.l.s4 1966171168
        %v2545 = vunpack.c.0.s8 %v2544
        %v2546 = vlaneseq
        %v2547 = vshrl.u32 %v2546, 7
        %v2548 = vsub.s32 %v2545, %v2547
        %v2549 = vrot.slane %v2535, %v2548
        %v2550 = vcombine.low %v2542, %v2549
        %2559 = vst [vmem:[%s461] sm:$0xff] %v2211
        %2560 = vst [vmem:[%s461 + $0x8] sm:$0x7f] %v2259
        %2561 = vst [vmem:[%s461 + $0x10] sm:$0xff] %v2308
        %2562 = vst [vmem:[%s461 + $0x18] sm:$0x7f] %v2356
        %2563 = vst [vmem:[%s461 + $0x20] sm:$0xff] %v2405
        %2564 = vst [vmem:[%s461 + $0x28] sm:$0x7f] %v2453
        %2565 = vst [vmem:[%s461 + $0x30] sm:$0xff] %v2502
        %2566 = vst [vmem:[%s461 + $0x38] sm:$0x7f] %v2550
        %v2575 = vcombine.high %v1752, %v1752
        %v2577 = vunpack.c.l.s4 1966171168
        %v2578 = vunpack.c.0.s8 %v2577
        %v2579 = vlaneseq
        %v2580 = vshrl.u32 %v2579, 7
        %v2581 = vsub.s32 %v2578, %v2580
        %v2582 = vrot.slane %v1752, %v2581
        %v2584 = vunpack.c.l.s4 1966171168
        %v2585 = vunpack.c.0.s8 %v2584
        %v2586 = vlaneseq
        %v2587 = vshrl.u32 %v2586, 7
        %v2588 = vsub.s32 %v2585, %v2587
        %v2589 = vrot.slane %v2575, %v2588
        %v2590 = vcombine.high %v2582, %v2582
        %v2591 = vcombine.high %v2589, %v2589
        %v2593 = vunpack.c.l.s4 1966171168
        %v2594 = vunpack.c.0.s8 %v2593
        %v2595 = vlaneseq
        %v2596 = vshrl.u32 %v2595, 7
        %v2597 = vsub.s32 %v2594, %v2596
        %v2598 = vrot.slane %v2582, %v2597
        %v2600 = vunpack.c.l.s4 1966171168
        %v2601 = vunpack.c.0.s8 %v2600
        %v2602 = vlaneseq
        %v2603 = vshrl.u32 %v2602, 7
        %v2604 = vsub.s32 %v2601, %v2603
        %v2605 = vrot.slane %v2589, %v2604
        %v2607 = vunpack.c.l.s4 1966171168
        %v2608 = vunpack.c.0.s8 %v2607
        %v2609 = vlaneseq
        %v2610 = vshrl.u32 %v2609, 7
        %v2611 = vsub.s32 %v2608, %v2610
        %v2612 = vrot.slane %v2590, %v2611
        %v2614 = vunpack.c.l.s4 1966171168
        %v2615 = vunpack.c.0.s8 %v2614
        %v2616 = vlaneseq
        %v2617 = vshrl.u32 %v2616, 7
        %v2618 = vsub.s32 %v2615, %v2617
        %v2619 = vrot.slane %v2591, %v2618
        %v2620 = vcombine.high %v2598, %v2598
        %v2621 = vcombine.high %v2605, %v2605
        %v2622 = vcombine.high %v2612, %v2612
        %v2623 = vcombine.high %v2619, %v2619
        %v2624 = vcombine.high %v1756, %v1756
        %v2626 = vunpack.c.l.s4 1966171168
        %v2627 = vunpack.c.0.s8 %v2626
        %v2628 = vlaneseq
        %v2629 = vshrl.u32 %v2628, 7
        %v2630 = vsub.s32 %v2627, %v2629
        %v2631 = vrot.slane %v1756, %v2630
        %v2633 = vunpack.c.l.s4 1966171168
        %v2634 = vunpack.c.0.s8 %v2633
        %v2635 = vlaneseq
        %v2636 = vshrl.u32 %v2635, 7
        %v2637 = vsub.s32 %v2634, %v2636
        %v2638 = vrot.slane %v2624, %v2637
        %v2639 = vcombine.high %v2631, %v2631
        %v2640 = vcombine.high %v2638, %v2638
        %v2642 = vunpack.c.l.s4 1966171168
        %v2643 = vunpack.c.0.s8 %v2642
        %v2644 = vlaneseq
        %v2645 = vshrl.u32 %v2644, 7
        %v2646 = vsub.s32 %v2643, %v2645
        %v2647 = vrot.slane %v2631, %v2646
        %v2649 = vunpack.c.l.s4 1966171168
        %v2650 = vunpack.c.0.s8 %v2649
        %v2651 = vlaneseq
        %v2652 = vshrl.u32 %v2651, 7
        %v2653 = vsub.s32 %v2650, %v2652
        %v2654 = vrot.slane %v2638, %v2653
        %v2656 = vunpack.c.l.s4 1966171168
        %v2657 = vunpack.c.0.s8 %v2656
        %v2658 = vlaneseq
        %v2659 = vshrl.u32 %v2658, 7
        %v2660 = vsub.s32 %v2657, %v2659
        %v2661 = vrot.slane %v2639, %v2660
        %v2663 = vunpack.c.l.s4 1966171168
        %v2664 = vunpack.c.0.s8 %v2663
        %v2665 = vlaneseq
        %v2666 = vshrl.u32 %v2665, 7
        %v2667 = vsub.s32 %v2664, %v2666
        %v2668 = vrot.slane %v2640, %v2667
        %v2669 = vcombine.high %v2647, %v2647
        %v2670 = vcombine.high %v2654, %v2654
        %v2671 = vcombine.high %v2661, %v2661
        %v2672 = vcombine.high %v2668, %v2668
        %v2673 = vcombine.high %v1762, %v1762
        %v2675 = vunpack.c.l.s4 1966171168
        %v2676 = vunpack.c.0.s8 %v2675
        %v2677 = vlaneseq
        %v2678 = vshrl.u32 %v2677, 7
        %v2679 = vsub.s32 %v2676, %v2678
        %v2680 = vrot.slane %v1762, %v2679
        %v2682 = vunpack.c.l.s4 1966171168
        %v2683 = vunpack.c.0.s8 %v2682
        %v2684 = vlaneseq
        %v2685 = vshrl.u32 %v2684, 7
        %v2686 = vsub.s32 %v2683, %v2685
        %v2687 = vrot.slane %v2673, %v2686
        %v2688 = vcombine.high %v2680, %v2680
        %v2689 = vcombine.high %v2687, %v2687
        %v2691 = vunpack.c.l.s4 1966171168
        %v2692 = vunpack.c.0.s8 %v2691
        %v2693 = vlaneseq
        %v2694 = vshrl.u32 %v2693, 7
        %v2695 = vsub.s32 %v2692, %v2694
        %v2696 = vrot.slane %v2680, %v2695
        %v2698 = vunpack.c.l.s4 1966171168
        %v2699 = vunpack.c.0.s8 %v2698
        %v2700 = vlaneseq
        %v2701 = vshrl.u32 %v2700, 7
        %v2702 = vsub.s32 %v2699, %v2701
        %v2703 = vrot.slane %v2687, %v2702
        %v2705 = vunpack.c.l.s4 1966171168
        %v2706 = vunpack.c.0.s8 %v2705
        %v2707 = vlaneseq
        %v2708 = vshrl.u32 %v2707, 7
        %v2709 = vsub.s32 %v2706, %v2708
        %v2710 = vrot.slane %v2688, %v2709
        %v2712 = vunpack.c.l.s4 1966171168
        %v2713 = vunpack.c.0.s8 %v2712
        %v2714 = vlaneseq
        %v2715 = vshrl.u32 %v2714, 7
        %v2716 = vsub.s32 %v2713, %v2715
        %v2717 = vrot.slane %v2689, %v2716
        %v2718 = vcombine.high %v2696, %v2696
        %v2719 = vcombine.high %v2703, %v2703
        %v2720 = vcombine.high %v2710, %v2710
        %v2721 = vcombine.high %v2717, %v2717
        %v2722 = vcombine.high %v1766, %v1766
        %v2724 = vunpack.c.l.s4 1966171168
        %v2725 = vunpack.c.0.s8 %v2724
        %v2726 = vlaneseq
        %v2727 = vshrl.u32 %v2726, 7
        %v2728 = vsub.s32 %v2725, %v2727
        %v2729 = vrot.slane %v1766, %v2728
        %v2731 = vunpack.c.l.s4 1966171168
        %v2732 = vunpack.c.0.s8 %v2731
        %v2733 = vlaneseq
        %v2734 = vshrl.u32 %v2733, 7
        %v2735 = vsub.s32 %v2732, %v2734
        %v2736 = vrot.slane %v2722, %v2735
        %v2737 = vcombine.high %v2729, %v2729
        %v2738 = vcombine.high %v2736, %v2736
        %v2740 = vunpack.c.l.s4 1966171168
        %v2741 = vunpack.c.0.s8 %v2740
        %v2742 = vlaneseq
        %v2743 = vshrl.u32 %v2742, 7
        %v2744 = vsub.s32 %v2741, %v2743
        %v2745 = vrot.slane %v2729, %v2744
        %v2747 = vunpack.c.l.s4 1966171168
        %v2748 = vunpack.c.0.s8 %v2747
        %v2749 = vlaneseq
        %v2750 = vshrl.u32 %v2749, 7
        %v2751 = vsub.s32 %v2748, %v2750
        %v2752 = vrot.slane %v2736, %v2751
        %v2754 = vunpack.c.l.s4 1966171168
        %v2755 = vunpack.c.0.s8 %v2754
        %v2756 = vlaneseq
        %v2757 = vshrl.u32 %v2756, 7
        %v2758 = vsub.s32 %v2755, %v2757
        %v2759 = vrot.slane %v2737, %v2758
        %v2761 = vunpack.c.l.s4 1966171168
        %v2762 = vunpack.c.0.s8 %v2761
        %v2763 = vlaneseq
        %v2764 = vshrl.u32 %v2763, 7
        %v2765 = vsub.s32 %v2762, %v2764
        %v2766 = vrot.slane %v2738, %v2765
        %v2767 = vcombine.high %v2745, %v2745
        %v2768 = vcombine.high %v2752, %v2752
        %v2769 = vcombine.high %v2759, %v2759
        %v2770 = vcombine.high %v2766, %v2766
        %v2771 = vcombine.high %v1772, %v1772
        %v2773 = vunpack.c.l.s4 1966171168
        %v2774 = vunpack.c.0.s8 %v2773
        %v2775 = vlaneseq
        %v2776 = vshrl.u32 %v2775, 7
        %v2777 = vsub.s32 %v2774, %v2776
        %v2778 = vrot.slane %v1772, %v2777
        %v2780 = vunpack.c.l.s4 1966171168
        %v2781 = vunpack.c.0.s8 %v2780
        %v2782 = vlaneseq
        %v2783 = vshrl.u32 %v2782, 7
        %v2784 = vsub.s32 %v2781, %v2783
        %v2785 = vrot.slane %v2771, %v2784
        %v2786 = vcombine.high %v2778, %v2778
        %v2787 = vcombine.high %v2785, %v2785
        %v2789 = vunpack.c.l.s4 1966171168
        %v2790 = vunpack.c.0.s8 %v2789
        %v2791 = vlaneseq
        %v2792 = vshrl.u32 %v2791, 7
        %v2793 = vsub.s32 %v2790, %v2792
        %v2794 = vrot.slane %v2778, %v2793
        %v2796 = vunpack.c.l.s4 1966171168
        %v2797 = vunpack.c.0.s8 %v2796
        %v2798 = vlaneseq
        %v2799 = vshrl.u32 %v2798, 7
        %v2800 = vsub.s32 %v2797, %v2799
        %v2801 = vrot.slane %v2785, %v2800
        %v2803 = vunpack.c.l.s4 1966171168
        %v2804 = vunpack.c.0.s8 %v2803
        %v2805 = vlaneseq
        %v2806 = vshrl.u32 %v2805, 7
        %v2807 = vsub.s32 %v2804, %v2806
        %v2808 = vrot.slane %v2786, %v2807
        %v2810 = vunpack.c.l.s4 1966171168
        %v2811 = vunpack.c.0.s8 %v2810
        %v2812 = vlaneseq
        %v2813 = vshrl.u32 %v2812, 7
        %v2814 = vsub.s32 %v2811, %v2813
        %v2815 = vrot.slane %v2787, %v2814
        %v2816 = vcombine.high %v2794, %v2794
        %v2817 = vcombine.high %v2801, %v2801
        %v2818 = vcombine.high %v2808, %v2808
        %v2819 = vcombine.high %v2815, %v2815
        %v2820 = vcombine.high %v1776, %v1776
        %v2822 = vunpack.c.l.s4 1966171168
        %v2823 = vunpack.c.0.s8 %v2822
        %v2824 = vlaneseq
        %v2825 = vshrl.u32 %v2824, 7
        %v2826 = vsub.s32 %v2823, %v2825
        %v2827 = vrot.slane %v1776, %v2826
        %v2829 = vunpack.c.l.s4 1966171168
        %v2830 = vunpack.c.0.s8 %v2829
        %v2831 = vlaneseq
        %v2832 = vshrl.u32 %v2831, 7
        %v2833 = vsub.s32 %v2830, %v2832
        %v2834 = vrot.slane %v2820, %v2833
        %v2835 = vcombine.high %v2827, %v2827
        %v2836 = vcombine.high %v2834, %v2834
        %v2838 = vunpack.c.l.s4 1966171168
        %v2839 = vunpack.c.0.s8 %v2838
        %v2840 = vlaneseq
        %v2841 = vshrl.u32 %v2840, 7
        %v2842 = vsub.s32 %v2839, %v2841
        %v2843 = vrot.slane %v2827, %v2842
        %v2845 = vunpack.c.l.s4 1966171168
        %v2846 = vunpack.c.0.s8 %v2845
        %v2847 = vlaneseq
        %v2848 = vshrl.u32 %v2847, 7
        %v2849 = vsub.s32 %v2846, %v2848
        %v2850 = vrot.slane %v2834, %v2849
        %v2852 = vunpack.c.l.s4 1966171168
        %v2853 = vunpack.c.0.s8 %v2852
        %v2854 = vlaneseq
        %v2855 = vshrl.u32 %v2854, 7
        %v2856 = vsub.s32 %v2853, %v2855
        %v2857 = vrot.slane %v2835, %v2856
        %v2859 = vunpack.c.l.s4 1966171168
        %v2860 = vunpack.c.0.s8 %v2859
        %v2861 = vlaneseq
        %v2862 = vshrl.u32 %v2861, 7
        %v2863 = vsub.s32 %v2860, %v2862
        %v2864 = vrot.slane %v2836, %v2863
        %v2865 = vcombine.high %v2843, %v2843
        %v2866 = vcombine.high %v2850, %v2850
        %v2867 = vcombine.high %v2857, %v2857
        %v2868 = vcombine.high %v2864, %v2864
        %v2869 = vcombine.high %v1782, %v1782
        %v2871 = vunpack.c.l.s4 1966171168
        %v2872 = vunpack.c.0.s8 %v2871
        %v2873 = vlaneseq
        %v2874 = vshrl.u32 %v2873, 7
        %v2875 = vsub.s32 %v2872, %v2874
        %v2876 = vrot.slane %v1782, %v2875
        %v2878 = vunpack.c.l.s4 1966171168
        %v2879 = vunpack.c.0.s8 %v2878
        %v2880 = vlaneseq
        %v2881 = vshrl.u32 %v2880, 7
        %v2882 = vsub.s32 %v2879, %v2881
        %v2883 = vrot.slane %v2869, %v2882
        %v2884 = vcombine.high %v2876, %v2876
        %v2885 = vcombine.high %v2883, %v2883
        %v2887 = vunpack.c.l.s4 1966171168
        %v2888 = vunpack.c.0.s8 %v2887
        %v2889 = vlaneseq
        %v2890 = vshrl.u32 %v2889, 7
        %v2891 = vsub.s32 %v2888, %v2890
        %v2892 = vrot.slane %v2876, %v2891
        %v2894 = vunpack.c.l.s4 1966171168
        %v2895 = vunpack.c.0.s8 %v2894
        %v2896 = vlaneseq
        %v2897 = vshrl.u32 %v2896, 7
        %v2898 = vsub.s32 %v2895, %v2897
        %v2899 = vrot.slane %v2883, %v2898
        %v2901 = vunpack.c.l.s4 1966171168
        %v2902 = vunpack.c.0.s8 %v2901
        %v2903 = vlaneseq
        %v2904 = vshrl.u32 %v2903, 7
        %v2905 = vsub.s32 %v2902, %v2904
        %v2906 = vrot.slane %v2884, %v2905
        %v2908 = vunpack.c.l.s4 1966171168
        %v2909 = vunpack.c.0.s8 %v2908
        %v2910 = vlaneseq
        %v2911 = vshrl.u32 %v2910, 7
        %v2912 = vsub.s32 %v2909, %v2911
        %v2913 = vrot.slane %v2885, %v2912
        %v2914 = vcombine.high %v2892, %v2892
        %v2915 = vcombine.high %v2899, %v2899
        %v2916 = vcombine.high %v2906, %v2906
        %v2917 = vcombine.high %v2913, %v2913
        %v2919 = vunpack.c.l.s4 1966171168
        %v2920 = vunpack.c.0.s8 %v2919
        %v2921 = vlaneseq
        %v2922 = vshrl.u32 %v2921, 7
        %v2923 = vsub.s32 %v2920, %v2922
        %v2924 = vrot.slane %v1786, %v2923
        %v2925 = vcombine.high %v2924, %v2924
        %v2927 = vunpack.c.l.s4 1966171168
        %v2928 = vunpack.c.0.s8 %v2927
        %v2929 = vlaneseq
        %v2930 = vshrl.u32 %v2929, 7
        %v2931 = vsub.s32 %v2928, %v2930
        %v2932 = vrot.slane %v2924, %v2931
        %v2934 = vunpack.c.l.s4 1966171168
        %v2935 = vunpack.c.0.s8 %v2934
        %v2936 = vlaneseq
        %v2937 = vshrl.u32 %v2936, 7
        %v2938 = vsub.s32 %v2935, %v2937
        %v2939 = vrot.slane %v2925, %v2938
        %v2940 = vcombine.high %v2932, %v2932
        %v2941 = vcombine.high %v2939, %v2939
        %v3010 = vcombine.high %v471, %v471
        %v3012 = vunpack.c.l.s4 1966171168
        %v3013 = vunpack.c.0.s8 %v3012
        %v3014 = vlaneseq
        %v3015 = vshrl.u32 %v3014, 7
        %v3016 = vsub.s32 %v3013, %v3015
        %v3017 = vrot.slane %v471, %v3016
        %v3019 = vunpack.c.l.s4 1966171168
        %v3020 = vunpack.c.0.s8 %v3019
        %v3021 = vlaneseq
        %v3022 = vshrl.u32 %v3021, 7
        %v3023 = vsub.s32 %v3020, %v3022
        %v3024 = vrot.slane %v3010, %v3023
        %v3025 = vcombine.high %v3017, %v3017
        %v3026 = vcombine.high %v3024, %v3024
        %v3028 = vunpack.c.l.s4 1966171168
        %v3029 = vunpack.c.0.s8 %v3028
        %v3030 = vlaneseq
        %v3031 = vshrl.u32 %v3030, 7
        %v3032 = vsub.s32 %v3029, %v3031
        %v3033 = vrot.slane %v3017, %v3032
        %v3035 = vunpack.c.l.s4 1966171168
        %v3036 = vunpack.c.0.s8 %v3035
        %v3037 = vlaneseq
        %v3038 = vshrl.u32 %v3037, 7
        %v3039 = vsub.s32 %v3036, %v3038
        %v3040 = vrot.slane %v3024, %v3039
        %v3042 = vunpack.c.l.s4 1966171168
        %v3043 = vunpack.c.0.s8 %v3042
        %v3044 = vlaneseq
        %v3045 = vshrl.u32 %v3044, 7
        %v3046 = vsub.s32 %v3043, %v3045
        %v3047 = vrot.slane %v3025, %v3046
        %v3049 = vunpack.c.l.s4 1966171168
        %v3050 = vunpack.c.0.s8 %v3049
        %v3051 = vlaneseq
        %v3052 = vshrl.u32 %v3051, 7
        %v3053 = vsub.s32 %v3050, %v3052
        %v3054 = vrot.slane %v3026, %v3053
        %v3055 = vcombine.high %v3033, %v3033
        %v3056 = vcombine.high %v3040, %v3040
        %v3057 = vcombine.high %v3047, %v3047
        %v3058 = vcombine.high %v3054, %v3054
        %v3059 = vcombine.high %v472, %v472
        %v3061 = vunpack.c.l.s4 1966171168
        %v3062 = vunpack.c.0.s8 %v3061
        %v3063 = vlaneseq
        %v3064 = vshrl.u32 %v3063, 7
        %v3065 = vsub.s32 %v3062, %v3064
        %v3066 = vrot.slane %v472, %v3065
        %v3068 = vunpack.c.l.s4 1966171168
        %v3069 = vunpack.c.0.s8 %v3068
        %v3070 = vlaneseq
        %v3071 = vshrl.u32 %v3070, 7
        %v3072 = vsub.s32 %v3069, %v3071
        %v3073 = vrot.slane %v3059, %v3072
        %v3074 = vcombine.high %v3066, %v3066
        %v3075 = vcombine.high %v3073, %v3073
        %v3077 = vunpack.c.l.s4 1966171168
        %v3078 = vunpack.c.0.s8 %v3077
        %v3079 = vlaneseq
        %v3080 = vshrl.u32 %v3079, 7
        %v3081 = vsub.s32 %v3078, %v3080
        %v3082 = vrot.slane %v3066, %v3081
        %v3084 = vunpack.c.l.s4 1966171168
        %v3085 = vunpack.c.0.s8 %v3084
        %v3086 = vlaneseq
        %v3087 = vshrl.u32 %v3086, 7
        %v3088 = vsub.s32 %v3085, %v3087
        %v3089 = vrot.slane %v3073, %v3088
        %v3091 = vunpack.c.l.s4 1966171168
        %v3092 = vunpack.c.0.s8 %v3091
        %v3093 = vlaneseq
        %v3094 = vshrl.u32 %v3093, 7
        %v3095 = vsub.s32 %v3092, %v3094
        %v3096 = vrot.slane %v3074, %v3095
        %v3098 = vunpack.c.l.s4 1966171168
        %v3099 = vunpack.c.0.s8 %v3098
        %v3100 = vlaneseq
        %v3101 = vshrl.u32 %v3100, 7
        %v3102 = vsub.s32 %v3099, %v3101
        %v3103 = vrot.slane %v3075, %v3102
        %v3104 = vcombine.high %v3082, %v3082
        %v3105 = vcombine.high %v3089, %v3089
        %v3106 = vcombine.high %v3096, %v3096
        %v3107 = vcombine.high %v3103, %v3103
        %v3108 = vcombine.high %v473, %v473
        %v3110 = vunpack.c.l.s4 1966171168
        %v3111 = vunpack.c.0.s8 %v3110
        %v3112 = vlaneseq
        %v3113 = vshrl.u32 %v3112, 7
        %v3114 = vsub.s32 %v3111, %v3113
        %v3115 = vrot.slane %v473, %v3114
        %v3117 = vunpack.c.l.s4 1966171168
        %v3118 = vunpack.c.0.s8 %v3117
        %v3119 = vlaneseq
        %v3120 = vshrl.u32 %v3119, 7
        %v3121 = vsub.s32 %v3118, %v3120
        %v3122 = vrot.slane %v3108, %v3121
        %v3123 = vcombine.high %v3115, %v3115
        %v3124 = vcombine.high %v3122, %v3122
        %v3126 = vunpack.c.l.s4 1966171168
        %v3127 = vunpack.c.0.s8 %v3126
        %v3128 = vlaneseq
        %v3129 = vshrl.u32 %v3128, 7
        %v3130 = vsub.s32 %v3127, %v3129
        %v3131 = vrot.slane %v3115, %v3130
        %v3133 = vunpack.c.l.s4 1966171168
        %v3134 = vunpack.c.0.s8 %v3133
        %v3135 = vlaneseq
        %v3136 = vshrl.u32 %v3135, 7
        %v3137 = vsub.s32 %v3134, %v3136
        %v3138 = vrot.slane %v3122, %v3137
        %v3140 = vunpack.c.l.s4 1966171168
        %v3141 = vunpack.c.0.s8 %v3140
        %v3142 = vlaneseq
        %v3143 = vshrl.u32 %v3142, 7
        %v3144 = vsub.s32 %v3141, %v3143
        %v3145 = vrot.slane %v3123, %v3144
        %v3147 = vunpack.c.l.s4 1966171168
        %v3148 = vunpack.c.0.s8 %v3147
        %v3149 = vlaneseq
        %v3150 = vshrl.u32 %v3149, 7
        %v3151 = vsub.s32 %v3148, %v3150
        %v3152 = vrot.slane %v3124, %v3151
        %v3153 = vcombine.high %v3131, %v3131
        %v3154 = vcombine.high %v3138, %v3138
        %v3155 = vcombine.high %v3145, %v3145
        %v3156 = vcombine.high %v3152, %v3152
        %v3157 = vcombine.high %v474, %v474
        %v3159 = vunpack.c.l.s4 1966171168
        %v3160 = vunpack.c.0.s8 %v3159
        %v3161 = vlaneseq
        %v3162 = vshrl.u32 %v3161, 7
        %v3163 = vsub.s32 %v3160, %v3162
        %v3164 = vrot.slane %v474, %v3163
        %v3166 = vunpack.c.l.s4 1966171168
        %v3167 = vunpack.c.0.s8 %v3166
        %v3168 = vlaneseq
        %v3169 = vshrl.u32 %v3168, 7
        %v3170 = vsub.s32 %v3167, %v3169
        %v3171 = vrot.slane %v3157, %v3170
        %v3172 = vcombine.high %v3164, %v3164
        %v3173 = vcombine.high %v3171, %v3171
        %v3175 = vunpack.c.l.s4 1966171168
        %v3176 = vunpack.c.0.s8 %v3175
        %v3177 = vlaneseq
        %v3178 = vshrl.u32 %v3177, 7
        %v3179 = vsub.s32 %v3176, %v3178
        %v3180 = vrot.slane %v3164, %v3179
        %v3182 = vunpack.c.l.s4 1966171168
        %v3183 = vunpack.c.0.s8 %v3182
        %v3184 = vlaneseq
        %v3185 = vshrl.u32 %v3184, 7
        %v3186 = vsub.s32 %v3183, %v3185
        %v3187 = vrot.slane %v3171, %v3186
        %v3189 = vunpack.c.l.s4 1966171168
        %v3190 = vunpack.c.0.s8 %v3189
        %v3191 = vlaneseq
        %v3192 = vshrl.u32 %v3191, 7
        %v3193 = vsub.s32 %v3190, %v3192
        %v3194 = vrot.slane %v3172, %v3193
        %v3196 = vunpack.c.l.s4 1966171168
        %v3197 = vunpack.c.0.s8 %v3196
        %v3198 = vlaneseq
        %v3199 = vshrl.u32 %v3198, 7
        %v3200 = vsub.s32 %v3197, %v3199
        %v3201 = vrot.slane %v3173, %v3200
        %v3202 = vcombine.high %v3180, %v3180
        %v3203 = vcombine.high %v3187, %v3187
        %v3204 = vcombine.high %v3194, %v3194
        %v3205 = vcombine.high %v3201, %v3201
        %v3206 = vcombine.high %v475, %v475
        %v3208 = vunpack.c.l.s4 1966171168
        %v3209 = vunpack.c.0.s8 %v3208
        %v3210 = vlaneseq
        %v3211 = vshrl.u32 %v3210, 7
        %v3212 = vsub.s32 %v3209, %v3211
        %v3213 = vrot.slane %v475, %v3212
        %v3215 = vunpack.c.l.s4 1966171168
        %v3216 = vunpack.c.0.s8 %v3215
        %v3217 = vlaneseq
        %v3218 = vshrl.u32 %v3217, 7
        %v3219 = vsub.s32 %v3216, %v3218
        %v3220 = vrot.slane %v3206, %v3219
        %v3221 = vcombine.high %v3213, %v3213
        %v3222 = vcombine.high %v3220, %v3220
        %v3224 = vunpack.c.l.s4 1966171168
        %v3225 = vunpack.c.0.s8 %v3224
        %v3226 = vlaneseq
        %v3227 = vshrl.u32 %v3226, 7
        %v3228 = vsub.s32 %v3225, %v3227
        %v3229 = vrot.slane %v3213, %v3228
        %v3231 = vunpack.c.l.s4 1966171168
        %v3232 = vunpack.c.0.s8 %v3231
        %v3233 = vlaneseq
        %v3234 = vshrl.u32 %v3233, 7
        %v3235 = vsub.s32 %v3232, %v3234
        %v3236 = vrot.slane %v3220, %v3235
        %v3238 = vunpack.c.l.s4 1966171168
        %v3239 = vunpack.c.0.s8 %v3238
        %v3240 = vlaneseq
        %v3241 = vshrl.u32 %v3240, 7
        %v3242 = vsub.s32 %v3239, %v3241
        %v3243 = vrot.slane %v3221, %v3242
        %v3245 = vunpack.c.l.s4 1966171168
        %v3246 = vunpack.c.0.s8 %v3245
        %v3247 = vlaneseq
        %v3248 = vshrl.u32 %v3247, 7
        %v3249 = vsub.s32 %v3246, %v3248
        %v3250 = vrot.slane %v3222, %v3249
        %v3251 = vcombine.high %v3229, %v3229
        %v3252 = vcombine.high %v3236, %v3236
        %v3253 = vcombine.high %v3243, %v3243
        %v3254 = vcombine.high %v3250, %v3250
        %v3255 = vcombine.high %v476, %v476
        %v3257 = vunpack.c.l.s4 1966171168
        %v3258 = vunpack.c.0.s8 %v3257
        %v3259 = vlaneseq
        %v3260 = vshrl.u32 %v3259, 7
        %v3261 = vsub.s32 %v3258, %v3260
        %v3262 = vrot.slane %v476, %v3261
        %v3264 = vunpack.c.l.s4 1966171168
        %v3265 = vunpack.c.0.s8 %v3264
        %v3266 = vlaneseq
        %v3267 = vshrl.u32 %v3266, 7
        %v3268 = vsub.s32 %v3265, %v3267
        %v3269 = vrot.slane %v3255, %v3268
        %v3270 = vcombine.high %v3262, %v3262
        %v3271 = vcombine.high %v3269, %v3269
        %v3273 = vunpack.c.l.s4 1966171168
        %v3274 = vunpack.c.0.s8 %v3273
        %v3275 = vlaneseq
        %v3276 = vshrl.u32 %v3275, 7
        %v3277 = vsub.s32 %v3274, %v3276
        %v3278 = vrot.slane %v3262, %v3277
        %v3280 = vunpack.c.l.s4 1966171168
        %v3281 = vunpack.c.0.s8 %v3280
        %v3282 = vlaneseq
        %v3283 = vshrl.u32 %v3282, 7
        %v3284 = vsub.s32 %v3281, %v3283
        %v3285 = vrot.slane %v3269, %v3284
        %v3287 = vunpack.c.l.s4 1966171168
        %v3288 = vunpack.c.0.s8 %v3287
        %v3289 = vlaneseq
        %v3290 = vshrl.u32 %v3289, 7
        %v3291 = vsub.s32 %v3288, %v3290
        %v3292 = vrot.slane %v3270, %v3291
        %v3294 = vunpack.c.l.s4 1966171168
        %v3295 = vunpack.c.0.s8 %v3294
        %v3296 = vlaneseq
        %v3297 = vshrl.u32 %v3296, 7
        %v3298 = vsub.s32 %v3295, %v3297
        %v3299 = vrot.slane %v3271, %v3298
        %v3300 = vcombine.high %v3278, %v3278
        %v3301 = vcombine.high %v3285, %v3285
        %v3302 = vcombine.high %v3292, %v3292
        %v3303 = vcombine.high %v3299, %v3299
        %v3304 = vcombine.high %v477, %v477
        %v3306 = vunpack.c.l.s4 1966171168
        %v3307 = vunpack.c.0.s8 %v3306
        %v3308 = vlaneseq
        %v3309 = vshrl.u32 %v3308, 7
        %v3310 = vsub.s32 %v3307, %v3309
        %v3311 = vrot.slane %v477, %v3310
        %v3313 = vunpack.c.l.s4 1966171168
        %v3314 = vunpack.c.0.s8 %v3313
        %v3315 = vlaneseq
        %v3316 = vshrl.u32 %v3315, 7
        %v3317 = vsub.s32 %v3314, %v3316
        %v3318 = vrot.slane %v3304, %v3317
        %v3319 = vcombine.high %v3311, %v3311
        %v3320 = vcombine.high %v3318, %v3318
        %v3322 = vunpack.c.l.s4 1966171168
        %v3323 = vunpack.c.0.s8 %v3322
        %v3324 = vlaneseq
        %v3325 = vshrl.u32 %v3324, 7
        %v3326 = vsub.s32 %v3323, %v3325
        %v3327 = vrot.slane %v3311, %v3326
        %v3329 = vunpack.c.l.s4 1966171168
        %v3330 = vunpack.c.0.s8 %v3329
        %v3331 = vlaneseq
        %v3332 = vshrl.u32 %v3331, 7
        %v3333 = vsub.s32 %v3330, %v3332
        %v3334 = vrot.slane %v3318, %v3333
        %v3336 = vunpack.c.l.s4 1966171168
        %v3337 = vunpack.c.0.s8 %v3336
        %v3338 = vlaneseq
        %v3339 = vshrl.u32 %v3338, 7
        %v3340 = vsub.s32 %v3337, %v3339
        %v3341 = vrot.slane %v3319, %v3340
        %v3343 = vunpack.c.l.s4 1966171168
        %v3344 = vunpack.c.0.s8 %v3343
        %v3345 = vlaneseq
        %v3346 = vshrl.u32 %v3345, 7
        %v3347 = vsub.s32 %v3344, %v3346
        %v3348 = vrot.slane %v3320, %v3347
        %v3349 = vcombine.high %v3327, %v3327
        %v3350 = vcombine.high %v3334, %v3334
        %v3351 = vcombine.high %v3341, %v3341
        %v3352 = vcombine.high %v3348, %v3348
        %v3353 = vcombine.high %v478, %v478
        %v3355 = vunpack.c.l.s4 1966171168
        %v3356 = vunpack.c.0.s8 %v3355
        %v3357 = vlaneseq
        %v3358 = vshrl.u32 %v3357, 7
        %v3359 = vsub.s32 %v3356, %v3358
        %v3360 = vrot.slane %v478, %v3359
        %v3362 = vunpack.c.l.s4 1966171168
        %v3363 = vunpack.c.0.s8 %v3362
        %v3364 = vlaneseq
        %v3365 = vshrl.u32 %v3364, 7
        %v3366 = vsub.s32 %v3363, %v3365
        %v3367 = vrot.slane %v3353, %v3366
        %v3368 = vcombine.high %v3360, %v3360
        %v3369 = vcombine.high %v3367, %v3367
        %v3371 = vunpack.c.l.s4 1966171168
        %v3372 = vunpack.c.0.s8 %v3371
        %v3373 = vlaneseq
        %v3374 = vshrl.u32 %v3373, 7
        %v3375 = vsub.s32 %v3372, %v3374
        %v3376 = vrot.slane %v3360, %v3375
        %v3378 = vunpack.c.l.s4 1966171168
        %v3379 = vunpack.c.0.s8 %v3378
        %v3380 = vlaneseq
        %v3381 = vshrl.u32 %v3380, 7
        %v3382 = vsub.s32 %v3379, %v3381
        %v3383 = vrot.slane %v3367, %v3382
        %v3385 = vunpack.c.l.s4 1966171168
        %v3386 = vunpack.c.0.s8 %v3385
        %v3387 = vlaneseq
        %v3388 = vshrl.u32 %v3387, 7
        %v3389 = vsub.s32 %v3386, %v3388
        %v3390 = vrot.slane %v3368, %v3389
        %v3392 = vunpack.c.l.s4 1966171168
        %v3393 = vunpack.c.0.s8 %v3392
        %v3394 = vlaneseq
        %v3395 = vshrl.u32 %v3394, 7
        %v3396 = vsub.s32 %v3393, %v3395
        %v3397 = vrot.slane %v3369, %v3396
        %v3398 = vcombine.high %v3376, %v3376
        %v3399 = vcombine.high %v3383, %v3383
        %v3400 = vcombine.high %v3390, %v3390
        %v3401 = vcombine.high %v3397, %v3397
        %v3462 = vadd.f32 %v2598, %v3047
        %v3463 = vadd.f32 %v2612, %v3055
        %v3464 = vadd.f32 %v2620, %v3057
        %v3465 = vadd.f32 %v2622, %v3040
        %v3466 = vadd.f32 %v2605, %v3054
        %v3467 = vadd.f32 %v2619, %v3056
        %v3468 = vadd.f32 %v2621, %v3058
        %v3469 = vadd.f32 %v2623, %v3082
        %v3470 = vadd.f32 %v2647, %v3096
        %v3471 = vadd.f32 %v2661, %v3104
        %v3472 = vadd.f32 %v2669, %v3106
        %v3473 = vadd.f32 %v2671, %v3089
        %v3474 = vadd.f32 %v2654, %v3103
        %v3475 = vadd.f32 %v2668, %v3105
        %v3476 = vadd.f32 %v2670, %v3107
        %v3477 = vadd.f32 %v2672, %v3145
        %v3478 = vadd.f32 %v2696, %v3153
        %v3479 = vadd.f32 %v2710, %v3155
        %v3480 = vadd.f32 %v2718, %v3138
        %v3481 = vadd.f32 %v2720, %v3152
        %v3482 = vadd.f32 %v2703, %v3154
        %v3483 = vadd.f32 %v2717, %v3156
        %v3484 = vadd.f32 %v2719, %v3180
        %v3485 = vadd.f32 %v2721, %v3194
        %v3486 = vadd.f32 %v2745, %v3202
        %v3487 = vadd.f32 %v2759, %v3204
        %v3488 = vadd.f32 %v2767, %v3187
        %v3489 = vadd.f32 %v2769, %v3201
        %v3490 = vadd.f32 %v2752, %v3203
        %v3491 = vadd.f32 %v2766, %v3205
        %v3492 = vadd.f32 %v2768, %v3243
        %v3493 = vadd.f32 %v2770, %v3251
        %v3494 = vadd.f32 %v2794, %v3253
        %v3495 = vadd.f32 %v2808, %v3236
        %v3496 = vadd.f32 %v2816, %v3250
        %v3497 = vadd.f32 %v2818, %v3252
        %v3498 = vadd.f32 %v2801, %v3254
        %v3499 = vadd.f32 %v2815, %v3278
        %v3500 = vadd.f32 %v2817, %v3292
        %v3501 = vadd.f32 %v2819, %v3300
        %v3502 = vadd.f32 %v2843, %v3302
        %v3503 = vadd.f32 %v2857, %v3285
        %v3504 = vadd.f32 %v2865, %v3299
        %v3505 = vadd.f32 %v2867, %v3301
        %v3506 = vadd.f32 %v2850, %v3303
        %v3507 = vadd.f32 %v2864, %v3341
        %v3508 = vadd.f32 %v2866, %v3349
        %v3509 = vadd.f32 %v2868, %v3351
        %v3510 = vadd.f32 %v2892, %v3334
        %v3511 = vadd.f32 %v2906, %v3348
        %v3512 = vadd.f32 %v2914, %v3350
        %v3513 = vadd.f32 %v2916, %v3352
        %v3514 = vadd.f32 %v2899, %v3376
        %v3515 = vadd.f32 %v2913, %v3390
        %v3516 = vadd.f32 %v2915, %v3398
        %v3517 = vadd.f32 %v2917, %v3400
        %v3518 = vadd.f32 %v2932, %v3383
        %v3519 = vadd.f32 %v2939, %v3397
        %v3520 = vadd.f32 %v2940, %v3399
        %v3521 = vadd.f32 %v2941, %v3401
        %v3522 = vld [vmem:[#allocation4] sm:$0xff]
        %v3523 = vld [vmem:[#allocation4 + $0x8] sm:$0xff]
        %v3524 = vld [vmem:[#allocation4 + $0x10] sm:$0xff]
        %v3525 = vld [vmem:[#allocation4 + $0x18] sm:$0xff]
        %v3526 = vld [vmem:[#allocation4 + $0x20] sm:$0xff]
        %v3527 = vld [vmem:[#allocation4 + $0x28] sm:$0xff]
        %v3528 = vld [vmem:[#allocation4 + $0x30] sm:$0xff]
        %v3529 = vld [vmem:[#allocation4 + $0x38] sm:$0xff]
        %v3530 = vld [vmem:[#allocation4 + $0x40] sm:$0xff]
        %v3531 = vld [vmem:[#allocation4 + $0x48] sm:$0xff]
        %v3532 = vld [vmem:[#allocation4 + $0x50] sm:$0xff]
        %v3533 = vld [vmem:[#allocation4 + $0x58] sm:$0xff]
        %v3534 = vld [vmem:[#allocation4 + $0x60] sm:$0xff]
        %v3535 = vld [vmem:[#allocation4 + $0x68] sm:$0xff]
        %v3536 = vld [vmem:[#allocation4 + $0x70] sm:$0xff]
        %v3537 = vld [vmem:[#allocation4 + $0x78] sm:$0xff]
        %v3538 = vld [vmem:[#allocation4 + $0x80] sm:$0xff]
        %v3539 = vld [vmem:[#allocation4 + $0x88] sm:$0xff]
        %v3540 = vld [vmem:[#allocation4 + $0x90] sm:$0xff]
        %v3541 = vld [vmem:[#allocation4 + $0x98] sm:$0xff]
        %v3542 = vld [vmem:[#allocation4 + $0xa0] sm:$0xff]
        %v3543 = vld [vmem:[#allocation4 + $0xa8] sm:$0xff]
        %v3544 = vld [vmem:[#allocation4 + $0xb0] sm:$0xff]
        %v3545 = vld [vmem:[#allocation4 + $0xb8] sm:$0xff]
        %v3546 = vld [vmem:[#allocation4 + $0xc0] sm:$0xff]
        %v3547 = vld [vmem:[#allocation4 + $0xc8] sm:$0xff]
        %v3548 = vld [vmem:[#allocation4 + $0xd0] sm:$0xff]
        %v3549 = vld [vmem:[#allocation4 + $0xd8] sm:$0xff]
        %v3550 = vld [vmem:[#allocation4 + $0xe0] sm:$0xff]
        %v3551 = vld [vmem:[#allocation4 + $0xe8] sm:$0xff]
        %v3552 = vld [vmem:[#allocation4 + $0xf0] sm:$0xff]
        %v3553 = vld [vmem:[#allocation4 + $0xf8] sm:$0xff]
        %v3554 = vld [vmem:[%s6] sm:$0x3]
        %v3555 = vld [vmem:[#allocation6] sm:$0xff]
        %v3556 = vld [vmem:[#allocation6 + $0x8] sm:$0xff]
        %v3557 = vld [vmem:[#allocation6 + $0x10] sm:$0xff]
        %v3558 = vld [vmem:[#allocation6 + $0x18] sm:$0xff]
        %v3559 = vld [vmem:[#allocation6 + $0x20] sm:$0xff]
        %v3560 = vld [vmem:[#allocation6 + $0x28] sm:$0xff]
        %v3561 = vld [vmem:[#allocation6 + $0x30] sm:$0xff]
        %v3562 = vld [vmem:[#allocation6 + $0x38] sm:$0xff]
        %v3563 = vld [vmem:[#allocation6 + $0x40] sm:$0xff]
        %v3564 = vld [vmem:[#allocation6 + $0x48] sm:$0xff]
        %v3565 = vld [vmem:[#allocation6 + $0x50] sm:$0xff]
        %v3566 = vld [vmem:[#allocation6 + $0x58] sm:$0xff]
        %v3567 = vld [vmem:[#allocation6 + $0x60] sm:$0xff]
        %v3568 = vld [vmem:[#allocation6 + $0x68] sm:$0xff]
        %v3569 = vld [vmem:[#allocation6 + $0x70] sm:$0xff]
        %v3570 = vld [vmem:[#allocation6 + $0x78] sm:$0xff]
        %v3571 = vld [vmem:[%s8] sm:$0x3]
        %v3632 = vcombine.low %v3462, %v3463
        %v3633 = vcombine.low %v3464, %v3465
        %v3634 = vcombine.low %v3466, %v3467
        %v3635 = vcombine.low %v3468, %v3469
        %v3637 = vunpack.c.l.s4 1966171168
        %v3638 = vunpack.c.0.s8 %v3637
        %v3639 = vlaneseq
        %v3640 = vshrl.u32 %v3639, 7
        %v3641 = vsub.s32 %v3638, %v3640
        %v3642 = vrot.slane %v3632, %v3641
        %v3644 = vunpack.c.l.s4 1966171168
        %v3645 = vunpack.c.0.s8 %v3644
        %v3646 = vlaneseq
        %v3647 = vshrl.u32 %v3646, 7
        %v3648 = vsub.s32 %v3645, %v3647
        %v3649 = vrot.slane %v3633, %v3648
        %v3651 = vunpack.c.l.s4 1966171168
        %v3652 = vunpack.c.0.s8 %v3651
        %v3653 = vlaneseq
        %v3654 = vshrl.u32 %v3653, 7
        %v3655 = vsub.s32 %v3652, %v3654
        %v3656 = vrot.slane %v3634, %v3655
        %v3658 = vunpack.c.l.s4 1966171168
        %v3659 = vunpack.c.0.s8 %v3658
        %v3660 = vlaneseq
        %v3661 = vshrl.u32 %v3660, 7
        %v3662 = vsub.s32 %v3659, %v3661
        %v3663 = vrot.slane %v3635, %v3662
        %v3664 = vcombine.low %v3642, %v3649
        %v3665 = vcombine.low %v3656, %v3663
        %v3667 = vunpack.c.l.s4 1966171168
        %v3668 = vunpack.c.0.s8 %v3667
        %v3669 = vlaneseq
        %v3670 = vshrl.u32 %v3669, 7
        %v3671 = vsub.s32 %v3668, %v3670
        %v3672 = vrot.slane %v3664, %v3671
        %v3674 = vunpack.c.l.s4 1966171168
        %v3675 = vunpack.c.0.s8 %v3674
        %v3676 = vlaneseq
        %v3677 = vshrl.u32 %v3676, 7
        %v3678 = vsub.s32 %v3675, %v3677
        %v3679 = vrot.slane %v3665, %v3678
        %v3680 = vcombine.low %v3672, %v3679
        %v3681 = vcombine.low %v3470, %v3471
        %v3682 = vcombine.low %v3472, %v3473
        %v3683 = vcombine.low %v3474, %v3475
        %v3685 = vunpack.c.l.s4 1966171168
        %v3686 = vunpack.c.0.s8 %v3685
        %v3687 = vlaneseq
        %v3688 = vshrl.u32 %v3687, 7
        %v3689 = vsub.s32 %v3686, %v3688
        %v3690 = vrot.slane %v3681, %v3689
        %v3692 = vunpack.c.l.s4 1966171168
        %v3693 = vunpack.c.0.s8 %v3692
        %v3694 = vlaneseq
        %v3695 = vshrl.u32 %v3694, 7
        %v3696 = vsub.s32 %v3693, %v3695
        %v3697 = vrot.slane %v3682, %v3696
        %v3699 = vunpack.c.l.s4 1966171168
        %v3700 = vunpack.c.0.s8 %v3699
        %v3701 = vlaneseq
        %v3702 = vshrl.u32 %v3701, 7
        %v3703 = vsub.s32 %v3700, %v3702
        %v3704 = vrot.slane %v3683, %v3703
        %v3706 = vunpack.c.l.s4 1966171168
        %v3707 = vunpack.c.0.s8 %v3706
        %v3708 = vlaneseq
        %v3709 = vshrl.u32 %v3708, 7
        %v3710 = vsub.s32 %v3707, %v3709
        %v3711 = vrot.slane %v3476, %v3710
        %v3712 = vcombine.low %v3690, %v3697
        %v3713 = vcombine.low %v3704, %v3711
        %v3715 = vunpack.c.l.s4 1966171168
        %v3716 = vunpack.c.0.s8 %v3715
        %v3717 = vlaneseq
        %v3718 = vshrl.u32 %v3717, 7
        %v3719 = vsub.s32 %v3716, %v3718
        %v3720 = vrot.slane %v3712, %v3719
        %v3722 = vunpack.c.l.s4 1966171168
        %v3723 = vunpack.c.0.s8 %v3722
        %v3724 = vlaneseq
        %v3725 = vshrl.u32 %v3724, 7
        %v3726 = vsub.s32 %v3723, %v3725
        %v3727 = vrot.slane %v3713, %v3726
        %v3728 = vcombine.low %v3720, %v3727
        %v3729 = vcombine.low %v3477, %v3478
        %v3730 = vcombine.low %v3479, %v3480
        %v3731 = vcombine.low %v3481, %v3482
        %v3732 = vcombine.low %v3483, %v3484
        %v3734 = vunpack.c.l.s4 1966171168
        %v3735 = vunpack.c.0.s8 %v3734
        %v3736 = vlaneseq
        %v3737 = vshrl.u32 %v3736, 7
        %v3738 = vsub.s32 %v3735, %v3737
        %v3739 = vrot.slane %v3729, %v3738
        %v3741 = vunpack.c.l.s4 1966171168
        %v3742 = vunpack.c.0.s8 %v3741
        %v3743 = vlaneseq
        %v3744 = vshrl.u32 %v3743, 7
        %v3745 = vsub.s32 %v3742, %v3744
        %v3746 = vrot.slane %v3730, %v3745
        %v3748 = vunpack.c.l.s4 1966171168
        %v3749 = vunpack.c.0.s8 %v3748
        %v3750 = vlaneseq
        %v3751 = vshrl.u32 %v3750, 7
        %v3752 = vsub.s32 %v3749, %v3751
        %v3753 = vrot.slane %v3731, %v3752
        %v3755 = vunpack.c.l.s4 1966171168
        %v3756 = vunpack.c.0.s8 %v3755
        %v3757 = vlaneseq
        %v3758 = vshrl.u32 %v3757, 7
        %v3759 = vsub.s32 %v3756, %v3758
        %v3760 = vrot.slane %v3732, %v3759
        %v3761 = vcombine.low %v3739, %v3746
        %v3762 = vcombine.low %v3753, %v3760
        %v3764 = vunpack.c.l.s4 1966171168
        %v3765 = vunpack.c.0.s8 %v3764
        %v3766 = vlaneseq
        %v3767 = vshrl.u32 %v3766, 7
        %v3768 = vsub.s32 %v3765, %v3767
        %v3769 = vrot.slane %v3761, %v3768
        %v3771 = vunpack.c.l.s4 1966171168
        %v3772 = vunpack.c.0.s8 %v3771
        %v3773 = vlaneseq
        %v3774 = vshrl.u32 %v3773, 7
        %v3775 = vsub.s32 %v3772, %v3774
        %v3776 = vrot.slane %v3762, %v3775
        %v3777 = vcombine.low %v3769, %v3776
        %v3778 = vcombine.low %v3485, %v3486
        %v3779 = vcombine.low %v3487, %v3488
        %v3780 = vcombine.low %v3489, %v3490
        %v3782 = vunpack.c.l.s4 1966171168
        %v3783 = vunpack.c.0.s8 %v3782
        %v3784 = vlaneseq
        %v3785 = vshrl.u32 %v3784, 7
        %v3786 = vsub.s32 %v3783, %v3785
        %v3787 = vrot.slane %v3778, %v3786
        %v3789 = vunpack.c.l.s4 1966171168
        %v3790 = vunpack.c.0.s8 %v3789
        %v3791 = vlaneseq
        %v3792 = vshrl.u32 %v3791, 7
        %v3793 = vsub.s32 %v3790, %v3792
        %v3794 = vrot.slane %v3779, %v3793
        %v3796 = vunpack.c.l.s4 1966171168
        %v3797 = vunpack.c.0.s8 %v3796
        %v3798 = vlaneseq
        %v3799 = vshrl.u32 %v3798, 7
        %v3800 = vsub.s32 %v3797, %v3799
        %v3801 = vrot.slane %v3780, %v3800
        %v3803 = vunpack.c.l.s4 1966171168
        %v3804 = vunpack.c.0.s8 %v3803
        %v3805 = vlaneseq
        %v3806 = vshrl.u32 %v3805, 7
        %v3807 = vsub.s32 %v3804, %v3806
        %v3808 = vrot.slane %v3491, %v3807
        %v3809 = vcombine.low %v3787, %v3794
        %v3810 = vcombine.low %v3801, %v3808
        %v3812 = vunpack.c.l.s4 1966171168
        %v3813 = vunpack.c.0.s8 %v3812
        %v3814 = vlaneseq
        %v3815 = vshrl.u32 %v3814, 7
        %v3816 = vsub.s32 %v3813, %v3815
        %v3817 = vrot.slane %v3809, %v3816
        %v3819 = vunpack.c.l.s4 1966171168
        %v3820 = vunpack.c.0.s8 %v3819
        %v3821 = vlaneseq
        %v3822 = vshrl.u32 %v3821, 7
        %v3823 = vsub.s32 %v3820, %v3822
        %v3824 = vrot.slane %v3810, %v3823
        %v3825 = vcombine.low %v3817, %v3824
        %v3826 = vcombine.low %v3492, %v3493
        %v3827 = vcombine.low %v3494, %v3495
        %v3828 = vcombine.low %v3496, %v3497
        %v3829 = vcombine.low %v3498, %v3499
        %v3831 = vunpack.c.l.s4 1966171168
        %v3832 = vunpack.c.0.s8 %v3831
        %v3833 = vlaneseq
        %v3834 = vshrl.u32 %v3833, 7
        %v3835 = vsub.s32 %v3832, %v3834
        %v3836 = vrot.slane %v3826, %v3835
        %v3838 = vunpack.c.l.s4 1966171168
        %v3839 = vunpack.c.0.s8 %v3838
        %v3840 = vlaneseq
        %v3841 = vshrl.u32 %v3840, 7
        %v3842 = vsub.s32 %v3839, %v3841
        %v3843 = vrot.slane %v3827, %v3842
        %v3845 = vunpack.c.l.s4 1966171168
        %v3846 = vunpack.c.0.s8 %v3845
        %v3847 = vlaneseq
        %v3848 = vshrl.u32 %v3847, 7
        %v3849 = vsub.s32 %v3846, %v3848
        %v3850 = vrot.slane %v3828, %v3849
        %v3852 = vunpack.c.l.s4 1966171168
        %v3853 = vunpack.c.0.s8 %v3852
        %v3854 = vlaneseq
        %v3855 = vshrl.u32 %v3854, 7
        %v3856 = vsub.s32 %v3853, %v3855
        %v3857 = vrot.slane %v3829, %v3856
        %v3858 = vcombine.low %v3836, %v3843
        %v3859 = vcombine.low %v3850, %v3857
        %v3861 = vunpack.c.l.s4 1966171168
        %v3862 = vunpack.c.0.s8 %v3861
        %v3863 = vlaneseq
        %v3864 = vshrl.u32 %v3863, 7
        %v3865 = vsub.s32 %v3862, %v3864
        %v3866 = vrot.slane %v3858, %v3865
        %v3868 = vunpack.c.l.s4 1966171168
        %v3869 = vunpack.c.0.s8 %v3868
        %v3870 = vlaneseq
        %v3871 = vshrl.u32 %v3870, 7
        %v3872 = vsub.s32 %v3869, %v3871
        %v3873 = vrot.slane %v3859, %v3872
        %v3874 = vcombine.low %v3866, %v3873
        %v3875 = vcombine.low %v3500, %v3501
        %v3876 = vcombine.low %v3502, %v3503
        %v3877 = vcombine.low %v3504, %v3505
        %v3879 = vunpack.c.l.s4 1966171168
        %v3880 = vunpack.c.0.s8 %v3879
        %v3881 = vlaneseq
        %v3882 = vshrl.u32 %v3881, 7
        %v3883 = vsub.s32 %v3880, %v3882
        %v3884 = vrot.slane %v3875, %v3883
        %v3886 = vunpack.c.l.s4 1966171168
        %v3887 = vunpack.c.0.s8 %v3886
        %v3888 = vlaneseq
        %v3889 = vshrl.u32 %v3888, 7
        %v3890 = vsub.s32 %v3887, %v3889
        %v3891 = vrot.slane %v3876, %v3890
        %v3893 = vunpack.c.l.s4 1966171168
        %v3894 = vunpack.c.0.s8 %v3893
        %v3895 = vlaneseq
        %v3896 = vshrl.u32 %v3895, 7
        %v3897 = vsub.s32 %v3894, %v3896
        %v3898 = vrot.slane %v3877, %v3897
        %v3900 = vunpack.c.l.s4 1966171168
        %v3901 = vunpack.c.0.s8 %v3900
        %v3902 = vlaneseq
        %v3903 = vshrl.u32 %v3902, 7
        %v3904 = vsub.s32 %v3901, %v3903
        %v3905 = vrot.slane %v3506, %v3904
        %v3906 = vcombine.low %v3884, %v3891
        %v3907 = vcombine.low %v3898, %v3905
        %v3909 = vunpack.c.l.s4 1966171168
        %v3910 = vunpack.c.0.s8 %v3909
        %v3911 = vlaneseq
        %v3912 = vshrl.u32 %v3911, 7
        %v3913 = vsub.s32 %v3910, %v3912
        %v3914 = vrot.slane %v3906, %v3913
        %v3916 = vunpack.c.l.s4 1966171168
        %v3917 = vunpack.c.0.s8 %v3916
        %v3918 = vlaneseq
        %v3919 = vshrl.u32 %v3918, 7
        %v3920 = vsub.s32 %v3917, %v3919
        %v3921 = vrot.slane %v3907, %v3920
        %v3922 = vcombine.low %v3914, %v3921
        %v3923 = vcombine.low %v3507, %v3508
        %v3924 = vcombine.low %v3509, %v3510
        %v3925 = vcombine.low %v3511, %v3512
        %v3926 = vcombine.low %v3513, %v3514
        %v3928 = vunpack.c.l.s4 1966171168
        %v3929 = vunpack.c.0.s8 %v3928
        %v3930 = vlaneseq
        %v3931 = vshrl.u32 %v3930, 7
        %v3932 = vsub.s32 %v3929, %v3931
        %v3933 = vrot.slane %v3923, %v3932
        %v3935 = vunpack.c.l.s4 1966171168
        %v3936 = vunpack.c.0.s8 %v3935
        %v3937 = vlaneseq
        %v3938 = vshrl.u32 %v3937, 7
        %v3939 = vsub.s32 %v3936, %v3938
        %v3940 = vrot.slane %v3924, %v3939
        %v3942 = vunpack.c.l.s4 1966171168
        %v3943 = vunpack.c.0.s8 %v3942
        %v3944 = vlaneseq
        %v3945 = vshrl.u32 %v3944, 7
        %v3946 = vsub.s32 %v3943, %v3945
        %v3947 = vrot.slane %v3925, %v3946
        %v3949 = vunpack.c.l.s4 1966171168
        %v3950 = vunpack.c.0.s8 %v3949
        %v3951 = vlaneseq
        %v3952 = vshrl.u32 %v3951, 7
        %v3953 = vsub.s32 %v3950, %v3952
        %v3954 = vrot.slane %v3926, %v3953
        %v3955 = vcombine.low %v3933, %v3940
        %v3956 = vcombine.low %v3947, %v3954
        %v3958 = vunpack.c.l.s4 1966171168
        %v3959 = vunpack.c.0.s8 %v3958
        %v3960 = vlaneseq
        %v3961 = vshrl.u32 %v3960, 7
        %v3962 = vsub.s32 %v3959, %v3961
        %v3963 = vrot.slane %v3955, %v3962
        %v3965 = vunpack.c.l.s4 1966171168
        %v3966 = vunpack.c.0.s8 %v3965
        %v3967 = vlaneseq
        %v3968 = vshrl.u32 %v3967, 7
        %v3969 = vsub.s32 %v3966, %v3968
        %v3970 = vrot.slane %v3956, %v3969
        %v3971 = vcombine.low %v3963, %v3970
        %v3972 = vcombine.low %v3515, %v3516
        %v3973 = vcombine.low %v3517, %v3518
        %v3974 = vcombine.low %v3519, %v3520
        %v3976 = vunpack.c.l.s4 1966171168
        %v3977 = vunpack.c.0.s8 %v3976
        %v3978 = vlaneseq
        %v3979 = vshrl.u32 %v3978, 7
        %v3980 = vsub.s32 %v3977, %v3979
        %v3981 = vrot.slane %v3972, %v3980
        %v3983 = vunpack.c.l.s4 1966171168
        %v3984 = vunpack.c.0.s8 %v3983
        %v3985 = vlaneseq
        %v3986 = vshrl.u32 %v3985, 7
        %v3987 = vsub.s32 %v3984, %v3986
        %v3988 = vrot.slane %v3973, %v3987
        %v3990 = vunpack.c.l.s4 1966171168
        %v3991 = vunpack.c.0.s8 %v3990
        %v3992 = vlaneseq
        %v3993 = vshrl.u32 %v3992, 7
        %v3994 = vsub.s32 %v3991, %v3993
        %v3995 = vrot.slane %v3974, %v3994
        %v3997 = vunpack.c.l.s4 1966171168
        %v3998 = vunpack.c.0.s8 %v3997
        %v3999 = vlaneseq
        %v4000 = vshrl.u32 %v3999, 7
        %v4001 = vsub.s32 %v3998, %v4000
        %v4002 = vrot.slane %v3521, %v4001
        %v4003 = vcombine.low %v3981, %v3988
        %v4004 = vcombine.low %v3995, %v4002
        %v4006 = vunpack.c.l.s4 1966171168
        %v4007 = vunpack.c.0.s8 %v4006
        %v4008 = vlaneseq
        %v4009 = vshrl.u32 %v4008, 7
        %v4010 = vsub.s32 %v4007, %v4009
        %v4011 = vrot.slane %v4003, %v4010
        %v4013 = vunpack.c.l.s4 1966171168
        %v4014 = vunpack.c.0.s8 %v4013
        %v4015 = vlaneseq
        %v4016 = vshrl.u32 %v4015, 7
        %v4017 = vsub.s32 %v4014, %v4016
        %v4018 = vrot.slane %v4004, %v4017
        %v4019 = vcombine.low %v4011, %v4018
        %v4028 = vpack.c.bf16 %v3728, %v3680
        %v4029 = vpack.c.bf16 %v3825, %v3777
        %v4030 = vpack.c.bf16 %v3922, %v3874
        %v4031 = vpack.c.bf16 %v4019, %v3971
        %v4036 = vcombine.high %v4028, %v4028
        %v4038 = vunpack.c.l.s4 1966171168
        %v4039 = vunpack.c.0.s8 %v4038
        %v4040 = vlaneseq
        %v4041 = vshrl.u32 %v4040, 7
        %v4042 = vsub.s32 %v4039, %v4041
        %v4043 = vrot.slane %v4028, %v4042
        %v4045 = vunpack.c.l.s4 1966171168
        %v4046 = vunpack.c.0.s8 %v4045
        %v4047 = vlaneseq
        %v4048 = vshrl.u32 %v4047, 7
        %v4049 = vsub.s32 %v4046, %v4048
        %v4050 = vrot.slane %v4036, %v4049
        %v4051 = vcombine.high %v4043, %v4043
        %v4052 = vcombine.high %v4050, %v4050
        %v4054 = vunpack.c.l.s4 1966171168
        %v4055 = vunpack.c.0.s8 %v4054
        %v4056 = vlaneseq
        %v4057 = vshrl.u32 %v4056, 7
        %v4058 = vsub.s32 %v4055, %v4057
        %v4059 = vrot.slane %v4043, %v4058
        %v4061 = vunpack.c.l.s4 1966171168
        %v4062 = vunpack.c.0.s8 %v4061
        %v4063 = vlaneseq
        %v4064 = vshrl.u32 %v4063, 7
        %v4065 = vsub.s32 %v4062, %v4064
        %v4066 = vrot.slane %v4050, %v4065
        %v4068 = vunpack.c.l.s4 1966171168
        %v4069 = vunpack.c.0.s8 %v4068
        %v4070 = vlaneseq
        %v4071 = vshrl.u32 %v4070, 7
        %v4072 = vsub.s32 %v4069, %v4071
        %v4073 = vrot.slane %v4051, %v4072
        %v4075 = vunpack.c.l.s4 1966171168
        %v4076 = vunpack.c.0.s8 %v4075
        %v4077 = vlaneseq
        %v4078 = vshrl.u32 %v4077, 7
        %v4079 = vsub.s32 %v4076, %v4078
        %v4080 = vrot.slane %v4052, %v4079
        %v4081 = vcombine.high %v4059, %v4059
        %v4082 = vcombine.high %v4066, %v4066
        %v4083 = vcombine.high %v4073, %v4073
        %v4084 = vcombine.high %v4029, %v4029
        %v4086 = vunpack.c.l.s4 1966171168
        %v4087 = vunpack.c.0.s8 %v4086
        %v4088 = vlaneseq
        %v4089 = vshrl.u32 %v4088, 7
        %v4090 = vsub.s32 %v4087, %v4089
        %v4091 = vrot.slane %v4029, %v4090
        %v4093 = vunpack.c.l.s4 1966171168
        %v4094 = vunpack.c.0.s8 %v4093
        %v4095 = vlaneseq
        %v4096 = vshrl.u32 %v4095, 7
        %v4097 = vsub.s32 %v4094, %v4096
        %v4098 = vrot.slane %v4084, %v4097
        %v4099 = vcombine.high %v4091, %v4091
        %v4100 = vcombine.high %v4098, %v4098
        %v4102 = vunpack.c.l.s4 1966171168
        %v4103 = vunpack.c.0.s8 %v4102
        %v4104 = vlaneseq
        %v4105 = vshrl.u32 %v4104, 7
        %v4106 = vsub.s32 %v4103, %v4105
        %v4107 = vrot.slane %v4091, %v4106
        %v4109 = vunpack.c.l.s4 1966171168
        %v4110 = vunpack.c.0.s8 %v4109
        %v4111 = vlaneseq
        %v4112 = vshrl.u32 %v4111, 7
        %v4113 = vsub.s32 %v4110, %v4112
        %v4114 = vrot.slane %v4098, %v4113
        %v4116 = vunpack.c.l.s4 1966171168
        %v4117 = vunpack.c.0.s8 %v4116
        %v4118 = vlaneseq
        %v4119 = vshrl.u32 %v4118, 7
        %v4120 = vsub.s32 %v4117, %v4119
        %v4121 = vrot.slane %v4099, %v4120
        %v4123 = vunpack.c.l.s4 1966171168
        %v4124 = vunpack.c.0.s8 %v4123
        %v4125 = vlaneseq
        %v4126 = vshrl.u32 %v4125, 7
        %v4127 = vsub.s32 %v4124, %v4126
        %v4128 = vrot.slane %v4100, %v4127
        %v4129 = vcombine.high %v4107, %v4107
        %v4130 = vcombine.high %v4114, %v4114
        %v4131 = vcombine.high %v4121, %v4121
        %v4132 = vcombine.high %v4030, %v4030
        %v4134 = vunpack.c.l.s4 1966171168
        %v4135 = vunpack.c.0.s8 %v4134
        %v4136 = vlaneseq
        %v4137 = vshrl.u32 %v4136, 7
        %v4138 = vsub.s32 %v4135, %v4137
        %v4139 = vrot.slane %v4030, %v4138
        %v4141 = vunpack.c.l.s4 1966171168
        %v4142 = vunpack.c.0.s8 %v4141
        %v4143 = vlaneseq
        %v4144 = vshrl.u32 %v4143, 7
        %v4145 = vsub.s32 %v4142, %v4144
        %v4146 = vrot.slane %v4132, %v4145
        %v4147 = vcombine.high %v4139, %v4139
        %v4148 = vcombine.high %v4146, %v4146
        %v4150 = vunpack.c.l.s4 1966171168
        %v4151 = vunpack.c.0.s8 %v4150
        %v4152 = vlaneseq
        %v4153 = vshrl.u32 %v4152, 7
        %v4154 = vsub.s32 %v4151, %v4153
        %v4155 = vrot.slane %v4139, %v4154
        %v4157 = vunpack.c.l.s4 1966171168
        %v4158 = vunpack.c.0.s8 %v4157
        %v4159 = vlaneseq
        %v4160 = vshrl.u32 %v4159, 7
        %v4161 = vsub.s32 %v4158, %v4160
        %v4162 = vrot.slane %v4146, %v4161
        %v4164 = vunpack.c.l.s4 1966171168
        %v4165 = vunpack.c.0.s8 %v4164
        %v4166 = vlaneseq
        %v4167 = vshrl.u32 %v4166, 7
        %v4168 = vsub.s32 %v4165, %v4167
        %v4169 = vrot.slane %v4147, %v4168
        %v4171 = vunpack.c.l.s4 1966171168
        %v4172 = vunpack.c.0.s8 %v4171
        %v4173 = vlaneseq
        %v4174 = vshrl.u32 %v4173, 7
        %v4175 = vsub.s32 %v4172, %v4174
        %v4176 = vrot.slane %v4148, %v4175
        %v4177 = vcombine.high %v4155, %v4155
        %v4178 = vcombine.high %v4162, %v4162
        %v4179 = vcombine.high %v4169, %v4169
        %v4180 = vcombine.high %v4031, %v4031
        %v4182 = vunpack.c.l.s4 1966171168
        %v4183 = vunpack.c.0.s8 %v4182
        %v4184 = vlaneseq
        %v4185 = vshrl.u32 %v4184, 7
        %v4186 = vsub.s32 %v4183, %v4185
        %v4187 = vrot.slane %v4031, %v4186
        %v4189 = vunpack.c.l.s4 1966171168
        %v4190 = vunpack.c.0.s8 %v4189
        %v4191 = vlaneseq
        %v4192 = vshrl.u32 %v4191, 7
        %v4193 = vsub.s32 %v4190, %v4192
        %v4194 = vrot.slane %v4180, %v4193
        %v4195 = vcombine.high %v4187, %v4187
        %v4196 = vcombine.high %v4194, %v4194
        %v4198 = vunpack.c.l.s4 1966171168
        %v4199 = vunpack.c.0.s8 %v4198
        %v4200 = vlaneseq
        %v4201 = vshrl.u32 %v4200, 7
        %v4202 = vsub.s32 %v4199, %v4201
        %v4203 = vrot.slane %v4187, %v4202
        %v4205 = vunpack.c.l.s4 1966171168
        %v4206 = vunpack.c.0.s8 %v4205
        %v4207 = vlaneseq
        %v4208 = vshrl.u32 %v4207, 7
        %v4209 = vsub.s32 %v4206, %v4208
        %v4210 = vrot.slane %v4194, %v4209
        %v4212 = vunpack.c.l.s4 1966171168
        %v4213 = vunpack.c.0.s8 %v4212
        %v4214 = vlaneseq
        %v4215 = vshrl.u32 %v4214, 7
        %v4216 = vsub.s32 %v4213, %v4215
        %v4217 = vrot.slane %v4195, %v4216
        %v4219 = vunpack.c.l.s4 1966171168
        %v4220 = vunpack.c.0.s8 %v4219
        %v4221 = vlaneseq
        %v4222 = vshrl.u32 %v4221, 7
        %v4223 = vsub.s32 %v4220, %v4222
        %v4224 = vrot.slane %v4196, %v4223
        %v4225 = vcombine.high %v4203, %v4203
        %v4226 = vcombine.high %v4210, %v4210
        %v4227 = vcombine.high %v4217, %v4217
        %v4228 = vunpack.i.l.s16 %v4059
        %v4229 = vunpack.i.h.s16 %v4059
        %v4230 = vunpack.i.l.s16 %v4073
        %v4231 = vunpack.i.h.s16 %v4073
        %v4232 = vunpack.i.l.s16 %v4081
        %v4233 = vunpack.i.h.s16 %v4081
        %v4234 = vunpack.i.l.s16 %v4083
        %v4235 = vunpack.i.h.s16 %v4083
        %v4236 = vunpack.i.l.s16 %v4066
        %v4237 = vunpack.i.h.s16 %v4066
        %v4238 = vunpack.i.l.s16 %v4080
        %v4239 = vunpack.i.h.s16 %v4080
        %v4240 = vunpack.i.l.s16 %v4082
        %v4241 = vunpack.i.l.s16 %v4107
        %v4242 = vunpack.i.h.s16 %v4107
        %v4243 = vunpack.i.l.s16 %v4121
        %v4244 = vunpack.i.h.s16 %v4121
        %v4245 = vunpack.i.l.s16 %v4129
        %v4246 = vunpack.i.h.s16 %v4129
        %v4247 = vunpack.i.l.s16 %v4131
        %v4248 = vunpack.i.h.s16 %v4131
        %v4249 = vunpack.i.l.s16 %v4114
        %v4250 = vunpack.i.h.s16 %v4114
        %v4251 = vunpack.i.l.s16 %v4128
        %v4252 = vunpack.i.h.s16 %v4128
        %v4253 = vunpack.i.l.s16 %v4130
        %v4254 = vunpack.i.l.s16 %v4155
        %v4255 = vunpack.i.h.s16 %v4155
        %v4256 = vunpack.i.l.s16 %v4169
        %v4257 = vunpack.i.h.s16 %v4169
        %v4258 = vunpack.i.l.s16 %v4177
        %v4259 = vunpack.i.h.s16 %v4177
        %v4260 = vunpack.i.l.s16 %v4179
        %v4261 = vunpack.i.h.s16 %v4179
        %v4262 = vunpack.i.l.s16 %v4162
        %v4263 = vunpack.i.h.s16 %v4162
        %v4264 = vunpack.i.l.s16 %v4176
        %v4265 = vunpack.i.h.s16 %v4176
        %v4266 = vunpack.i.l.s16 %v4178
        %v4267 = vunpack.i.l.s16 %v4203
        %v4268 = vunpack.i.h.s16 %v4203
        %v4269 = vunpack.i.l.s16 %v4217
        %v4270 = vunpack.i.h.s16 %v4217
        %v4271 = vunpack.i.l.s16 %v4225
        %v4272 = vunpack.i.h.s16 %v4225
        %v4273 = vunpack.i.l.s16 %v4227
        %v4274 = vunpack.i.h.s16 %v4227
        %v4275 = vunpack.i.l.s16 %v4210
        %v4276 = vunpack.i.h.s16 %v4210
        %v4277 = vunpack.i.l.s16 %v4224
        %v4278 = vunpack.i.h.s16 %v4224
        %v4279 = vunpack.i.l.s16 %v4226
        %v4280 = vcombine.high %v4080, %v4080
        %v4281 = vcombine.high %v4128, %v4128
        %v4282 = vcombine.high %v4176, %v4176
        %v4283 = vcombine.high %v4224, %v4224
        %v4284 = vunpack.i.h.s16 %v4082
        %v4285 = vunpack.i.l.s16 %v4280
        %v4286 = vunpack.i.h.s16 %v4130
        %v4287 = vunpack.i.l.s16 %v4281
        %v4288 = vunpack.i.h.s16 %v4178
        %v4289 = vunpack.i.l.s16 %v4282
        %v4290 = vunpack.i.h.s16 %v4226
        %v4291 = vunpack.i.l.s16 %v4283
        %v4292 = vpack.i.b16 %v4231, %v4230
        %v4293 = vpack.i.b16 %v4233, %v4232
        %v4294 = vpack.i.b16 %v4235, %v4234
        %v4295 = vpack.i.b16 %v4237, %v4236
        %v4296 = vpack.i.b16 %v4239, %v4238
        %v4297 = vpack.i.b16 %v4284, %v4240
        %v4298 = vpack.i.b16 %v4243, %v4285
        %v4299 = vpack.i.b16 %v4245, %v4244
        %v4300 = vpack.i.b16 %v4247, %v4246
        %v4301 = vpack.i.b16 %v4249, %v4248
        %v4302 = vpack.i.b16 %v4251, %v4250
        %v4303 = vpack.i.b16 %v4253, %v4252
        %v4304 = vpack.i.b16 %v4287, %v4286
        %v4305 = vpack.i.b16 %v4257, %v4256
        %v4306 = vpack.i.b16 %v4259, %v4258
        %v4307 = vpack.i.b16 %v4261, %v4260
        %v4308 = vpack.i.b16 %v4263, %v4262
        %v4309 = vpack.i.b16 %v4265, %v4264
        %v4310 = vpack.i.b16 %v4288, %v4266
        %v4311 = vpack.i.b16 %v4269, %v4289
        %v4312 = vpack.i.b16 %v4271, %v4270
        %v4313 = vpack.i.b16 %v4273, %v4272
        %v4314 = vpack.i.b16 %v4275, %v4274
        %v4315 = vpack.i.b16 %v4277, %v4276
        %v4316 = vpack.i.b16 %v4279, %v4278
        %v4317 = vpack.i.b16 %v4291, %v4290
        %v4318 = vcombine.low %v4292, %v4293
        %v4319 = vcombine.low %v4294, %v4295
        %v4320 = vcombine.low %v4296, %v4297
        %v4321 = vcombine.low %v4298, %v4299
        %v4323 = vunpack.c.l.s4 1966171168
        %v4324 = vunpack.c.0.s8 %v4323
        %v4325 = vlaneseq
        %v4326 = vshrl.u32 %v4325, 7
        %v4327 = vsub.s32 %v4324, %v4326
        %v4328 = vrot.slane %v4318, %v4327
        %v4330 = vunpack.c.l.s4 1966171168
        %v4331 = vunpack.c.0.s8 %v4330
        %v4332 = vlaneseq
        %v4333 = vshrl.u32 %v4332, 7
        %v4334 = vsub.s32 %v4331, %v4333
        %v4335 = vrot.slane %v4319, %v4334
        %v4337 = vunpack.c.l.s4 1966171168
        %v4338 = vunpack.c.0.s8 %v4337
        %v4339 = vlaneseq
        %v4340 = vshrl.u32 %v4339, 7
        %v4341 = vsub.s32 %v4338, %v4340
        %v4342 = vrot.slane %v4320, %v4341
        %v4344 = vunpack.c.l.s4 1966171168
        %v4345 = vunpack.c.0.s8 %v4344
        %v4346 = vlaneseq
        %v4347 = vshrl.u32 %v4346, 7
        %v4348 = vsub.s32 %v4345, %v4347
        %v4349 = vrot.slane %v4321, %v4348
        %v4350 = vcombine.low %v4328, %v4335
        %v4351 = vcombine.low %v4342, %v4349
        %v4353 = vunpack.c.l.s4 1966171168
        %v4354 = vunpack.c.0.s8 %v4353
        %v4355 = vlaneseq
        %v4356 = vshrl.u32 %v4355, 7
        %v4357 = vsub.s32 %v4354, %v4356
        %v4358 = vrot.slane %v4350, %v4357
        %v4360 = vunpack.c.l.s4 1966171168
        %v4361 = vunpack.c.0.s8 %v4360
        %v4362 = vlaneseq
        %v4363 = vshrl.u32 %v4362, 7
        %v4364 = vsub.s32 %v4361, %v4363
        %v4365 = vrot.slane %v4351, %v4364
        %v4366 = vcombine.low %v4358, %v4365
        %v4367 = vcombine.low %v4300, %v4301
        %v4368 = vcombine.low %v4302, %v4303
        %v4369 = vcombine.low %v4304, %v4305
        %v4370 = vcombine.low %v4306, %v4307
        %v4372 = vunpack.c.l.s4 1966171168
        %v4373 = vunpack.c.0.s8 %v4372
        %v4374 = vlaneseq
        %v4375 = vshrl.u32 %v4374, 7
        %v4376 = vsub.s32 %v4373, %v4375
        %v4377 = vrot.slane %v4367, %v4376
        %v4379 = vunpack.c.l.s4 1966171168
        %v4380 = vunpack.c.0.s8 %v4379
        %v4381 = vlaneseq
        %v4382 = vshrl.u32 %v4381, 7
        %v4383 = vsub.s32 %v4380, %v4382
        %v4384 = vrot.slane %v4368, %v4383
        %v4386 = vunpack.c.l.s4 1966171168
        %v4387 = vunpack.c.0.s8 %v4386
        %v4388 = vlaneseq
        %v4389 = vshrl.u32 %v4388, 7
        %v4390 = vsub.s32 %v4387, %v4389
        %v4391 = vrot.slane %v4369, %v4390
        %v4393 = vunpack.c.l.s4 1966171168
        %v4394 = vunpack.c.0.s8 %v4393
        %v4395 = vlaneseq
        %v4396 = vshrl.u32 %v4395, 7
        %v4397 = vsub.s32 %v4394, %v4396
        %v4398 = vrot.slane %v4370, %v4397
        %v4399 = vcombine.low %v4377, %v4384
        %v4400 = vcombine.low %v4391, %v4398
        %v4402 = vunpack.c.l.s4 1966171168
        %v4403 = vunpack.c.0.s8 %v4402
        %v4404 = vlaneseq
        %v4405 = vshrl.u32 %v4404, 7
        %v4406 = vsub.s32 %v4403, %v4405
        %v4407 = vrot.slane %v4399, %v4406
        %v4409 = vunpack.c.l.s4 1966171168
        %v4410 = vunpack.c.0.s8 %v4409
        %v4411 = vlaneseq
        %v4412 = vshrl.u32 %v4411, 7
        %v4413 = vsub.s32 %v4410, %v4412
        %v4414 = vrot.slane %v4400, %v4413
        %v4415 = vcombine.low %v4407, %v4414
        %v4416 = vcombine.low %v4308, %v4309
        %v4417 = vcombine.low %v4310, %v4311
        %v4418 = vcombine.low %v4312, %v4313
        %v4419 = vcombine.low %v4314, %v4315
        %v4421 = vunpack.c.l.s4 1966171168
        %v4422 = vunpack.c.0.s8 %v4421
        %v4423 = vlaneseq
        %v4424 = vshrl.u32 %v4423, 7
        %v4425 = vsub.s32 %v4422, %v4424
        %v4426 = vrot.slane %v4416, %v4425
        %v4428 = vunpack.c.l.s4 1966171168
        %v4429 = vunpack.c.0.s8 %v4428
        %v4430 = vlaneseq
        %v4431 = vshrl.u32 %v4430, 7
        %v4432 = vsub.s32 %v4429, %v4431
        %v4433 = vrot.slane %v4417, %v4432
        %v4435 = vunpack.c.l.s4 1966171168
        %v4436 = vunpack.c.0.s8 %v4435
        %v4437 = vlaneseq
        %v4438 = vshrl.u32 %v4437, 7
        %v4439 = vsub.s32 %v4436, %v4438
        %v4440 = vrot.slane %v4418, %v4439
        %v4442 = vunpack.c.l.s4 1966171168
        %v4443 = vunpack.c.0.s8 %v4442
        %v4444 = vlaneseq
        %v4445 = vshrl.u32 %v4444, 7
        %v4446 = vsub.s32 %v4443, %v4445
        %v4447 = vrot.slane %v4419, %v4446
        %v4448 = vcombine.low %v4426, %v4433
        %v4449 = vcombine.low %v4440, %v4447
        %v4451 = vunpack.c.l.s4 1966171168
        %v4452 = vunpack.c.0.s8 %v4451
        %v4453 = vlaneseq
        %v4454 = vshrl.u32 %v4453, 7
        %v4455 = vsub.s32 %v4452, %v4454
        %v4456 = vrot.slane %v4448, %v4455
        %v4458 = vunpack.c.l.s4 1966171168
        %v4459 = vunpack.c.0.s8 %v4458
        %v4460 = vlaneseq
        %v4461 = vshrl.u32 %v4460, 7
        %v4462 = vsub.s32 %v4459, %v4461
        %v4463 = vrot.slane %v4449, %v4462
        %v4464 = vcombine.low %v4456, %v4463
        %v4465 = vcombine.low %v4316, %v4317
        %v4467 = vunpack.c.l.s4 1966171168
        %v4468 = vunpack.c.0.s8 %v4467
        %v4469 = vlaneseq
        %v4470 = vshrl.u32 %v4469, 7
        %v4471 = vsub.s32 %v4468, %v4470
        %v4472 = vrot.slane %v4465, %v4471
        %v4474 = vunpack.c.l.s4 1966171168
        %v4475 = vunpack.c.0.s8 %v4474
        %v4476 = vlaneseq
        %v4477 = vshrl.u32 %v4476, 7
        %v4478 = vsub.s32 %v4475, %v4477
        %v4479 = vrot.slane %v4472, %v4478
        %v4500 = vunpack.c.l.b16 %v3538
        %v4501 = vunpack.c.h.b16 %v3538
        %v4502 = vunpack.c.l.b16 %v3539
        %v4503 = vunpack.c.h.b16 %v3539
        %v4504 = vunpack.c.l.b16 %v3540
        %v4505 = vunpack.c.h.b16 %v3540
        %v4506 = vunpack.c.l.b16 %v3541
        %v4507 = vunpack.c.h.b16 %v3541
        %v4508 = vunpack.c.l.b16 %v3542
        %v4509 = vunpack.c.h.b16 %v3542
        %v4510 = vunpack.c.l.b16 %v3543
        %v4511 = vunpack.c.h.b16 %v3543
        %v4512 = vunpack.c.l.b16 %v3544
        %v4513 = vunpack.c.h.b16 %v3544
        %v4514 = vunpack.c.l.b16 %v3545
        %v4515 = vunpack.c.h.b16 %v3545
        %v4516 = vunpack.c.l.b16 %v3546
        %v4517 = vunpack.c.h.b16 %v3546
        %v4518 = vunpack.c.l.b16 %v3547
        %v4519 = vunpack.c.h.b16 %v3547
        %v4520 = vunpack.c.l.b16 %v3548
        %v4521 = vunpack.c.h.b16 %v3548
        %v4522 = vunpack.c.l.b16 %v3549
        %v4523 = vunpack.c.h.b16 %v3549
        %v4524 = vunpack.c.l.b16 %v3550
        %v4525 = vunpack.c.h.b16 %v3550
        %v4526 = vunpack.c.l.b16 %v3551
        %v4527 = vunpack.c.h.b16 %v3551
        %v4528 = vunpack.c.l.b16 %v3552
        %v4529 = vunpack.c.h.b16 %v3552
        %v4530 = vunpack.c.l.b16 %v3553
        %v4531 = vunpack.c.h.b16 %v3553
        %v4532 = vpack.c.b16 %v4502, %v4500
        %v4533 = vpack.c.b16 %v4503, %v4501
        %v4534 = vpack.c.b16 %v4506, %v4504
        %v4535 = vpack.c.b16 %v4507, %v4505
        %v4536 = vpack.c.b16 %v4510, %v4508
        %v4537 = vpack.c.b16 %v4511, %v4509
        %v4538 = vpack.c.b16 %v4514, %v4512
        %v4539 = vpack.c.b16 %v4515, %v4513
        %v4540 = vpack.c.b16 %v4518, %v4516
        %v4541 = vpack.c.b16 %v4519, %v4517
        %v4542 = vpack.c.b16 %v4522, %v4520
        %v4543 = vpack.c.b16 %v4523, %v4521
        %v4544 = vpack.c.b16 %v4526, %v4524
        %v4545 = vpack.c.b16 %v4527, %v4525
        %v4546 = vpack.c.b16 %v4530, %v4528
        %v4547 = vpack.c.b16 %v4531, %v4529
        %4564 = vmatprep.subr.bf16.mxu0 %v4533
        %4565 = vmatpush1.bf16.msra.mxu0 %v4532
        %4566 = vmatprep.subr.bf16.mxu0 %v4535
        %4567 = vmatpush1.bf16.msra.mxu0 %v4534
        %4568 = vmatprep.subr.bf16.mxu0 %v4537
        %4569 = vmatpush1.bf16.msra.mxu0 %v4536
        %4570 = vmatprep.subr.bf16.mxu0 %v4539
        %4571 = vmatpush1.bf16.msra.mxu0 %v4538
        %4572 = vmatprep.subr.bf16.mxu0 %v4541
        %4573 = vmatpush1.bf16.msra.mxu0 %v4540
        %4574 = vmatprep.subr.bf16.mxu0 %v4543
        %4575 = vmatpush1.bf16.msra.mxu0 %v4542
        %4576 = vmatprep.subr.bf16.mxu0 %v4545
        %4577 = vmatpush1.bf16.msra.mxu0 %v4544
        %4578 = vmatprep.subr.bf16.mxu0 %v4547
        %4579 = vmatpush1.bf16.msra.mxu0 %v4546
        %4580 = vmatprep.subr.bf16.mxu0 0
        %4581 = vmatpush1.bf16.msra.mxu0 0
        %4582 = vmatprep.subr.bf16.mxu0 0
        %4583 = vmatpush1.bf16.msra.mxu0 0
        %4584 = vmatprep.subr.bf16.mxu0 0
        %4585 = vmatpush1.bf16.msra.mxu0 0
        %4586 = vmatprep.subr.bf16.mxu0 0
        %4587 = vmatpush1.bf16.msra.mxu0 0
        %4588 = vmatprep.subr.bf16.mxu0 0
        %4589 = vmatpush1.bf16.msra.mxu0 0
        %4590 = vmatprep.subr.bf16.mxu0 0
        %4591 = vmatpush1.bf16.msra.mxu0 0
        %4592 = vmatprep.subr.bf16.mxu0 0
        %4593 = vmatpush1.bf16.msra.mxu0 0
        %4594 = vmatprep.subr.bf16.mxu0 0
        %4595 = vmatpush1.bf16.msra.mxu0 0
        %4596 = vmatprep.mubr.bf16.mxu0 0
        %4597 = vmatmul.mubr.bf16.gmra.mrb[0].mxu0 %v4366
        %v4598 = vpop.f32.mrb[0].mxu0
        %v4599 = vadd.f32 0.0, %v4598
        %v4600 = vpop.f32.mrb[0].mxu0
        %v4601 = vadd.f32 0.0, %v4600
        %v4602 = vpop.f32.mrb[0].mxu0
        %v4603 = vadd.f32 0.0, %v4602
        %v4604 = vpop.f32.mrb[0].mxu0
        %v4605 = vadd.f32 0.0, %v4604
        %4606 = vmatprep.mubr.bf16.mxu0 0
        %4607 = vmatmul.mubr.bf16.gmra.mrb[0].mxu0 %v4415
        %v4608 = vpop.f32.mrb[0].mxu0
        %v4609 = vadd.f32 0.0, %v4608
        %v4610 = vpop.f32.mrb[0].mxu0
        %v4611 = vadd.f32 0.0, %v4610
        %v4612 = vpop.f32.mrb[0].mxu0
        %v4613 = vadd.f32 0.0, %v4612
        %v4614 = vpop.f32.mrb[0].mxu0
        %v4615 = vadd.f32 0.0, %v4614
        %4616 = vmatprep.mubr.bf16.mxu0 0
        %4617 = vmatmul.mubr.bf16.gmra.mrb[0].mxu0 %v4464
        %v4618 = vpop.f32.mrb[0].mxu0
        %v4619 = vadd.f32 0.0, %v4618
        %v4620 = vpop.f32.mrb[0].mxu0
        %v4621 = vadd.f32 0.0, %v4620
        %v4622 = vpop.f32.mrb[0].mxu0
        %v4623 = vadd.f32 0.0, %v4622
        %v4624 = vpop.f32.mrb[0].mxu0
        %v4625 = vadd.f32 0.0, %v4624
        %4626 = vmatprep.mubr.bf16.mxu0 0
        %4627 = vmatmul.mubr.bf16.gmra.mrb[0].mxu0 %v4479
        %v4628 = vpop.f32.mrb[0].mxu0
        %v4629 = vadd.f32 0.0, %v4628
        %v4630 = vpop.f32.mrb[0].mxu0
        %v4631 = vadd.f32 0.0, %v4630
        %v4632 = vpop.f32.mrb[0].mxu0
        %v4633 = vpop.f32.mrb[0].mxu0
        %4634 = vdwg.mxu0
        %v4635 = vpack.i.b16 %v4229, %v4228
        %v4636 = vpack.i.b16 %v4241, %v4240
        %v4637 = vpack.i.b16 %v4243, %v4242
        %v4638 = vpack.i.b16 %v4255, %v4254
        %v4639 = vpack.i.b16 %v4267, %v4266
        %v4640 = vpack.i.b16 %v4269, %v4268
        %v4641 = vcombine.low %v4635, %v4292
        %v4642 = vcombine.low %v4293, %v4294
        %v4643 = vcombine.low %v4295, %v4296
        %v4644 = vcombine.low %v4636, %v4637
        %v4646 = vunpack.c.l.s4 1966171168
        %v4647 = vunpack.c.0.s8 %v4646
        %v4648 = vlaneseq
        %v4649 = vshrl.u32 %v4648, 7
        %v4650 = vsub.s32 %v4647, %v4649
        %v4651 = vrot.slane %v4641, %v4650
        %v4653 = vunpack.c.l.s4 1966171168
        %v4654 = vunpack.c.0.s8 %v4653
        %v4655 = vlaneseq
        %v4656 = vshrl.u32 %v4655, 7
        %v4657 = vsub.s32 %v4654, %v4656
        %v4658 = vrot.slane %v4642, %v4657
        %v4660 = vunpack.c.l.s4 1966171168
        %v4661 = vunpack.c.0.s8 %v4660
        %v4662 = vlaneseq
        %v4663 = vshrl.u32 %v4662, 7
        %v4664 = vsub.s32 %v4661, %v4663
        %v4665 = vrot.slane %v4643, %v4664
        %v4667 = vunpack.c.l.s4 1966171168
        %v4668 = vunpack.c.0.s8 %v4667
        %v4669 = vlaneseq
        %v4670 = vshrl.u32 %v4669, 7
        %v4671 = vsub.s32 %v4668, %v4670
        %v4672 = vrot.slane %v4644, %v4671
        %v4673 = vcombine.low %v4651, %v4658
        %v4674 = vcombine.low %v4665, %v4672
        %v4676 = vunpack.c.l.s4 1966171168
        %v4677 = vunpack.c.0.s8 %v4676
        %v4678 = vlaneseq
        %v4679 = vshrl.u32 %v4678, 7
        %v4680 = vsub.s32 %v4677, %v4679
        %v4681 = vrot.slane %v4673, %v4680
        %v4683 = vunpack.c.l.s4 1966171168
        %v4684 = vunpack.c.0.s8 %v4683
        %v4685 = vlaneseq
        %v4686 = vshrl.u32 %v4685, 7
        %v4687 = vsub.s32 %v4684, %v4686
        %v4688 = vrot.slane %v4674, %v4687
        %v4689 = vcombine.low %v4681, %v4688
        %v4690 = vcombine.low %v4299, %v4300
        %v4691 = vcombine.low %v4301, %v4302
        %v4692 = vcombine.low %v4303, %v4638
        %v4693 = vcombine.low %v4305, %v4306
        %v4695 = vunpack.c.l.s4 1966171168
        %v4696 = vunpack.c.0.s8 %v4695
        %v4697 = vlaneseq
        %v4698 = vshrl.u32 %v4697, 7
        %v4699 = vsub.s32 %v4696, %v4698
        %v4700 = vrot.slane %v4690, %v4699
        %v4702 = vunpack.c.l.s4 1966171168
        %v4703 = vunpack.c.0.s8 %v4702
        %v4704 = vlaneseq
        %v4705 = vshrl.u32 %v4704, 7
        %v4706 = vsub.s32 %v4703, %v4705
        %v4707 = vrot.slane %v4691, %v4706
        %v4709 = vunpack.c.l.s4 1966171168
        %v4710 = vunpack.c.0.s8 %v4709
        %v4711 = vlaneseq
        %v4712 = vshrl.u32 %v4711, 7
        %v4713 = vsub.s32 %v4710, %v4712
        %v4714 = vrot.slane %v4692, %v4713
        %v4716 = vunpack.c.l.s4 1966171168
        %v4717 = vunpack.c.0.s8 %v4716
        %v4718 = vlaneseq
        %v4719 = vshrl.u32 %v4718, 7
        %v4720 = vsub.s32 %v4717, %v4719
        %v4721 = vrot.slane %v4693, %v4720
        %v4722 = vcombine.low %v4700, %v4707
        %v4723 = vcombine.low %v4714, %v4721
        %v4725 = vunpack.c.l.s4 1966171168
        %v4726 = vunpack.c.0.s8 %v4725
        %v4727 = vlaneseq
        %v4728 = vshrl.u32 %v4727, 7
        %v4729 = vsub.s32 %v4726, %v4728
        %v4730 = vrot.slane %v4722, %v4729
        %v4732 = vunpack.c.l.s4 1966171168
        %v4733 = vunpack.c.0.s8 %v4732
        %v4734 = vlaneseq
        %v4735 = vshrl.u32 %v4734, 7
        %v4736 = vsub.s32 %v4733, %v4735
        %v4737 = vrot.slane %v4723, %v4736
        %v4738 = vcombine.low %v4730, %v4737
        %v4739 = vcombine.low %v4307, %v4308
        %v4740 = vcombine.low %v4309, %v4639
        %v4741 = vcombine.low %v4640, %v4312
        %v4742 = vcombine.low %v4313, %v4314
        %v4744 = vunpack.c.l.s4 1966171168
        %v4745 = vunpack.c.0.s8 %v4744
        %v4746 = vlaneseq
        %v4747 = vshrl.u32 %v4746, 7
        %v4748 = vsub.s32 %v4745, %v4747
        %v4749 = vrot.slane %v4739, %v4748
        %v4751 = vunpack.c.l.s4 1966171168
        %v4752 = vunpack.c.0.s8 %v4751
        %v4753 = vlaneseq
        %v4754 = vshrl.u32 %v4753, 7
        %v4755 = vsub.s32 %v4752, %v4754
        %v4756 = vrot.slane %v4740, %v4755
        %v4758 = vunpack.c.l.s4 1966171168
        %v4759 = vunpack.c.0.s8 %v4758
        %v4760 = vlaneseq
        %v4761 = vshrl.u32 %v4760, 7
        %v4762 = vsub.s32 %v4759, %v4761
        %v4763 = vrot.slane %v4741, %v4762
        %v4765 = vunpack.c.l.s4 1966171168
        %v4766 = vunpack.c.0.s8 %v4765
        %v4767 = vlaneseq
        %v4768 = vshrl.u32 %v4767, 7
        %v4769 = vsub.s32 %v4766, %v4768
        %v4770 = vrot.slane %v4742, %v4769
        %v4771 = vcombine.low %v4749, %v4756
        %v4772 = vcombine.low %v4763, %v4770
        %v4774 = vunpack.c.l.s4 1966171168
        %v4775 = vunpack.c.0.s8 %v4774
        %v4776 = vlaneseq
        %v4777 = vshrl.u32 %v4776, 7
        %v4778 = vsub.s32 %v4775, %v4777
        %v4779 = vrot.slane %v4771, %v4778
        %v4781 = vunpack.c.l.s4 1966171168
        %v4782 = vunpack.c.0.s8 %v4781
        %v4783 = vlaneseq
        %v4784 = vshrl.u32 %v4783, 7
        %v4785 = vsub.s32 %v4782, %v4784
        %v4786 = vrot.slane %v4772, %v4785
        %v4787 = vcombine.low %v4779, %v4786
        %v4788 = vcombine.low %v4315, %v4316
        %v4790 = vunpack.c.l.s4 1966171168
        %v4791 = vunpack.c.0.s8 %v4790
        %v4792 = vlaneseq
        %v4793 = vshrl.u32 %v4792, 7
        %v4794 = vsub.s32 %v4791, %v4793
        %v4795 = vrot.slane %v4788, %v4794
        %v4797 = vunpack.c.l.s4 1966171168
        %v4798 = vunpack.c.0.s8 %v4797
        %v4799 = vlaneseq
        %v4800 = vshrl.u32 %v4799, 7
        %v4801 = vsub.s32 %v4798, %v4800
        %v4802 = vrot.slane %v4795, %v4801
        %v4823 = vunpack.c.l.b16 %v3522
        %v4824 = vunpack.c.h.b16 %v3522
        %v4825 = vunpack.c.l.b16 %v3523
        %v4826 = vunpack.c.h.b16 %v3523
        %v4827 = vunpack.c.l.b16 %v3524
        %v4828 = vunpack.c.h.b16 %v3524
        %v4829 = vunpack.c.l.b16 %v3525
        %v4830 = vunpack.c.h.b16 %v3525
        %v4831 = vunpack.c.l.b16 %v3526
        %v4832 = vunpack.c.h.b16 %v3526
        %v4833 = vunpack.c.l.b16 %v3527
        %v4834 = vunpack.c.h.b16 %v3527
        %v4835 = vunpack.c.l.b16 %v3528
        %v4836 = vunpack.c.h.b16 %v3528
        %v4837 = vunpack.c.l.b16 %v3529
        %v4838 = vunpack.c.h.b16 %v3529
        %v4839 = vunpack.c.l.b16 %v3530
        %v4840 = vunpack.c.h.b16 %v3530
        %v4841 = vunpack.c.l.b16 %v3531
        %v4842 = vunpack.c.h.b16 %v3531
        %v4843 = vunpack.c.l.b16 %v3532
        %v4844 = vunpack.c.h.b16 %v3532
        %v4845 = vunpack.c.l.b16 %v3533
        %v4846 = vunpack.c.h.b16 %v3533
        %v4847 = vunpack.c.l.b16 %v3534
        %v4848 = vunpack.c.h.b16 %v3534
        %v4849 = vunpack.c.l.b16 %v3535
        %v4850 = vunpack.c.h.b16 %v3535
        %v4851 = vunpack.c.l.b16 %v3536
        %v4852 = vunpack.c.h.b16 %v3536
        %v4853 = vunpack.c.l.b16 %v3537
        %v4854 = vunpack.c.h.b16 %v3537
        %v4855 = vpack.c.b16 %v4825, %v4823
        %v4856 = vpack.c.b16 %v4826, %v4824
        %v4857 = vpack.c.b16 %v4829, %v4827
        %v4858 = vpack.c.b16 %v4830, %v4828
        %v4859 = vpack.c.b16 %v4833, %v4831
        %v4860 = vpack.c.b16 %v4834, %v4832
        %v4861 = vpack.c.b16 %v4837, %v4835
        %v4862 = vpack.c.b16 %v4838, %v4836
        %v4863 = vpack.c.b16 %v4841, %v4839
        %v4864 = vpack.c.b16 %v4842, %v4840
        %v4865 = vpack.c.b16 %v4845, %v4843
        %v4866 = vpack.c.b16 %v4846, %v4844
        %v4867 = vpack.c.b16 %v4849, %v4847
        %v4868 = vpack.c.b16 %v4850, %v4848
        %v4869 = vpack.c.b16 %v4853, %v4851
        %v4870 = vpack.c.b16 %v4854, %v4852
        %4887 = vmatprep.subr.bf16.mxu0 %v4856
        %4888 = vmatpush1.bf16.msra.mxu0 %v4855
        %4889 = vmatprep.subr.bf16.mxu0 %v4858
        %4890 = vmatpush1.bf16.msra.mxu0 %v4857
        %4891 = vmatprep.subr.bf16.mxu0 %v4860
        %4892 = vmatpush1.bf16.msra.mxu0 %v4859
        %4893 = vmatprep.subr.bf16.mxu0 %v4862
        %4894 = vmatpush1.bf16.msra.mxu0 %v4861
        %4895 = vmatprep.subr.bf16.mxu0 %v4864
        %4896 = vmatpush1.bf16.msra.mxu0 %v4863
        %4897 = vmatprep.subr.bf16.mxu0 %v4866
        %4898 = vmatpush1.bf16.msra.mxu0 %v4865
        %4899 = vmatprep.subr.bf16.mxu0 %v4868
        %4900 = vmatpush1.bf16.msra.mxu0 %v4867
        %4901 = vmatprep.subr.bf16.mxu0 %v4870
        %4902 = vmatpush1.bf16.msra.mxu0 %v4869
        %4903 = vmatprep.subr.bf16.mxu0 0
        %4904 = vmatpush1.bf16.msra.mxu0 0
        %4905 = vmatprep.subr.bf16.mxu0 0
        %4906 = vmatpush1.bf16.msra.mxu0 0
        %4907 = vmatprep.subr.bf16.mxu0 0
        %4908 = vmatpush1.bf16.msra.mxu0 0
        %4909 = vmatprep.subr.bf16.mxu0 0
        %4910 = vmatpush1.bf16.msra.mxu0 0
        %4911 = vmatprep.subr.bf16.mxu0 0
        %4912 = vmatpush1.bf16.msra.mxu0 0
        %4913 = vmatprep.subr.bf16.mxu0 0
        %4914 = vmatpush1.bf16.msra.mxu0 0
        %4915 = vmatprep.subr.bf16.mxu0 0
        %4916 = vmatpush1.bf16.msra.mxu0 0
        %4917 = vmatprep.subr.bf16.mxu0 0
        %4918 = vmatpush1.bf16.msra.mxu0 0
        %4919 = vmatprep.mubr.bf16.mxu0 0
        %4920 = vmatmul.mubr.bf16.gmra.mrb[0].mxu0 %v4689
        %v4921 = vpop.f32.mrb[0].mxu0
        %v4922 = vadd.f32 %v4599, %v4921
        %v4923 = vpop.f32.mrb[0].mxu0
        %v4924 = vadd.f32 %v4601, %v4923
        %v4925 = vpop.f32.mrb[0].mxu0
        %v4926 = vadd.f32 %v4603, %v4925
        %v4927 = vpop.f32.mrb[0].mxu0
        %v4928 = vadd.f32 %v4605, %v4927
        %4929 = vmatprep.mubr.bf16.mxu0 0
        %4930 = vmatmul.mubr.bf16.gmra.mrb[0].mxu0 %v4738
        %v4931 = vpop.f32.mrb[0].mxu0
        %v4932 = vadd.f32 %v4609, %v4931
        %v4933 = vpop.f32.mrb[0].mxu0
        %v4934 = vadd.f32 %v4611, %v4933
        %v4935 = vpop.f32.mrb[0].mxu0
        %v4936 = vadd.f32 %v4613, %v4935
        %v4937 = vpop.f32.mrb[0].mxu0
        %v4938 = vadd.f32 %v4615, %v4937
        %4939 = vmatprep.mubr.bf16.mxu0 0
        %4940 = vmatmul.mubr.bf16.gmra.mrb[0].mxu0 %v4787
        %v4941 = vpop.f32.mrb[0].mxu0
        %v4942 = vadd.f32 %v4619, %v4941
        %v4943 = vpop.f32.mrb[0].mxu0
        %v4944 = vadd.f32 %v4621, %v4943
        %v4945 = vpop.f32.mrb[0].mxu0
        %v4946 = vadd.f32 %v4623, %v4945
        %v4947 = vpop.f32.mrb[0].mxu0
        %v4948 = vadd.f32 %v4625, %v4947
        %4949 = vmatprep.mubr.bf16.mxu0 0
        %4950 = vmatmul.mubr.bf16.gmra.mrb[0].mxu0 %v4802
        %v4951 = vpop.f32.mrb[0].mxu0
        %v4952 = vadd.f32 %v4629, %v4951
        %v4953 = vpop.f32.mrb[0].mxu0
        %v4954 = vadd.f32 %v4631, %v4953
        %v4955 = vpop.f32.mrb[0].mxu0
        %v4956 = vpop.f32.mrb[0].mxu0
        %4957 = vdwg.mxu0
        %v4959 = vlaneseq
        %v4960 = vshrl.u32 %v4959, 7
        %v4961 = vsub.s32 0, %v4960
        %v4962 = vrot.slane %v3554, %v4961
        %v4963 = vlaneseq
        %v4964 = vshrl.u32 %v4963, 7
        %v4965 = vsub.s32 1, %v4964
        %v4966 = vrot.slane %v3554, %v4965
        %v4969 = vadd.f32 %v4922, %v4962
        %v4970 = vadd.f32 %v4924, %v4966
        %v4971 = vadd.f32 %v4926, %v4962
        %v4972 = vadd.f32 %v4928, %v4966
        %v4973 = vadd.f32 %v4932, %v4962
        %v4974 = vadd.f32 %v4934, %v4966
        %v4975 = vadd.f32 %v4936, %v4962
        %v4976 = vadd.f32 %v4938, %v4966
        %v4977 = vadd.f32 %v4942, %v4962
        %v4978 = vadd.f32 %v4944, %v4966
        %v4979 = vadd.f32 %v4946, %v4962
        %v4980 = vadd.f32 %v4948, %v4966
        %v4981 = vadd.f32 %v4952, %v4962
        %v4982 = vadd.f32 %v4954, %v4966
        %v4983 = vtanh.pop %v4969
        %v4984 = vtanh.pop %v4971
        %v4985 = vtanh.pop %v4973
        %v4986 = vtanh.pop %v4975
        %v4987 = vtanh.pop %v4977
        %v4988 = vtanh.pop %v4979
        %v4989 = vtanh.pop %v4981
        %v4990 = vmul.f32 %v4970, 0.5
        %v4991 = vmul.f32 %v4972, 0.5
        %v4992 = vmul.f32 %v4974, 0.5
        %v4993 = vmul.f32 %v4976, 0.5
        %v4994 = vmul.f32 %v4978, 0.5
        %v4995 = vmul.f32 %v4980, 0.5
        %v4996 = vmul.f32 %v4982, 0.5
        %v4997 = vtanh.pop %v4990
        %v4998 = vtanh.pop %v4991
        %v4999 = vtanh.pop %v4992
        %v5000 = vtanh.pop %v4993
        %v5001 = vtanh.pop %v4994
        %v5002 = vtanh.pop %v4995
        %v5003 = vtanh.pop %v4996
        %v5004 = vadd.f32 %v4997, 1.0
        %v5005 = vadd.f32 %v4998, 1.0
        %v5006 = vadd.f32 %v4999, 1.0
        %v5007 = vadd.f32 %v5000, 1.0
        %v5008 = vadd.f32 %v5001, 1.0
        %v5009 = vadd.f32 %v5002, 1.0
        %v5010 = vadd.f32 %v5003, 1.0
        %v5011 = vmul.f32 %v5004, 0.5
        %v5012 = vmul.f32 %v5005, 0.5
        %v5013 = vmul.f32 %v5006, 0.5
        %v5014 = vmul.f32 %v5007, 0.5
        %v5015 = vmul.f32 %v5008, 0.5
        %v5016 = vmul.f32 %v5009, 0.5
        %v5017 = vmul.f32 %v5010, 0.5
        %v5018 = vmul.f32 %v4983, %v5011
        %v5019 = vmul.f32 %v4984, %v5012
        %v5020 = vmul.f32 %v4985, %v5013
        %v5021 = vmul.f32 %v4986, %v5014
        %v5022 = vmul.f32 %v4987, %v5015
        %v5023 = vmul.f32 %v4988, %v5016
        %v5024 = vmul.f32 %v4989, %v5017
        %v5025 = vpack.c.bf16 %v5019, %v5018
        %v5026 = vpack.c.bf16 %v5021, %v5020
        %v5027 = vpack.c.bf16 %v5023, %v5022
        %v5028 = vpack.c.bf16 %v5024, %v5024
        %v5030 = vlaneseq
        %v5031 = vshrl.u32 %v5030, 7
        %v5032 = vsub.s32 0, %v5031
        %v5033 = vrot.slane %v3571, %v5032
        %v5034 = vlaneseq
        %v5035 = vshrl.u32 %v5034, 7
        %v5036 = vsub.s32 1, %v5035
        %v5037 = vrot.slane %v3571, %v5036
        %v5056 = vunpack.c.l.b16 %v3555
        %v5057 = vunpack.c.h.b16 %v3555
        %v5058 = vunpack.c.l.b16 %v3556
        %v5059 = vunpack.c.h.b16 %v3556
        %v5060 = vunpack.c.l.b16 %v3557
        %v5061 = vunpack.c.h.b16 %v3557
        %v5062 = vunpack.c.l.b16 %v3558
        %v5063 = vunpack.c.h.b16 %v3558
        %v5064 = vunpack.c.l.b16 %v3559
        %v5065 = vunpack.c.h.b16 %v3559
        %v5066 = vunpack.c.l.b16 %v3560
        %v5067 = vunpack.c.h.b16 %v3560
        %v5068 = vunpack.c.l.b16 %v3561
        %v5069 = vunpack.c.h.b16 %v3561
        %v5070 = vunpack.c.l.b16 %v3562
        %v5071 = vunpack.c.h.b16 %v3562
        %v5072 = vunpack.c.l.b16 %v3563
        %v5073 = vunpack.c.h.b16 %v3563
        %v5074 = vunpack.c.l.b16 %v3564
        %v5075 = vunpack.c.h.b16 %v3564
        %v5076 = vunpack.c.l.b16 %v3565
        %v5077 = vunpack.c.h.b16 %v3565
        %v5078 = vunpack.c.l.b16 %v3566
        %v5079 = vunpack.c.h.b16 %v3566
        %v5080 = vunpack.c.l.b16 %v3567
        %v5081 = vunpack.c.h.b16 %v3567
        %v5082 = vunpack.c.l.b16 %v3568
        %v5083 = vunpack.c.h.b16 %v3568
        %v5084 = vunpack.c.l.b16 %v3569
        %v5085 = vunpack.c.h.b16 %v3569
        %v5086 = vunpack.c.l.b16 %v3570
        %v5087 = vunpack.c.h.b16 %v3570
        %v5088 = vpack.c.b16 %v5058, %v5056
        %v5089 = vpack.c.b16 %v5059, %v5057
        %v5090 = vpack.c.b16 %v5062, %v5060
        %v5091 = vpack.c.b16 %v5063, %v5061
        %v5092 = vpack.c.b16 %v5066, %v5064
        %v5093 = vpack.c.b16 %v5067, %v5065
        %v5094 = vpack.c.b16 %v5070, %v5068
        %v5095 = vpack.c.b16 %v5071, %v5069
        %v5096 = vpack.c.b16 %v5074, %v5072
        %v5097 = vpack.c.b16 %v5075, %v5073
        %v5098 = vpack.c.b16 %v5078, %v5076
        %v5099 = vpack.c.b16 %v5079, %v5077
        %v5100 = vpack.c.b16 %v5082, %v5080
        %v5101 = vpack.c.b16 %v5083, %v5081
        %v5102 = vpack.c.b16 %v5086, %v5084
        %v5103 = vpack.c.b16 %v5087, %v5085
        %5120 = vmatprep.subr.bf16.mxu0 %v5089
        %5121 = vmatpush1.bf16.msra.mxu0 %v5088
        %5122 = vmatprep.subr.bf16.mxu0 %v5091
        %5123 = vmatpush1.bf16.msra.mxu0 %v5090
        %5124 = vmatprep.subr.bf16.mxu0 %v5093
        %5125 = vmatpush1.bf16.msra.mxu0 %v5092
        %5126 = vmatprep.subr.bf16.mxu0 %v5095
        %5127 = vmatpush1.bf16.msra.mxu0 %v5094
        %5128 = vmatprep.subr.bf16.mxu0 %v5097
        %5129 = vmatpush1.bf16.msra.mxu0 %v5096
        %5130 = vmatprep.subr.bf16.mxu0 %v5099
        %5131 = vmatpush1.bf16.msra.mxu0 %v5098
        %5132 = vmatprep.subr.bf16.mxu0 %v5101
        %5133 = vmatpush1.bf16.msra.mxu0 %v5100
        %5134 = vmatprep.subr.bf16.mxu0 %v5103
        %5135 = vmatpush1.bf16.msra.mxu0 %v5102
        %5136 = vmatprep.subr.bf16.mxu0 0
        %5137 = vmatpush1.bf16.msra.mxu0 0
        %5138 = vmatprep.subr.bf16.mxu0 0
        %5139 = vmatpush1.bf16.msra.mxu0 0
        %5140 = vmatprep.subr.bf16.mxu0 0
        %5141 = vmatpush1.bf16.msra.mxu0 0
        %5142 = vmatprep.subr.bf16.mxu0 0
        %5143 = vmatpush1.bf16.msra.mxu0 0
        %5144 = vmatprep.subr.bf16.mxu0 0
        %5145 = vmatpush1.bf16.msra.mxu0 0
        %5146 = vmatprep.subr.bf16.mxu0 0
        %5147 = vmatpush1.bf16.msra.mxu0 0
        %5148 = vmatprep.subr.bf16.mxu0 0
        %5149 = vmatpush1.bf16.msra.mxu0 0
        %5150 = vmatprep.subr.bf16.mxu0 0
        %5151 = vmatpush1.bf16.msra.mxu0 0
        %5152 = vmatprep.mubr.bf16.mxu0 0
        %5153 = vmatmul.mubr.bf16.gmra.mrb[0].mxu0 %v5025
        %v5154 = vpop.f32.mrb[0].mxu0
        %v5155 = vadd.f32 %v5033, %v5154
        %v5156 = vpop.f32.mrb[0].mxu0
        %v5157 = vadd.f32 %v5037, %v5156
        %v5158 = vpop.f32.mrb[0].mxu0
        %v5159 = vadd.f32 %v5033, %v5158
        %v5160 = vpop.f32.mrb[0].mxu0
        %v5161 = vadd.f32 %v5037, %v5160
        %5162 = vmatprep.mubr.bf16.mxu0 0
        %5163 = vmatmul.mubr.bf16.gmra.mrb[0].mxu0 %v5026
        %v5164 = vpop.f32.mrb[0].mxu0
        %v5165 = vadd.f32 %v5033, %v5164
        %v5166 = vpop.f32.mrb[0].mxu0
        %v5167 = vadd.f32 %v5037, %v5166
        %v5168 = vpop.f32.mrb[0].mxu0
        %v5169 = vadd.f32 %v5033, %v5168
        %v5170 = vpop.f32.mrb[0].mxu0
        %v5171 = vadd.f32 %v5037, %v5170
        %5172 = vmatprep.mubr.bf16.mxu0 0
        %5173 = vmatmul.mubr.bf16.gmra.mrb[0].mxu0 %v5027
        %v5174 = vpop.f32.mrb[0].mxu0
        %v5175 = vadd.f32 %v5033, %v5174
        %v5176 = vpop.f32.mrb[0].mxu0
        %v5177 = vadd.f32 %v5037, %v5176
        %v5178 = vpop.f32.mrb[0].mxu0
        %v5179 = vadd.f32 %v5033, %v5178
        %v5180 = vpop.f32.mrb[0].mxu0
        %v5181 = vadd.f32 %v5037, %v5180
        %5182 = vmatprep.mubr.bf16.mxu0 0
        %5183 = vmatmul.mubr.bf16.gmra.mrb[0].mxu0 %v5028
        %v5184 = vpop.f32.mrb[0].mxu0
        %v5185 = vadd.f32 %v5033, %v5184
        %v5186 = vpop.f32.mrb[0].mxu0
        %v5187 = vadd.f32 %v5037, %v5186
        %v5188 = vpop.f32.mrb[0].mxu0
        %v5189 = vpop.f32.mrb[0].mxu0
        %5190 = vdwg.mxu0
        %v5198 = vcombine.high %v5155, %v5155
        %v5200 = vunpack.c.l.s4 1966171168
        %v5201 = vunpack.c.0.s8 %v5200
        %v5202 = vlaneseq
        %v5203 = vshrl.u32 %v5202, 7
        %v5204 = vsub.s32 %v5201, %v5203
        %v5205 = vrot.slane %v5155, %v5204
        %v5207 = vunpack.c.l.s4 1966171168
        %v5208 = vunpack.c.0.s8 %v5207
        %v5209 = vlaneseq
        %v5210 = vshrl.u32 %v5209, 7
        %v5211 = vsub.s32 %v5208, %v5210
        %v5212 = vrot.slane %v5198, %v5211
        %v5213 = vcombine.high %v5205, %v5205
        %v5214 = vcombine.high %v5212, %v5212
        %v5216 = vunpack.c.l.s4 1966171168
        %v5217 = vunpack.c.0.s8 %v5216
        %v5218 = vlaneseq
        %v5219 = vshrl.u32 %v5218, 7
        %v5220 = vsub.s32 %v5217, %v5219
        %v5221 = vrot.slane %v5205, %v5220
        %v5223 = vunpack.c.l.s4 1966171168
        %v5224 = vunpack.c.0.s8 %v5223
        %v5225 = vlaneseq
        %v5226 = vshrl.u32 %v5225, 7
        %v5227 = vsub.s32 %v5224, %v5226
        %v5228 = vrot.slane %v5212, %v5227
        %v5230 = vunpack.c.l.s4 1966171168
        %v5231 = vunpack.c.0.s8 %v5230
        %v5232 = vlaneseq
        %v5233 = vshrl.u32 %v5232, 7
        %v5234 = vsub.s32 %v5231, %v5233
        %v5235 = vrot.slane %v5213, %v5234
        %v5237 = vunpack.c.l.s4 1966171168
        %v5238 = vunpack.c.0.s8 %v5237
        %v5239 = vlaneseq
        %v5240 = vshrl.u32 %v5239, 7
        %v5241 = vsub.s32 %v5238, %v5240
        %v5242 = vrot.slane %v5214, %v5241
        %v5243 = vcombine.high %v5221, %v5221
        %v5244 = vcombine.high %v5228, %v5228
        %v5245 = vcombine.high %v5235, %v5235
        %v5246 = vcombine.high %v5242, %v5242
        %v5247 = vcombine.high %v5159, %v5159
        %v5249 = vunpack.c.l.s4 1966171168
        %v5250 = vunpack.c.0.s8 %v5249
        %v5251 = vlaneseq
        %v5252 = vshrl.u32 %v5251, 7
        %v5253 = vsub.s32 %v5250, %v5252
        %v5254 = vrot.slane %v5159, %v5253
        %v5256 = vunpack.c.l.s4 1966171168
        %v5257 = vunpack.c.0.s8 %v5256
        %v5258 = vlaneseq
        %v5259 = vshrl.u32 %v5258, 7
        %v5260 = vsub.s32 %v5257, %v5259
        %v5261 = vrot.slane %v5247, %v5260
        %v5262 = vcombine.high %v5254, %v5254
        %v5263 = vcombine.high %v5261, %v5261
        %v5265 = vunpack.c.l.s4 1966171168
        %v5266 = vunpack.c.0.s8 %v5265
        %v5267 = vlaneseq
        %v5268 = vshrl.u32 %v5267, 7
        %v5269 = vsub.s32 %v5266, %v5268
        %v5270 = vrot.slane %v5254, %v5269
        %v5272 = vunpack.c.l.s4 1966171168
        %v5273 = vunpack.c.0.s8 %v5272
        %v5274 = vlaneseq
        %v5275 = vshrl.u32 %v5274, 7
        %v5276 = vsub.s32 %v5273, %v5275
        %v5277 = vrot.slane %v5261, %v5276
        %v5279 = vunpack.c.l.s4 1966171168
        %v5280 = vunpack.c.0.s8 %v5279
        %v5281 = vlaneseq
        %v5282 = vshrl.u32 %v5281, 7
        %v5283 = vsub.s32 %v5280, %v5282
        %v5284 = vrot.slane %v5262, %v5283
        %v5286 = vunpack.c.l.s4 1966171168
        %v5287 = vunpack.c.0.s8 %v5286
        %v5288 = vlaneseq
        %v5289 = vshrl.u32 %v5288, 7
        %v5290 = vsub.s32 %v5287, %v5289
        %v5291 = vrot.slane %v5263, %v5290
        %v5292 = vcombine.high %v5270, %v5270
        %v5293 = vcombine.high %v5277, %v5277
        %v5294 = vcombine.high %v5284, %v5284
        %v5295 = vcombine.high %v5291, %v5291
        %v5296 = vcombine.high %v5165, %v5165
        %v5298 = vunpack.c.l.s4 1966171168
        %v5299 = vunpack.c.0.s8 %v5298
        %v5300 = vlaneseq
        %v5301 = vshrl.u32 %v5300, 7
        %v5302 = vsub.s32 %v5299, %v5301
        %v5303 = vrot.slane %v5165, %v5302
        %v5305 = vunpack.c.l.s4 1966171168
        %v5306 = vunpack.c.0.s8 %v5305
        %v5307 = vlaneseq
        %v5308 = vshrl.u32 %v5307, 7
        %v5309 = vsub.s32 %v5306, %v5308
        %v5310 = vrot.slane %v5296, %v5309
        %v5311 = vcombine.high %v5303, %v5303
        %v5312 = vcombine.high %v5310, %v5310
        %v5314 = vunpack.c.l.s4 1966171168
        %v5315 = vunpack.c.0.s8 %v5314
        %v5316 = vlaneseq
        %v5317 = vshrl.u32 %v5316, 7
        %v5318 = vsub.s32 %v5315, %v5317
        %v5319 = vrot.slane %v5303, %v5318
        %v5321 = vunpack.c.l.s4 1966171168
        %v5322 = vunpack.c.0.s8 %v5321
        %v5323 = vlaneseq
        %v5324 = vshrl.u32 %v5323, 7
        %v5325 = vsub.s32 %v5322, %v5324
        %v5326 = vrot.slane %v5310, %v5325
        %v5328 = vunpack.c.l.s4 1966171168
        %v5329 = vunpack.c.0.s8 %v5328
        %v5330 = vlaneseq
        %v5331 = vshrl.u32 %v5330, 7
        %v5332 = vsub.s32 %v5329, %v5331
        %v5333 = vrot.slane %v5311, %v5332
        %v5335 = vunpack.c.l.s4 1966171168
        %v5336 = vunpack.c.0.s8 %v5335
        %v5337 = vlaneseq
        %v5338 = vshrl.u32 %v5337, 7
        %v5339 = vsub.s32 %v5336, %v5338
        %v5340 = vrot.slane %v5312, %v5339
        %v5341 = vcombine.high %v5319, %v5319
        %v5342 = vcombine.high %v5326, %v5326
        %v5343 = vcombine.high %v5333, %v5333
        %v5344 = vcombine.high %v5340, %v5340
        %v5345 = vcombine.high %v5169, %v5169
        %v5347 = vunpack.c.l.s4 1966171168
        %v5348 = vunpack.c.0.s8 %v5347
        %v5349 = vlaneseq
        %v5350 = vshrl.u32 %v5349, 7
        %v5351 = vsub.s32 %v5348, %v5350
        %v5352 = vrot.slane %v5169, %v5351
        %v5354 = vunpack.c.l.s4 1966171168
        %v5355 = vunpack.c.0.s8 %v5354
        %v5356 = vlaneseq
        %v5357 = vshrl.u32 %v5356, 7
        %v5358 = vsub.s32 %v5355, %v5357
        %v5359 = vrot.slane %v5345, %v5358
        %v5360 = vcombine.high %v5352, %v5352
        %v5361 = vcombine.high %v5359, %v5359
        %v5363 = vunpack.c.l.s4 1966171168
        %v5364 = vunpack.c.0.s8 %v5363
        %v5365 = vlaneseq
        %v5366 = vshrl.u32 %v5365, 7
        %v5367 = vsub.s32 %v5364, %v5366
        %v5368 = vrot.slane %v5352, %v5367
        %v5370 = vunpack.c.l.s4 1966171168
        %v5371 = vunpack.c.0.s8 %v5370
        %v5372 = vlaneseq
        %v5373 = vshrl.u32 %v5372, 7
        %v5374 = vsub.s32 %v5371, %v5373
        %v5375 = vrot.slane %v5359, %v5374
        %v5377 = vunpack.c.l.s4 1966171168
        %v5378 = vunpack.c.0.s8 %v5377
        %v5379 = vlaneseq
        %v5380 = vshrl.u32 %v5379, 7
        %v5381 = vsub.s32 %v5378, %v5380
        %v5382 = vrot.slane %v5360, %v5381
        %v5384 = vunpack.c.l.s4 1966171168
        %v5385 = vunpack.c.0.s8 %v5384
        %v5386 = vlaneseq
        %v5387 = vshrl.u32 %v5386, 7
        %v5388 = vsub.s32 %v5385, %v5387
        %v5389 = vrot.slane %v5361, %v5388
        %v5390 = vcombine.high %v5368, %v5368
        %v5391 = vcombine.high %v5375, %v5375
        %v5392 = vcombine.high %v5382, %v5382
        %v5393 = vcombine.high %v5389, %v5389
        %v5394 = vcombine.high %v5175, %v5175
        %v5396 = vunpack.c.l.s4 1966171168
        %v5397 = vunpack.c.0.s8 %v5396
        %v5398 = vlaneseq
        %v5399 = vshrl.u32 %v5398, 7
        %v5400 = vsub.s32 %v5397, %v5399
        %v5401 = vrot.slane %v5175, %v5400
        %v5403 = vunpack.c.l.s4 1966171168
        %v5404 = vunpack.c.0.s8 %v5403
        %v5405 = vlaneseq
        %v5406 = vshrl.u32 %v5405, 7
        %v5407 = vsub.s32 %v5404, %v5406
        %v5408 = vrot.slane %v5394, %v5407
        %v5409 = vcombine.high %v5401, %v5401
        %v5410 = vcombine.high %v5408, %v5408
        %v5412 = vunpack.c.l.s4 1966171168
        %v5413 = vunpack.c.0.s8 %v5412
        %v5414 = vlaneseq
        %v5415 = vshrl.u32 %v5414, 7
        %v5416 = vsub.s32 %v5413, %v5415
        %v5417 = vrot.slane %v5401, %v5416
        %v5419 = vunpack.c.l.s4 1966171168
        %v5420 = vunpack.c.0.s8 %v5419
        %v5421 = vlaneseq
        %v5422 = vshrl.u32 %v5421, 7
        %v5423 = vsub.s32 %v5420, %v5422
        %v5424 = vrot.slane %v5408, %v5423
        %v5426 = vunpack.c.l.s4 1966171168
        %v5427 = vunpack.c.0.s8 %v5426
        %v5428 = vlaneseq
        %v5429 = vshrl.u32 %v5428, 7
        %v5430 = vsub.s32 %v5427, %v5429
        %v5431 = vrot.slane %v5409, %v5430
        %v5433 = vunpack.c.l.s4 1966171168
        %v5434 = vunpack.c.0.s8 %v5433
        %v5435 = vlaneseq
        %v5436 = vshrl.u32 %v5435, 7
        %v5437 = vsub.s32 %v5434, %v5436
        %v5438 = vrot.slane %v5410, %v5437
        %v5439 = vcombine.high %v5417, %v5417
        %v5440 = vcombine.high %v5424, %v5424
        %v5441 = vcombine.high %v5431, %v5431
        %v5442 = vcombine.high %v5438, %v5438
        %v5443 = vcombine.high %v5179, %v5179
        %v5445 = vunpack.c.l.s4 1966171168
        %v5446 = vunpack.c.0.s8 %v5445
        %v5447 = vlaneseq
        %v5448 = vshrl.u32 %v5447, 7
        %v5449 = vsub.s32 %v5446, %v5448
        %v5450 = vrot.slane %v5179, %v5449
        %v5452 = vunpack.c.l.s4 1966171168
        %v5453 = vunpack.c.0.s8 %v5452
        %v5454 = vlaneseq
        %v5455 = vshrl.u32 %v5454, 7
        %v5456 = vsub.s32 %v5453, %v5455
        %v5457 = vrot.slane %v5443, %v5456
        %v5458 = vcombine.high %v5450, %v5450
        %v5459 = vcombine.high %v5457, %v5457
        %v5461 = vunpack.c.l.s4 1966171168
        %v5462 = vunpack.c.0.s8 %v5461
        %v5463 = vlaneseq
        %v5464 = vshrl.u32 %v5463, 7
        %v5465 = vsub.s32 %v5462, %v5464
        %v5466 = vrot.slane %v5450, %v5465
        %v5468 = vunpack.c.l.s4 1966171168
        %v5469 = vunpack.c.0.s8 %v5468
        %v5470 = vlaneseq
        %v5471 = vshrl.u32 %v5470, 7
        %v5472 = vsub.s32 %v5469, %v5471
        %v5473 = vrot.slane %v5457, %v5472
        %v5475 = vunpack.c.l.s4 1966171168
        %v5476 = vunpack.c.0.s8 %v5475
        %v5477 = vlaneseq
        %v5478 = vshrl.u32 %v5477, 7
        %v5479 = vsub.s32 %v5476, %v5478
        %v5480 = vrot.slane %v5458, %v5479
        %v5482 = vunpack.c.l.s4 1966171168
        %v5483 = vunpack.c.0.s8 %v5482
        %v5484 = vlaneseq
        %v5485 = vshrl.u32 %v5484, 7
        %v5486 = vsub.s32 %v5483, %v5485
        %v5487 = vrot.slane %v5459, %v5486
        %v5488 = vcombine.high %v5466, %v5466
        %v5489 = vcombine.high %v5473, %v5473
        %v5490 = vcombine.high %v5480, %v5480
        %v5491 = vcombine.high %v5487, %v5487
        %v5493 = vunpack.c.l.s4 1966171168
        %v5494 = vunpack.c.0.s8 %v5493
        %v5495 = vlaneseq
        %v5496 = vshrl.u32 %v5495, 7
        %v5497 = vsub.s32 %v5494, %v5496
        %v5498 = vrot.slane %v5185, %v5497
        %v5499 = vcombine.high %v5498, %v5498
        %v5501 = vunpack.c.l.s4 1966171168
        %v5502 = vunpack.c.0.s8 %v5501
        %v5503 = vlaneseq
        %v5504 = vshrl.u32 %v5503, 7
        %v5505 = vsub.s32 %v5502, %v5504
        %v5506 = vrot.slane %v5498, %v5505
        %v5508 = vunpack.c.l.s4 1966171168
        %v5509 = vunpack.c.0.s8 %v5508
        %v5510 = vlaneseq
        %v5511 = vshrl.u32 %v5510, 7
        %v5512 = vsub.s32 %v5509, %v5511
        %v5513 = vrot.slane %v5499, %v5512
        %v5514 = vcombine.high %v5506, %v5506
        %v5515 = vcombine.high %v5513, %v5513
        %v5516 = vcombine.low %v5221, %v5235
        %v5517 = vcombine.low %v5243, %v5245
        %v5518 = vcombine.low %v5228, %v5242
        %v5519 = vcombine.low %v5244, %v5246
        %v5521 = vunpack.c.l.s4 1966171168
        %v5522 = vunpack.c.0.s8 %v5521
        %v5523 = vlaneseq
        %v5524 = vshrl.u32 %v5523, 7
        %v5525 = vsub.s32 %v5522, %v5524
        %v5526 = vrot.slane %v5516, %v5525
        %v5528 = vunpack.c.l.s4 1966171168
        %v5529 = vunpack.c.0.s8 %v5528
        %v5530 = vlaneseq
        %v5531 = vshrl.u32 %v5530, 7
        %v5532 = vsub.s32 %v5529, %v5531
        %v5533 = vrot.slane %v5517, %v5532
        %v5535 = vunpack.c.l.s4 1966171168
        %v5536 = vunpack.c.0.s8 %v5535
        %v5537 = vlaneseq
        %v5538 = vshrl.u32 %v5537, 7
        %v5539 = vsub.s32 %v5536, %v5538
        %v5540 = vrot.slane %v5518, %v5539
        %v5542 = vunpack.c.l.s4 1966171168
        %v5543 = vunpack.c.0.s8 %v5542
        %v5544 = vlaneseq
        %v5545 = vshrl.u32 %v5544, 7
        %v5546 = vsub.s32 %v5543, %v5545
        %v5547 = vrot.slane %v5519, %v5546
        %v5548 = vcombine.low %v5526, %v5533
        %v5549 = vcombine.low %v5540, %v5547
        %v5551 = vunpack.c.l.s4 1966171168
        %v5552 = vunpack.c.0.s8 %v5551
        %v5553 = vlaneseq
        %v5554 = vshrl.u32 %v5553, 7
        %v5555 = vsub.s32 %v5552, %v5554
        %v5556 = vrot.slane %v5548, %v5555
        %v5558 = vunpack.c.l.s4 1966171168
        %v5559 = vunpack.c.0.s8 %v5558
        %v5560 = vlaneseq
        %v5561 = vshrl.u32 %v5560, 7
        %v5562 = vsub.s32 %v5559, %v5561
        %v5563 = vrot.slane %v5549, %v5562
        %v5564 = vcombine.low %v5556, %v5563
        %v5565 = vcombine.low %v5270, %v5284
        %v5566 = vcombine.low %v5292, %v5294
        %v5568 = vunpack.c.l.s4 1966171168
        %v5569 = vunpack.c.0.s8 %v5568
        %v5570 = vlaneseq
        %v5571 = vshrl.u32 %v5570, 7
        %v5572 = vsub.s32 %v5569, %v5571
        %v5573 = vrot.slane %v5565, %v5572
        %v5575 = vunpack.c.l.s4 1966171168
        %v5576 = vunpack.c.0.s8 %v5575
        %v5577 = vlaneseq
        %v5578 = vshrl.u32 %v5577, 7
        %v5579 = vsub.s32 %v5576, %v5578
        %v5580 = vrot.slane %v5566, %v5579
        %v5582 = vunpack.c.l.s4 1966171168
        %v5583 = vunpack.c.0.s8 %v5582
        %v5584 = vlaneseq
        %v5585 = vshrl.u32 %v5584, 7
        %v5586 = vsub.s32 %v5583, %v5585
        %v5587 = vrot.slane %v5277, %v5586
        %v5588 = vcombine.low %v5573, %v5580
        %v5590 = vunpack.c.l.s4 1966171168
        %v5591 = vunpack.c.0.s8 %v5590
        %v5592 = vlaneseq
        %v5593 = vshrl.u32 %v5592, 7
        %v5594 = vsub.s32 %v5591, %v5593
        %v5595 = vrot.slane %v5588, %v5594
        %v5597 = vunpack.c.l.s4 1966171168
        %v5598 = vunpack.c.0.s8 %v5597
        %v5599 = vlaneseq
        %v5600 = vshrl.u32 %v5599, 7
        %v5601 = vsub.s32 %v5598, %v5600
        %v5602 = vrot.slane %v5587, %v5601
        %v5603 = vcombine.low %v5595, %v5602
        %v5604 = vcombine.low %v5291, %v5293
        %v5605 = vcombine.low %v5295, %v5319
        %v5606 = vcombine.low %v5333, %v5341
        %v5607 = vcombine.low %v5343, %v5326
        %v5609 = vunpack.c.l.s4 1966171168
        %v5610 = vunpack.c.0.s8 %v5609
        %v5611 = vlaneseq
        %v5612 = vshrl.u32 %v5611, 7
        %v5613 = vsub.s32 %v5610, %v5612
        %v5614 = vrot.slane %v5604, %v5613
        %v5616 = vunpack.c.l.s4 1966171168
        %v5617 = vunpack.c.0.s8 %v5616
        %v5618 = vlaneseq
        %v5619 = vshrl.u32 %v5618, 7
        %v5620 = vsub.s32 %v5617, %v5619
        %v5621 = vrot.slane %v5605, %v5620
        %v5623 = vunpack.c.l.s4 1966171168
        %v5624 = vunpack.c.0.s8 %v5623
        %v5625 = vlaneseq
        %v5626 = vshrl.u32 %v5625, 7
        %v5627 = vsub.s32 %v5624, %v5626
        %v5628 = vrot.slane %v5606, %v5627
        %v5630 = vunpack.c.l.s4 1966171168
        %v5631 = vunpack.c.0.s8 %v5630
        %v5632 = vlaneseq
        %v5633 = vshrl.u32 %v5632, 7
        %v5634 = vsub.s32 %v5631, %v5633
        %v5635 = vrot.slane %v5607, %v5634
        %v5636 = vcombine.low %v5614, %v5621
        %v5637 = vcombine.low %v5628, %v5635
        %v5639 = vunpack.c.l.s4 1966171168
        %v5640 = vunpack.c.0.s8 %v5639
        %v5641 = vlaneseq
        %v5642 = vshrl.u32 %v5641, 7
        %v5643 = vsub.s32 %v5640, %v5642
        %v5644 = vrot.slane %v5636, %v5643
        %v5646 = vunpack.c.l.s4 1966171168
        %v5647 = vunpack.c.0.s8 %v5646
        %v5648 = vlaneseq
        %v5649 = vshrl.u32 %v5648, 7
        %v5650 = vsub.s32 %v5647, %v5649
        %v5651 = vrot.slane %v5637, %v5650
        %v5652 = vcombine.low %v5644, %v5651
        %v5653 = vcombine.low %v5340, %v5342
        %v5654 = vcombine.low %v5344, %v5368
        %v5656 = vunpack.c.l.s4 1966171168
        %v5657 = vunpack.c.0.s8 %v5656
        %v5658 = vlaneseq
        %v5659 = vshrl.u32 %v5658, 7
        %v5660 = vsub.s32 %v5657, %v5659
        %v5661 = vrot.slane %v5653, %v5660
        %v5663 = vunpack.c.l.s4 1966171168
        %v5664 = vunpack.c.0.s8 %v5663
        %v5665 = vlaneseq
        %v5666 = vshrl.u32 %v5665, 7
        %v5667 = vsub.s32 %v5664, %v5666
        %v5668 = vrot.slane %v5654, %v5667
        %v5670 = vunpack.c.l.s4 1966171168
        %v5671 = vunpack.c.0.s8 %v5670
        %v5672 = vlaneseq
        %v5673 = vshrl.u32 %v5672, 7
        %v5674 = vsub.s32 %v5671, %v5673
        %v5675 = vrot.slane %v5382, %v5674
        %v5676 = vcombine.low %v5661, %v5668
        %v5678 = vunpack.c.l.s4 1966171168
        %v5679 = vunpack.c.0.s8 %v5678
        %v5680 = vlaneseq
        %v5681 = vshrl.u32 %v5680, 7
        %v5682 = vsub.s32 %v5679, %v5681
        %v5683 = vrot.slane %v5676, %v5682
        %v5685 = vunpack.c.l.s4 1966171168
        %v5686 = vunpack.c.0.s8 %v5685
        %v5687 = vlaneseq
        %v5688 = vshrl.u32 %v5687, 7
        %v5689 = vsub.s32 %v5686, %v5688
        %v5690 = vrot.slane %v5675, %v5689
        %v5691 = vcombine.low %v5683, %v5690
        %v5692 = vcombine.low %v5390, %v5392
        %v5693 = vcombine.low %v5375, %v5389
        %v5694 = vcombine.low %v5391, %v5393
        %v5695 = vcombine.low %v5417, %v5431
        %v5697 = vunpack.c.l.s4 1966171168
        %v5698 = vunpack.c.0.s8 %v5697
        %v5699 = vlaneseq
        %v5700 = vshrl.u32 %v5699, 7
        %v5701 = vsub.s32 %v5698, %v5700
        %v5702 = vrot.slane %v5692, %v5701
        %v5704 = vunpack.c.l.s4 1966171168
        %v5705 = vunpack.c.0.s8 %v5704
        %v5706 = vlaneseq
        %v5707 = vshrl.u32 %v5706, 7
        %v5708 = vsub.s32 %v5705, %v5707
        %v5709 = vrot.slane %v5693, %v5708
        %v5711 = vunpack.c.l.s4 1966171168
        %v5712 = vunpack.c.0.s8 %v5711
        %v5713 = vlaneseq
        %v5714 = vshrl.u32 %v5713, 7
        %v5715 = vsub.s32 %v5712, %v5714
        %v5716 = vrot.slane %v5694, %v5715
        %v5718 = vunpack.c.l.s4 1966171168
        %v5719 = vunpack.c.0.s8 %v5718
        %v5720 = vlaneseq
        %v5721 = vshrl.u32 %v5720, 7
        %v5722 = vsub.s32 %v5719, %v5721
        %v5723 = vrot.slane %v5695, %v5722
        %v5724 = vcombine.low %v5702, %v5709
        %v5725 = vcombine.low %v5716, %v5723
        %v5727 = vunpack.c.l.s4 1966171168
        %v5728 = vunpack.c.0.s8 %v5727
        %v5729 = vlaneseq
        %v5730 = vshrl.u32 %v5729, 7
        %v5731 = vsub.s32 %v5728, %v5730
        %v5732 = vrot.slane %v5724, %v5731
        %v5734 = vunpack.c.l.s4 1966171168
        %v5735 = vunpack.c.0.s8 %v5734
        %v5736 = vlaneseq
        %v5737 = vshrl.u32 %v5736, 7
        %v5738 = vsub.s32 %v5735, %v5737
        %v5739 = vrot.slane %v5725, %v5738
        %v5740 = vcombine.low %v5732, %v5739
        %v5741 = vcombine.low %v5439, %v5441
        %v5742 = vcombine.low %v5424, %v5438
        %v5744 = vunpack.c.l.s4 1966171168
        %v5745 = vunpack.c.0.s8 %v5744
        %v5746 = vlaneseq
        %v5747 = vshrl.u32 %v5746, 7
        %v5748 = vsub.s32 %v5745, %v5747
        %v5749 = vrot.slane %v5741, %v5748
        %v5751 = vunpack.c.l.s4 1966171168
        %v5752 = vunpack.c.0.s8 %v5751
        %v5753 = vlaneseq
        %v5754 = vshrl.u32 %v5753, 7
        %v5755 = vsub.s32 %v5752, %v5754
        %v5756 = vrot.slane %v5742, %v5755
        %v5758 = vunpack.c.l.s4 1966171168
        %v5759 = vunpack.c.0.s8 %v5758
        %v5760 = vlaneseq
        %v5761 = vshrl.u32 %v5760, 7
        %v5762 = vsub.s32 %v5759, %v5761
        %v5763 = vrot.slane %v5440, %v5762
        %v5764 = vcombine.low %v5749, %v5756
        %v5766 = vunpack.c.l.s4 1966171168
        %v5767 = vunpack.c.0.s8 %v5766
        %v5768 = vlaneseq
        %v5769 = vshrl.u32 %v5768, 7
        %v5770 = vsub.s32 %v5767, %v5769
        %v5771 = vrot.slane %v5764, %v5770
        %v5773 = vunpack.c.l.s4 1966171168
        %v5774 = vunpack.c.0.s8 %v5773
        %v5775 = vlaneseq
        %v5776 = vshrl.u32 %v5775, 7
        %v5777 = vsub.s32 %v5774, %v5776
        %v5778 = vrot.slane %v5763, %v5777
        %v5779 = vcombine.low %v5771, %v5778
        %v5780 = vcombine.low %v5442, %v5466
        %v5781 = vcombine.low %v5480, %v5488
        %v5782 = vcombine.low %v5490, %v5473
        %v5783 = vcombine.low %v5487, %v5489
        %v5785 = vunpack.c.l.s4 1966171168
        %v5786 = vunpack.c.0.s8 %v5785
        %v5787 = vlaneseq
        %v5788 = vshrl.u32 %v5787, 7
        %v5789 = vsub.s32 %v5786, %v5788
        %v5790 = vrot.slane %v5780, %v5789
        %v5792 = vunpack.c.l.s4 1966171168
        %v5793 = vunpack.c.0.s8 %v5792
        %v5794 = vlaneseq
        %v5795 = vshrl.u32 %v5794, 7
        %v5796 = vsub.s32 %v5793, %v5795
        %v5797 = vrot.slane %v5781, %v5796
        %v5799 = vunpack.c.l.s4 1966171168
        %v5800 = vunpack.c.0.s8 %v5799
        %v5801 = vlaneseq
        %v5802 = vshrl.u32 %v5801, 7
        %v5803 = vsub.s32 %v5800, %v5802
        %v5804 = vrot.slane %v5782, %v5803
        %v5806 = vunpack.c.l.s4 1966171168
        %v5807 = vunpack.c.0.s8 %v5806
        %v5808 = vlaneseq
        %v5809 = vshrl.u32 %v5808, 7
        %v5810 = vsub.s32 %v5807, %v5809
        %v5811 = vrot.slane %v5783, %v5810
        %v5812 = vcombine.low %v5790, %v5797
        %v5813 = vcombine.low %v5804, %v5811
        %v5815 = vunpack.c.l.s4 1966171168
        %v5816 = vunpack.c.0.s8 %v5815
        %v5817 = vlaneseq
        %v5818 = vshrl.u32 %v5817, 7
        %v5819 = vsub.s32 %v5816, %v5818
        %v5820 = vrot.slane %v5812, %v5819
        %v5822 = vunpack.c.l.s4 1966171168
        %v5823 = vunpack.c.0.s8 %v5822
        %v5824 = vlaneseq
        %v5825 = vshrl.u32 %v5824, 7
        %v5826 = vsub.s32 %v5823, %v5825
        %v5827 = vrot.slane %v5813, %v5826
        %v5828 = vcombine.low %v5820, %v5827
        %v5829 = vcombine.low %v5491, %v5506
        %v5830 = vcombine.low %v5513, %v5514
        %v5832 = vunpack.c.l.s4 1966171168
        %v5833 = vunpack.c.0.s8 %v5832
        %v5834 = vlaneseq
        %v5835 = vshrl.u32 %v5834, 7
        %v5836 = vsub.s32 %v5833, %v5835
        %v5837 = vrot.slane %v5829, %v5836
        %v5839 = vunpack.c.l.s4 1966171168
        %v5840 = vunpack.c.0.s8 %v5839
        %v5841 = vlaneseq
        %v5842 = vshrl.u32 %v5841, 7
        %v5843 = vsub.s32 %v5840, %v5842
        %v5844 = vrot.slane %v5830, %v5843
        %v5846 = vunpack.c.l.s4 1966171168
        %v5847 = vunpack.c.0.s8 %v5846
        %v5848 = vlaneseq
        %v5849 = vshrl.u32 %v5848, 7
        %v5850 = vsub.s32 %v5847, %v5849
        %v5851 = vrot.slane %v5515, %v5850
        %v5852 = vcombine.low %v5837, %v5844
        %v5854 = vunpack.c.l.s4 1966171168
        %v5855 = vunpack.c.0.s8 %v5854
        %v5856 = vlaneseq
        %v5857 = vshrl.u32 %v5856, 7
        %v5858 = vsub.s32 %v5855, %v5857
        %v5859 = vrot.slane %v5852, %v5858
        %v5861 = vunpack.c.l.s4 1966171168
        %v5862 = vunpack.c.0.s8 %v5861
        %v5863 = vlaneseq
        %v5864 = vshrl.u32 %v5863, 7
        %v5865 = vsub.s32 %v5862, %v5864
        %v5866 = vrot.slane %v5851, %v5865
        %v5867 = vcombine.low %v5859, %v5866
        %5876 = vst [vmem:[%s468] sm:$0xff] %v5564
        %5877 = vst [vmem:[%s468 + $0x8] sm:$0x1f] %v5603
        %5878 = vst [vmem:[%s468 + $0x10] sm:$0xff] %v5652
        %5879 = vst [vmem:[%s468 + $0x18] sm:$0x1f] %v5691
        %5880 = vst [vmem:[%s468 + $0x20] sm:$0xff] %v5740
        %5881 = vst [vmem:[%s468 + $0x28] sm:$0x1f] %v5779
        %5882 = vst [vmem:[%s468 + $0x30] sm:$0xff] %v5828
        %5883 = vst [vmem:[%s468 + $0x38] sm:$0x1f] %v5867
        %v5891 = vcombine.high %v5157, %v5157
        %v5893 = vunpack.c.l.s4 1966171168
        %v5894 = vunpack.c.0.s8 %v5893
        %v5895 = vlaneseq
        %v5896 = vshrl.u32 %v5895, 7
        %v5897 = vsub.s32 %v5894, %v5896
        %v5898 = vrot.slane %v5157, %v5897
        %v5900 = vunpack.c.l.s4 1966171168
        %v5901 = vunpack.c.0.s8 %v5900
        %v5902 = vlaneseq
        %v5903 = vshrl.u32 %v5902, 7
        %v5904 = vsub.s32 %v5901, %v5903
        %v5905 = vrot.slane %v5891, %v5904
        %v5906 = vcombine.high %v5898, %v5898
        %v5907 = vcombine.high %v5905, %v5905
        %v5909 = vunpack.c.l.s4 1966171168
        %v5910 = vunpack.c.0.s8 %v5909
        %v5911 = vlaneseq
        %v5912 = vshrl.u32 %v5911, 7
        %v5913 = vsub.s32 %v5910, %v5912
        %v5914 = vrot.slane %v5898, %v5913
        %v5916 = vunpack.c.l.s4 1966171168
        %v5917 = vunpack.c.0.s8 %v5916
        %v5918 = vlaneseq
        %v5919 = vshrl.u32 %v5918, 7
        %v5920 = vsub.s32 %v5917, %v5919
        %v5921 = vrot.slane %v5905, %v5920
        %v5923 = vunpack.c.l.s4 1966171168
        %v5924 = vunpack.c.0.s8 %v5923
        %v5925 = vlaneseq
        %v5926 = vshrl.u32 %v5925, 7
        %v5927 = vsub.s32 %v5924, %v5926
        %v5928 = vrot.slane %v5906, %v5927
        %v5930 = vunpack.c.l.s4 1966171168
        %v5931 = vunpack.c.0.s8 %v5930
        %v5932 = vlaneseq
        %v5933 = vshrl.u32 %v5932, 7
        %v5934 = vsub.s32 %v5931, %v5933
        %v5935 = vrot.slane %v5907, %v5934
        %v5936 = vcombine.high %v5914, %v5914
        %v5937 = vcombine.high %v5921, %v5921
        %v5938 = vcombine.high %v5928, %v5928
        %v5939 = vcombine.high %v5935, %v5935
        %v5940 = vcombine.high %v5161, %v5161
        %v5942 = vunpack.c.l.s4 1966171168
        %v5943 = vunpack.c.0.s8 %v5942
        %v5944 = vlaneseq
        %v5945 = vshrl.u32 %v5944, 7
        %v5946 = vsub.s32 %v5943, %v5945
        %v5947 = vrot.slane %v5161, %v5946
        %v5949 = vunpack.c.l.s4 1966171168
        %v5950 = vunpack.c.0.s8 %v5949
        %v5951 = vlaneseq
        %v5952 = vshrl.u32 %v5951, 7
        %v5953 = vsub.s32 %v5950, %v5952
        %v5954 = vrot.slane %v5940, %v5953
        %v5955 = vcombine.high %v5947, %v5947
        %v5956 = vcombine.high %v5954, %v5954
        %v5958 = vunpack.c.l.s4 1966171168
        %v5959 = vunpack.c.0.s8 %v5958
        %v5960 = vlaneseq
        %v5961 = vshrl.u32 %v5960, 7
        %v5962 = vsub.s32 %v5959, %v5961
        %v5963 = vrot.slane %v5947, %v5962
        %v5965 = vunpack.c.l.s4 1966171168
        %v5966 = vunpack.c.0.s8 %v5965
        %v5967 = vlaneseq
        %v5968 = vshrl.u32 %v5967, 7
        %v5969 = vsub.s32 %v5966, %v5968
        %v5970 = vrot.slane %v5954, %v5969
        %v5972 = vunpack.c.l.s4 1966171168
        %v5973 = vunpack.c.0.s8 %v5972
        %v5974 = vlaneseq
        %v5975 = vshrl.u32 %v5974, 7
        %v5976 = vsub.s32 %v5973, %v5975
        %v5977 = vrot.slane %v5955, %v5976
        %v5979 = vunpack.c.l.s4 1966171168
        %v5980 = vunpack.c.0.s8 %v5979
        %v5981 = vlaneseq
        %v5982 = vshrl.u32 %v5981, 7
        %v5983 = vsub.s32 %v5980, %v5982
        %v5984 = vrot.slane %v5956, %v5983
        %v5985 = vcombine.high %v5963, %v5963
        %v5986 = vcombine.high %v5970, %v5970
        %v5987 = vcombine.high %v5977, %v5977
        %v5988 = vcombine.high %v5984, %v5984
        %v5989 = vcombine.high %v5167, %v5167
        %v5991 = vunpack.c.l.s4 1966171168
        %v5992 = vunpack.c.0.s8 %v5991
        %v5993 = vlaneseq
        %v5994 = vshrl.u32 %v5993, 7
        %v5995 = vsub.s32 %v5992, %v5994
        %v5996 = vrot.slane %v5167, %v5995
        %v5998 = vunpack.c.l.s4 1966171168
        %v5999 = vunpack.c.0.s8 %v5998
        %v6000 = vlaneseq
        %v6001 = vshrl.u32 %v6000, 7
        %v6002 = vsub.s32 %v5999, %v6001
        %v6003 = vrot.slane %v5989, %v6002
        %v6004 = vcombine.high %v5996, %v5996
        %v6005 = vcombine.high %v6003, %v6003
        %v6007 = vunpack.c.l.s4 1966171168
        %v6008 = vunpack.c.0.s8 %v6007
        %v6009 = vlaneseq
        %v6010 = vshrl.u32 %v6009, 7
        %v6011 = vsub.s32 %v6008, %v6010
        %v6012 = vrot.slane %v5996, %v6011
        %v6014 = vunpack.c.l.s4 1966171168
        %v6015 = vunpack.c.0.s8 %v6014
        %v6016 = vlaneseq
        %v6017 = vshrl.u32 %v6016, 7
        %v6018 = vsub.s32 %v6015, %v6017
        %v6019 = vrot.slane %v6003, %v6018
        %v6021 = vunpack.c.l.s4 1966171168
        %v6022 = vunpack.c.0.s8 %v6021
        %v6023 = vlaneseq
        %v6024 = vshrl.u32 %v6023, 7
        %v6025 = vsub.s32 %v6022, %v6024
        %v6026 = vrot.slane %v6004, %v6025
        %v6028 = vunpack.c.l.s4 1966171168
        %v6029 = vunpack.c.0.s8 %v6028
        %v6030 = vlaneseq
        %v6031 = vshrl.u32 %v6030, 7
        %v6032 = vsub.s32 %v6029, %v6031
        %v6033 = vrot.slane %v6005, %v6032
        %v6034 = vcombine.high %v6012, %v6012
        %v6035 = vcombine.high %v6019, %v6019
        %v6036 = vcombine.high %v6026, %v6026
        %v6037 = vcombine.high %v6033, %v6033
        %v6038 = vcombine.high %v5171, %v5171
        %v6040 = vunpack.c.l.s4 1966171168
        %v6041 = vunpack.c.0.s8 %v6040
        %v6042 = vlaneseq
        %v6043 = vshrl.u32 %v6042, 7
        %v6044 = vsub.s32 %v6041, %v6043
        %v6045 = vrot.slane %v5171, %v6044
        %v6047 = vunpack.c.l.s4 1966171168
        %v6048 = vunpack.c.0.s8 %v6047
        %v6049 = vlaneseq
        %v6050 = vshrl.u32 %v6049, 7
        %v6051 = vsub.s32 %v6048, %v6050
        %v6052 = vrot.slane %v6038, %v6051
        %v6053 = vcombine.high %v6045, %v6045
        %v6054 = vcombine.high %v6052, %v6052
        %v6056 = vunpack.c.l.s4 1966171168
        %v6057 = vunpack.c.0.s8 %v6056
        %v6058 = vlaneseq
        %v6059 = vshrl.u32 %v6058, 7
        %v6060 = vsub.s32 %v6057, %v6059
        %v6061 = vrot.slane %v6045, %v6060
        %v6063 = vunpack.c.l.s4 1966171168
        %v6064 = vunpack.c.0.s8 %v6063
        %v6065 = vlaneseq
        %v6066 = vshrl.u32 %v6065, 7
        %v6067 = vsub.s32 %v6064, %v6066
        %v6068 = vrot.slane %v6052, %v6067
        %v6070 = vunpack.c.l.s4 1966171168
        %v6071 = vunpack.c.0.s8 %v6070
        %v6072 = vlaneseq
        %v6073 = vshrl.u32 %v6072, 7
        %v6074 = vsub.s32 %v6071, %v6073
        %v6075 = vrot.slane %v6053, %v6074
        %v6077 = vunpack.c.l.s4 1966171168
        %v6078 = vunpack.c.0.s8 %v6077
        %v6079 = vlaneseq
        %v6080 = vshrl.u32 %v6079, 7
        %v6081 = vsub.s32 %v6078, %v6080
        %v6082 = vrot.slane %v6054, %v6081
        %v6083 = vcombine.high %v6061, %v6061
        %v6084 = vcombine.high %v6068, %v6068
        %v6085 = vcombine.high %v6075, %v6075
        %v6086 = vcombine.high %v6082, %v6082
        %v6087 = vcombine.high %v5177, %v5177
        %v6089 = vunpack.c.l.s4 1966171168
        %v6090 = vunpack.c.0.s8 %v6089
        %v6091 = vlaneseq
        %v6092 = vshrl.u32 %v6091, 7
        %v6093 = vsub.s32 %v6090, %v6092
        %v6094 = vrot.slane %v5177, %v6093
        %v6096 = vunpack.c.l.s4 1966171168
        %v6097 = vunpack.c.0.s8 %v6096
        %v6098 = vlaneseq
        %v6099 = vshrl.u32 %v6098, 7
        %v6100 = vsub.s32 %v6097, %v6099
        %v6101 = vrot.slane %v6087, %v6100
        %v6102 = vcombine.high %v6094, %v6094
        %v6103 = vcombine.high %v6101, %v6101
        %v6105 = vunpack.c.l.s4 1966171168
        %v6106 = vunpack.c.0.s8 %v6105
        %v6107 = vlaneseq
        %v6108 = vshrl.u32 %v6107, 7
        %v6109 = vsub.s32 %v6106, %v6108
        %v6110 = vrot.slane %v6094, %v6109
        %v6112 = vunpack.c.l.s4 1966171168
        %v6113 = vunpack.c.0.s8 %v6112
        %v6114 = vlaneseq
        %v6115 = vshrl.u32 %v6114, 7
        %v6116 = vsub.s32 %v6113, %v6115
        %v6117 = vrot.slane %v6101, %v6116
        %v6119 = vunpack.c.l.s4 1966171168
        %v6120 = vunpack.c.0.s8 %v6119
        %v6121 = vlaneseq
        %v6122 = vshrl.u32 %v6121, 7
        %v6123 = vsub.s32 %v6120, %v6122
        %v6124 = vrot.slane %v6102, %v6123
        %v6126 = vunpack.c.l.s4 1966171168
        %v6127 = vunpack.c.0.s8 %v6126
        %v6128 = vlaneseq
        %v6129 = vshrl.u32 %v6128, 7
        %v6130 = vsub.s32 %v6127, %v6129
        %v6131 = vrot.slane %v6103, %v6130
        %v6132 = vcombine.high %v6110, %v6110
        %v6133 = vcombine.high %v6117, %v6117
        %v6134 = vcombine.high %v6124, %v6124
        %v6135 = vcombine.high %v6131, %v6131
        %v6136 = vcombine.high %v5181, %v5181
        %v6138 = vunpack.c.l.s4 1966171168
        %v6139 = vunpack.c.0.s8 %v6138
        %v6140 = vlaneseq
        %v6141 = vshrl.u32 %v6140, 7
        %v6142 = vsub.s32 %v6139, %v6141
        %v6143 = vrot.slane %v5181, %v6142
        %v6145 = vunpack.c.l.s4 1966171168
        %v6146 = vunpack.c.0.s8 %v6145
        %v6147 = vlaneseq
        %v6148 = vshrl.u32 %v6147, 7
        %v6149 = vsub.s32 %v6146, %v6148
        %v6150 = vrot.slane %v6136, %v6149
        %v6151 = vcombine.high %v6143, %v6143
        %v6152 = vcombine.high %v6150, %v6150
        %v6154 = vunpack.c.l.s4 1966171168
        %v6155 = vunpack.c.0.s8 %v6154
        %v6156 = vlaneseq
        %v6157 = vshrl.u32 %v6156, 7
        %v6158 = vsub.s32 %v6155, %v6157
        %v6159 = vrot.slane %v6143, %v6158
        %v6161 = vunpack.c.l.s4 1966171168
        %v6162 = vunpack.c.0.s8 %v6161
        %v6163 = vlaneseq
        %v6164 = vshrl.u32 %v6163, 7
        %v6165 = vsub.s32 %v6162, %v6164
        %v6166 = vrot.slane %v6150, %v6165
        %v6168 = vunpack.c.l.s4 1966171168
        %v6169 = vunpack.c.0.s8 %v6168
        %v6170 = vlaneseq
        %v6171 = vshrl.u32 %v6170, 7
        %v6172 = vsub.s32 %v6169, %v6171
        %v6173 = vrot.slane %v6151, %v6172
        %v6175 = vunpack.c.l.s4 1966171168
        %v6176 = vunpack.c.0.s8 %v6175
        %v6177 = vlaneseq
        %v6178 = vshrl.u32 %v6177, 7
        %v6179 = vsub.s32 %v6176, %v6178
        %v6180 = vrot.slane %v6152, %v6179
        %v6181 = vcombine.high %v6159, %v6159
        %v6182 = vcombine.high %v6166, %v6166
        %v6183 = vcombine.high %v6173, %v6173
        %v6184 = vcombine.high %v6180, %v6180
        %v6186 = vunpack.c.l.s4 1966171168
        %v6187 = vunpack.c.0.s8 %v6186
        %v6188 = vlaneseq
        %v6189 = vshrl.u32 %v6188, 7
        %v6190 = vsub.s32 %v6187, %v6189
        %v6191 = vrot.slane %v5187, %v6190
        %v6192 = vcombine.high %v6191, %v6191
        %v6194 = vunpack.c.l.s4 1966171168
        %v6195 = vunpack.c.0.s8 %v6194
        %v6196 = vlaneseq
        %v6197 = vshrl.u32 %v6196, 7
        %v6198 = vsub.s32 %v6195, %v6197
        %v6199 = vrot.slane %v6191, %v6198
        %v6201 = vunpack.c.l.s4 1966171168
        %v6202 = vunpack.c.0.s8 %v6201
        %v6203 = vlaneseq
        %v6204 = vshrl.u32 %v6203, 7
        %v6205 = vsub.s32 %v6202, %v6204
        %v6206 = vrot.slane %v6192, %v6205
        %v6207 = vcombine.high %v6199, %v6199
        %v6208 = vcombine.high %v6206, %v6206
        %v6261 = vadd.f32 %v5914, %v3464
        %v6262 = vadd.f32 %v5928, %v3465
        %v6263 = vadd.f32 %v5936, %v3466
        %v6264 = vadd.f32 %v5938, %v3467
        %v6265 = vadd.f32 %v5921, %v3468
        %v6266 = vadd.f32 %v5935, %v3469
        %v6267 = vadd.f32 %v5937, %v3470
        %v6268 = vadd.f32 %v5939, %v3471
        %v6269 = vadd.f32 %v5963, %v3472
        %v6270 = vadd.f32 %v5977, %v3473
        %v6271 = vadd.f32 %v5985, %v3474
        %v6272 = vadd.f32 %v5987, %v3475
        %v6273 = vadd.f32 %v5970, %v3476
        %v6274 = vadd.f32 %v5984, %v3479
        %v6275 = vadd.f32 %v5986, %v3480
        %v6276 = vadd.f32 %v5988, %v3481
        %v6277 = vadd.f32 %v6012, %v3482
        %v6278 = vadd.f32 %v6026, %v3483
        %v6279 = vadd.f32 %v6034, %v3484
        %v6280 = vadd.f32 %v6036, %v3485
        %v6281 = vadd.f32 %v6019, %v3486
        %v6282 = vadd.f32 %v6033, %v3487
        %v6283 = vadd.f32 %v6035, %v3488
        %v6284 = vadd.f32 %v6037, %v3489
        %v6285 = vadd.f32 %v6061, %v3490
        %v6286 = vadd.f32 %v6075, %v3491
        %v6287 = vadd.f32 %v6083, %v3494
        %v6288 = vadd.f32 %v6085, %v3495
        %v6289 = vadd.f32 %v6068, %v3496
        %v6290 = vadd.f32 %v6082, %v3497
        %v6291 = vadd.f32 %v6084, %v3498
        %v6292 = vadd.f32 %v6086, %v3499
        %v6293 = vadd.f32 %v6110, %v3500
        %v6294 = vadd.f32 %v6124, %v3501
        %v6295 = vadd.f32 %v6132, %v3502
        %v6296 = vadd.f32 %v6134, %v3503
        %v6297 = vadd.f32 %v6117, %v3504
        %v6298 = vadd.f32 %v6131, %v3505
        %v6299 = vadd.f32 %v6133, %v3506
        %v6300 = vadd.f32 %v6135, %v3509
        %v6301 = vadd.f32 %v6159, %v3510
        %v6302 = vadd.f32 %v6173, %v3511
        %v6303 = vadd.f32 %v6181, %v3512
        %v6304 = vadd.f32 %v6183, %v3513
        %v6305 = vadd.f32 %v6166, %v3514
        %v6306 = vadd.f32 %v6180, %v3515
        %v6307 = vadd.f32 %v6182, %v3516
        %v6308 = vadd.f32 %v6184, %v3517
        %v6309 = vadd.f32 %v6199, %v3518
        %v6310 = vadd.f32 %v6206, %v3519
        %v6311 = vadd.f32 %v6207, %v3520
        %v6312 = vadd.f32 %v6208, %v3521
        %v6365 = vcombine.low %v6261, %v6262
        %v6366 = vcombine.low %v6263, %v6264
        %v6367 = vcombine.low %v6265, %v6266
        %v6368 = vcombine.low %v6267, %v6268
        %v6370 = vunpack.c.l.s4 1966171168
        %v6371 = vunpack.c.0.s8 %v6370
        %v6372 = vlaneseq
        %v6373 = vshrl.u32 %v6372, 7
        %v6374 = vsub.s32 %v6371, %v6373
        %v6375 = vrot.slane %v6365, %v6374
        %v6377 = vunpack.c.l.s4 1966171168
        %v6378 = vunpack.c.0.s8 %v6377
        %v6379 = vlaneseq
        %v6380 = vshrl.u32 %v6379, 7
        %v6381 = vsub.s32 %v6378, %v6380
        %v6382 = vrot.slane %v6366, %v6381
        %v6384 = vunpack.c.l.s4 1966171168
        %v6385 = vunpack.c.0.s8 %v6384
        %v6386 = vlaneseq
        %v6387 = vshrl.u32 %v6386, 7
        %v6388 = vsub.s32 %v6385, %v6387
        %v6389 = vrot.slane %v6367, %v6388
        %v6391 = vunpack.c.l.s4 1966171168
        %v6392 = vunpack.c.0.s8 %v6391
        %v6393 = vlaneseq
        %v6394 = vshrl.u32 %v6393, 7
        %v6395 = vsub.s32 %v6392, %v6394
        %v6396 = vrot.slane %v6368, %v6395
        %v6397 = vcombine.low %v6375, %v6382
        %v6398 = vcombine.low %v6389, %v6396
        %v6400 = vunpack.c.l.s4 1966171168
        %v6401 = vunpack.c.0.s8 %v6400
        %v6402 = vlaneseq
        %v6403 = vshrl.u32 %v6402, 7
        %v6404 = vsub.s32 %v6401, %v6403
        %v6405 = vrot.slane %v6397, %v6404
        %v6407 = vunpack.c.l.s4 1966171168
        %v6408 = vunpack.c.0.s8 %v6407
        %v6409 = vlaneseq
        %v6410 = vshrl.u32 %v6409, 7
        %v6411 = vsub.s32 %v6408, %v6410
        %v6412 = vrot.slane %v6398, %v6411
        %v6413 = vcombine.low %v6405, %v6412
        %v6414 = vcombine.low %v6269, %v6270
        %v6415 = vcombine.low %v6271, %v6272
        %v6417 = vunpack.c.l.s4 1966171168
        %v6418 = vunpack.c.0.s8 %v6417
        %v6419 = vlaneseq
        %v6420 = vshrl.u32 %v6419, 7
        %v6421 = vsub.s32 %v6418, %v6420
        %v6422 = vrot.slane %v6414, %v6421
        %v6424 = vunpack.c.l.s4 1966171168
        %v6425 = vunpack.c.0.s8 %v6424
        %v6426 = vlaneseq
        %v6427 = vshrl.u32 %v6426, 7
        %v6428 = vsub.s32 %v6425, %v6427
        %v6429 = vrot.slane %v6415, %v6428
        %v6431 = vunpack.c.l.s4 1966171168
        %v6432 = vunpack.c.0.s8 %v6431
        %v6433 = vlaneseq
        %v6434 = vshrl.u32 %v6433, 7
        %v6435 = vsub.s32 %v6432, %v6434
        %v6436 = vrot.slane %v6273, %v6435
        %v6437 = vcombine.low %v6422, %v6429
        %v6439 = vunpack.c.l.s4 1966171168
        %v6440 = vunpack.c.0.s8 %v6439
        %v6441 = vlaneseq
        %v6442 = vshrl.u32 %v6441, 7
        %v6443 = vsub.s32 %v6440, %v6442
        %v6444 = vrot.slane %v6437, %v6443
        %v6446 = vunpack.c.l.s4 1966171168
        %v6447 = vunpack.c.0.s8 %v6446
        %v6448 = vlaneseq
        %v6449 = vshrl.u32 %v6448, 7
        %v6450 = vsub.s32 %v6447, %v6449
        %v6451 = vrot.slane %v6436, %v6450
        %v6452 = vcombine.low %v6444, %v6451
        %v6453 = vcombine.low %v6274, %v6275
        %v6454 = vcombine.low %v6276, %v6277
        %v6455 = vcombine.low %v6278, %v6279
        %v6456 = vcombine.low %v6280, %v6281
        %v6458 = vunpack.c.l.s4 1966171168
        %v6459 = vunpack.c.0.s8 %v6458
        %v6460 = vlaneseq
        %v6461 = vshrl.u32 %v6460, 7
        %v6462 = vsub.s32 %v6459, %v6461
        %v6463 = vrot.slane %v6453, %v6462
        %v6465 = vunpack.c.l.s4 1966171168
        %v6466 = vunpack.c.0.s8 %v6465
        %v6467 = vlaneseq
        %v6468 = vshrl.u32 %v6467, 7
        %v6469 = vsub.s32 %v6466, %v6468
        %v6470 = vrot.slane %v6454, %v6469
        %v6472 = vunpack.c.l.s4 1966171168
        %v6473 = vunpack.c.0.s8 %v6472
        %v6474 = vlaneseq
        %v6475 = vshrl.u32 %v6474, 7
        %v6476 = vsub.s32 %v6473, %v6475
        %v6477 = vrot.slane %v6455, %v6476
        %v6479 = vunpack.c.l.s4 1966171168
        %v6480 = vunpack.c.0.s8 %v6479
        %v6481 = vlaneseq
        %v6482 = vshrl.u32 %v6481, 7
        %v6483 = vsub.s32 %v6480, %v6482
        %v6484 = vrot.slane %v6456, %v6483
        %v6485 = vcombine.low %v6463, %v6470
        %v6486 = vcombine.low %v6477, %v6484
        %v6488 = vunpack.c.l.s4 1966171168
        %v6489 = vunpack.c.0.s8 %v6488
        %v6490 = vlaneseq
        %v6491 = vshrl.u32 %v6490, 7
        %v6492 = vsub.s32 %v6489, %v6491
        %v6493 = vrot.slane %v6485, %v6492
        %v6495 = vunpack.c.l.s4 1966171168
        %v6496 = vunpack.c.0.s8 %v6495
        %v6497 = vlaneseq
        %v6498 = vshrl.u32 %v6497, 7
        %v6499 = vsub.s32 %v6496, %v6498
        %v6500 = vrot.slane %v6486, %v6499
        %v6501 = vcombine.low %v6493, %v6500
        %v6502 = vcombine.low %v6282, %v6283
        %v6503 = vcombine.low %v6284, %v6285
        %v6505 = vunpack.c.l.s4 1966171168
        %v6506 = vunpack.c.0.s8 %v6505
        %v6507 = vlaneseq
        %v6508 = vshrl.u32 %v6507, 7
        %v6509 = vsub.s32 %v6506, %v6508
        %v6510 = vrot.slane %v6502, %v6509
        %v6512 = vunpack.c.l.s4 1966171168
        %v6513 = vunpack.c.0.s8 %v6512
        %v6514 = vlaneseq
        %v6515 = vshrl.u32 %v6514, 7
        %v6516 = vsub.s32 %v6513, %v6515
        %v6517 = vrot.slane %v6503, %v6516
        %v6519 = vunpack.c.l.s4 1966171168
        %v6520 = vunpack.c.0.s8 %v6519
        %v6521 = vlaneseq
        %v6522 = vshrl.u32 %v6521, 7
        %v6523 = vsub.s32 %v6520, %v6522
        %v6524 = vrot.slane %v6286, %v6523
        %v6525 = vcombine.low %v6510, %v6517
        %v6527 = vunpack.c.l.s4 1966171168
        %v6528 = vunpack.c.0.s8 %v6527
        %v6529 = vlaneseq
        %v6530 = vshrl.u32 %v6529, 7
        %v6531 = vsub.s32 %v6528, %v6530
        %v6532 = vrot.slane %v6525, %v6531
        %v6534 = vunpack.c.l.s4 1966171168
        %v6535 = vunpack.c.0.s8 %v6534
        %v6536 = vlaneseq
        %v6537 = vshrl.u32 %v6536, 7
        %v6538 = vsub.s32 %v6535, %v6537
        %v6539 = vrot.slane %v6524, %v6538
        %v6540 = vcombine.low %v6532, %v6539
        %v6541 = vcombine.low %v6287, %v6288
        %v6542 = vcombine.low %v6289, %v6290
        %v6543 = vcombine.low %v6291, %v6292
        %v6544 = vcombine.low %v6293, %v6294
        %v6546 = vunpack.c.l.s4 1966171168
        %v6547 = vunpack.c.0.s8 %v6546
        %v6548 = vlaneseq
        %v6549 = vshrl.u32 %v6548, 7
        %v6550 = vsub.s32 %v6547, %v6549
        %v6551 = vrot.slane %v6541, %v6550
        %v6553 = vunpack.c.l.s4 1966171168
        %v6554 = vunpack.c.0.s8 %v6553
        %v6555 = vlaneseq
        %v6556 = vshrl.u32 %v6555, 7
        %v6557 = vsub.s32 %v6554, %v6556
        %v6558 = vrot.slane %v6542, %v6557
        %v6560 = vunpack.c.l.s4 1966171168
        %v6561 = vunpack.c.0.s8 %v6560
        %v6562 = vlaneseq
        %v6563 = vshrl.u32 %v6562, 7
        %v6564 = vsub.s32 %v6561, %v6563
        %v6565 = vrot.slane %v6543, %v6564
        %v6567 = vunpack.c.l.s4 1966171168
        %v6568 = vunpack.c.0.s8 %v6567
        %v6569 = vlaneseq
        %v6570 = vshrl.u32 %v6569, 7
        %v6571 = vsub.s32 %v6568, %v6570
        %v6572 = vrot.slane %v6544, %v6571
        %v6573 = vcombine.low %v6551, %v6558
        %v6574 = vcombine.low %v6565, %v6572
        %v6576 = vunpack.c.l.s4 1966171168
        %v6577 = vunpack.c.0.s8 %v6576
        %v6578 = vlaneseq
        %v6579 = vshrl.u32 %v6578, 7
        %v6580 = vsub.s32 %v6577, %v6579
        %v6581 = vrot.slane %v6573, %v6580
        %v6583 = vunpack.c.l.s4 1966171168
        %v6584 = vunpack.c.0.s8 %v6583
        %v6585 = vlaneseq
        %v6586 = vshrl.u32 %v6585, 7
        %v6587 = vsub.s32 %v6584, %v6586
        %v6588 = vrot.slane %v6574, %v6587
        %v6589 = vcombine.low %v6581, %v6588
        %v6590 = vcombine.low %v6295, %v6296
        %v6591 = vcombine.low %v6297, %v6298
        %v6593 = vunpack.c.l.s4 1966171168
        %v6594 = vunpack.c.0.s8 %v6593
        %v6595 = vlaneseq
        %v6596 = vshrl.u32 %v6595, 7
        %v6597 = vsub.s32 %v6594, %v6596
        %v6598 = vrot.slane %v6590, %v6597
        %v6600 = vunpack.c.l.s4 1966171168
        %v6601 = vunpack.c.0.s8 %v6600
        %v6602 = vlaneseq
        %v6603 = vshrl.u32 %v6602, 7
        %v6604 = vsub.s32 %v6601, %v6603
        %v6605 = vrot.slane %v6591, %v6604
        %v6607 = vunpack.c.l.s4 1966171168
        %v6608 = vunpack.c.0.s8 %v6607
        %v6609 = vlaneseq
        %v6610 = vshrl.u32 %v6609, 7
        %v6611 = vsub.s32 %v6608, %v6610
        %v6612 = vrot.slane %v6299, %v6611
        %v6613 = vcombine.low %v6598, %v6605
        %v6615 = vunpack.c.l.s4 1966171168
        %v6616 = vunpack.c.0.s8 %v6615
        %v6617 = vlaneseq
        %v6618 = vshrl.u32 %v6617, 7
        %v6619 = vsub.s32 %v6616, %v6618
        %v6620 = vrot.slane %v6613, %v6619
        %v6622 = vunpack.c.l.s4 1966171168
        %v6623 = vunpack.c.0.s8 %v6622
        %v6624 = vlaneseq
        %v6625 = vshrl.u32 %v6624, 7
        %v6626 = vsub.s32 %v6623, %v6625
        %v6627 = vrot.slane %v6612, %v6626
        %v6628 = vcombine.low %v6620, %v6627
        %v6629 = vcombine.low %v6300, %v6301
        %v6630 = vcombine.low %v6302, %v6303
        %v6631 = vcombine.low %v6304, %v6305
        %v6632 = vcombine.low %v6306, %v6307
        %v6634 = vunpack.c.l.s4 1966171168
        %v6635 = vunpack.c.0.s8 %v6634
        %v6636 = vlaneseq
        %v6637 = vshrl.u32 %v6636, 7
        %v6638 = vsub.s32 %v6635, %v6637
        %v6639 = vrot.slane %v6629, %v6638
        %v6641 = vunpack.c.l.s4 1966171168
        %v6642 = vunpack.c.0.s8 %v6641
        %v6643 = vlaneseq
        %v6644 = vshrl.u32 %v6643, 7
        %v6645 = vsub.s32 %v6642, %v6644
        %v6646 = vrot.slane %v6630, %v6645
        %v6648 = vunpack.c.l.s4 1966171168
        %v6649 = vunpack.c.0.s8 %v6648
        %v6650 = vlaneseq
        %v6651 = vshrl.u32 %v6650, 7
        %v6652 = vsub.s32 %v6649, %v6651
        %v6653 = vrot.slane %v6631, %v6652
        %v6655 = vunpack.c.l.s4 1966171168
        %v6656 = vunpack.c.0.s8 %v6655
        %v6657 = vlaneseq
        %v6658 = vshrl.u32 %v6657, 7
        %v6659 = vsub.s32 %v6656, %v6658
        %v6660 = vrot.slane %v6632, %v6659
        %v6661 = vcombine.low %v6639, %v6646
        %v6662 = vcombine.low %v6653, %v6660
        %v6664 = vunpack.c.l.s4 1966171168
        %v6665 = vunpack.c.0.s8 %v6664
        %v6666 = vlaneseq
        %v6667 = vshrl.u32 %v6666, 7
        %v6668 = vsub.s32 %v6665, %v6667
        %v6669 = vrot.slane %v6661, %v6668
        %v6671 = vunpack.c.l.s4 1966171168
        %v6672 = vunpack.c.0.s8 %v6671
        %v6673 = vlaneseq
        %v6674 = vshrl.u32 %v6673, 7
        %v6675 = vsub.s32 %v6672, %v6674
        %v6676 = vrot.slane %v6662, %v6675
        %v6677 = vcombine.low %v6669, %v6676
        %v6678 = vcombine.low %v6308, %v6309
        %v6679 = vcombine.low %v6310, %v6311
        %v6681 = vunpack.c.l.s4 1966171168
        %v6682 = vunpack.c.0.s8 %v6681
        %v6683 = vlaneseq
        %v6684 = vshrl.u32 %v6683, 7
        %v6685 = vsub.s32 %v6682, %v6684
        %v6686 = vrot.slane %v6678, %v6685
        %v6688 = vunpack.c.l.s4 1966171168
        %v6689 = vunpack.c.0.s8 %v6688
        %v6690 = vlaneseq
        %v6691 = vshrl.u32 %v6690, 7
        %v6692 = vsub.s32 %v6689, %v6691
        %v6693 = vrot.slane %v6679, %v6692
        %v6695 = vunpack.c.l.s4 1966171168
        %v6696 = vunpack.c.0.s8 %v6695
        %v6697 = vlaneseq
        %v6698 = vshrl.u32 %v6697, 7
        %v6699 = vsub.s32 %v6696, %v6698
        %v6700 = vrot.slane %v6312, %v6699
        %v6701 = vcombine.low %v6686, %v6693
        %v6703 = vunpack.c.l.s4 1966171168
        %v6704 = vunpack.c.0.s8 %v6703
        %v6705 = vlaneseq
        %v6706 = vshrl.u32 %v6705, 7
        %v6707 = vsub.s32 %v6704, %v6706
        %v6708 = vrot.slane %v6701, %v6707
        %v6710 = vunpack.c.l.s4 1966171168
        %v6711 = vunpack.c.0.s8 %v6710
        %v6712 = vlaneseq
        %v6713 = vshrl.u32 %v6712, 7
        %v6714 = vsub.s32 %v6711, %v6713
        %v6715 = vrot.slane %v6700, %v6714
        %v6716 = vcombine.low %v6708, %v6715
        %6725 = vst [vmem:[%s454] sm:$0xff] %v6413
        %6726 = vst [vmem:[%s454 + $0x8] sm:$0x1f] %v6452
        %6727 = vst [vmem:[%s454 + $0x10] sm:$0xff] %v6501
        %6728 = vst [vmem:[%s454 + $0x18] sm:$0x1f] %v6540
        %6729 = vst [vmem:[%s454 + $0x20] sm:$0xff] %v6589
        %6730 = vst [vmem:[%s454 + $0x28] sm:$0x1f] %v6628
        %6731 = vst [vmem:[%s454 + $0x30] sm:$0xff] %v6677
        %6732 = vst [vmem:[%s454 + $0x38] sm:$0x1f] %v6716
        %s6733 = smul.u32 4, %s25
        %p6734 = scmp.lt.s32.totalorder %s6733, 7
        %s6735 = scalar_select %p6734, %s6733, 7
        %s6736 = smul.addr %s6735, 2
        %s6737 = smul.addr %s6736, 8
        %s6738 = scalar_lea.vmem %s9, %s6737
        %s6739 = smul.u32 4, %s25
        %p6740 = scmp.lt.s32.totalorder %s6739, 7
        %s6741 = scalar_select %p6740, %s6739, 7
        %s6742 = smul.addr %s6741, 2
        %s6743 = smul.addr %s6742, 8
        %s6744 = scalar_lea.vmem %s10, %s6743
        %s6745 = smul.u32 4, %s25
        %p6746 = scmp.lt.s32.totalorder %s6745, 7
        %s6747 = scalar_select %p6746, %s6745, 7
        %s6748 = smul.addr %s6747, 2
        %s6749 = smul.addr %s6748, 8
        %s6750 = scalar_lea.vmem %s11, %s6749
        // Predicated region
        $region69: #{conv_block_forward.1} parent=55 // pred_check
          %p6751 = pneg %p237
        $region70: #{conv_block_forward.1} parent=55 // pred_check_branch
          %6753 = sbr.rel (%p6751) target = $region72
        $region71: #{conv_block_forward.1} parent=55 // pred_region
          %s6754 = smul.u32 4, %s25
        $region72: #{conv_block_forward.1} parent=55 // pred_fallthru
          _
        // Predicated region
        $region73: #{conv_block_forward.1} parent=55 // pred_check
          %p6755 = pneg %p263
        $region74: #{conv_block_forward.1} parent=55 // pred_check_branch
          %6757 = sbr.rel (%p6755) target = $region76
        $region75: #{conv_block_forward.1} parent=55 // pred_region
          %s6758 = smul.u32 4, %s25
        $region76: #{conv_block_forward.1} parent=55 // pred_fallthru
          _
        // Predicated region
        $region77: #{conv_block_forward.1} parent=55 // pred_check
          %p6759 = pneg %p289
        $region78: #{conv_block_forward.1} parent=55 // pred_check_branch
          %6761 = sbr.rel (%p6759) target = $region80
        $region79: #{conv_block_forward.1} parent=55 // pred_region
          %s6762 = smul.u32 4, %s25
        $region80: #{conv_block_forward.1} parent=55 // pred_fallthru
          _
      $region56: #{conv_block_forward.1} parent=5 // pred_fallthru
        _
      %p6763 = scmp.le.s32.totalorder 2, %s20
      // Predicated region
      $region81: #{conv_block_forward.1} parent=5 // pred_check
        %p6764 = pneg %p6763
      $region82: #{conv_block_forward.1} parent=5 // pred_check_branch
        %6766 = sbr.rel (%p6764) target = $region84
      $region83: #{conv_block_forward.1} parent=5 // pred_region
        %s6767 = ssub.s32 %s20, 2
        // Predicated region
        $region85: #{conv_block_forward.1} parent=83 // pred_check
          %p6768 = pneg %p243
        $region86: #{conv_block_forward.1} parent=83 // pred_check_branch
          %6770 = sbr.rel (%p6768) target = $region88
        $region87: #{conv_block_forward.1} parent=83 // pred_region
          %s6771 = smul.u32 4, %s26
          %p6772 = scmp.lt.s32.totalorder %s6771, 7
          %s6773 = scalar_select %p6772, %s6771, 7
          %s6774 = smul.addr %s6773, 2
          %s6775 = smul.addr %s6774, 8
          %s6776 = scalar_lea.vmem %s9, %s6775
        $region88: #{conv_block_forward.1} parent=83 // pred_fallthru
          _
        // Predicated region
        $region89: #{conv_block_forward.1} parent=83 // pred_check
          %p6777 = pneg %p269
        $region90: #{conv_block_forward.1} parent=83 // pred_check_branch
          %6779 = sbr.rel (%p6777) target = $region92
        $region91: #{conv_block_forward.1} parent=83 // pred_region
          %s6780 = smul.u32 4, %s26
          %p6781 = scmp.lt.s32.totalorder %s6780, 7
          %s6782 = scalar_select %p6781, %s6780, 7
          %s6783 = smul.addr %s6782, 2
          %s6784 = smul.addr %s6783, 8
          %s6785 = scalar_lea.vmem %s10, %s6784
        $region92: #{conv_block_forward.1} parent=83 // pred_fallthru
          _
        // Predicated region
        $region93: #{conv_block_forward.1} parent=83 // pred_check
          %p6786 = pneg %p295
        $region94: #{conv_block_forward.1} parent=83 // pred_check_branch
          %6788 = sbr.rel (%p6786) target = $region96
        $region95: #{conv_block_forward.1} parent=83 // pred_region
          %s6789 = smul.u32 4, %s26
          %p6790 = scmp.lt.s32.totalorder %s6789, 7
          %s6791 = scalar_select %p6790, %s6789, 7
          %s6792 = smul.addr %s6791, 2
          %s6793 = smul.addr %s6792, 8
          %s6794 = scalar_lea.vmem %s11, %s6793
        $region96: #{conv_block_forward.1} parent=83 // pred_fallthru
          _
      $region84: #{conv_block_forward.1} parent=5 // pred_fallthru
        _
    $region6: #{conv_block_forward.1} parent=1 // loop_footer
      %s24 = sadd.s32 1, %s20
    $region7: #{conv_block_forward.1} parent=1 // loop_footer_branch
      %19 = sbr.rel target = $region3
    $region8: #{conv_block_forward.1} parent=1 // loop_exit
      _
    %6795 = vsyncpa [#allocation3], 1
    %s6796 = scalar_lea.sflag [#allocation3], 1
    %6797 = vsyncpa %s6796, 1
    %6798 = vsyncpa [#allocation5], 1

</llo_original>
